<compile_context>
chip_gen: v7x
topology: tpu7x:2x2x1
jax: 0.10.0
libtpu: 0.0.40
codegen_flags: <defaults>
</compile_context>

<pallas_src>
import functools

import jax
import jax.numpy as jnp
from jax.experimental import pallas as pl
from jax.experimental.pallas import tpu as pltpu


def _fusion_attention_kernel(num_heads, head_dim, compute_dtype,
                             rgb_ref, nir_ref,
                             wq_ref, bq_ref,
                             wk_ref, bk_ref,
                             wv_ref, bv_ref,
                             gamma_ref, out_ref):
    """One (batch, q-tile) pair per grid step.

    rgb_ref : (1, TQ, C) f32 VMEM   query-side activations (q tile)
    nir_ref : (1, HW, C) f32 VMEM   key/value-side activations (full row)
    wq_ref  : (C, C)  compute_dtype (1/sqrt(hd) pre-folded)
    bq_ref  : (1, C)  f32           (1/sqrt(hd) pre-folded)
    wk_ref, wv_ref : (C, C) compute_dtype ; bk_ref, bv_ref : (1, C) f32
    gamma_ref : (1,) f32 SMEM scalar
    out_ref : (1, TQ, C) f32 VMEM
    """
    rgb = rgb_ref[0]                       # (TQ, C) f32 (kept f32 for residual)
    nir = nir_ref[0]                       # (HW, C) f32
    gamma = gamma_ref[0]

    rgb_c = rgb.astype(compute_dtype)
    nir_c = nir.astype(compute_dtype)

    # 1x1-conv projections as single wide matmuls (MXU, f32 accumulation).
    q = jnp.dot(rgb_c, wq_ref[...], preferred_element_type=jnp.float32) + bq_ref[...]
    k = jnp.dot(nir_c, wk_ref[...], preferred_element_type=jnp.float32) + bk_ref[...]
    v = jnp.dot(nir_c, wv_ref[...], preferred_element_type=jnp.float32) + bv_ref[...]

    q_c = q.astype(compute_dtype)
    k_c = k.astype(compute_dtype)
    v_c = v.astype(compute_dtype)

    qk_dims = (((1,), (1,)), ((), ()))     # contract head_dim; no explicit .T

    # Per-head attention; head h lives in channel columns [h*hd, (h+1)*hd).
    for h in range(num_heads):
        cols = slice(h * head_dim, (h + 1) * head_dim)
        s = jax.lax.dot_general(q_c[:, cols], k_c[:, cols], qk_dims,
                                preferred_element_type=jnp.float32)   # (TQ, HW)
        s = s - jnp.max(s, axis=-1, keepdims=True)
        p = jnp.exp(s)
        p = p * pl.reciprocal(jnp.sum(p, axis=-1, keepdims=True), approx=True)
        o_h = jnp.dot(p.astype(compute_dtype), v_c[:, cols],
                      preferred_element_type=jnp.float32)             # (TQ, hd)
        # Direct per-head column store (no concat, no extra VMEM temp);
        # lane-aligned at the module's real head_dim=256.
        out_ref[0, :, cols] = gamma * o_h + rgb[:, cols]


def _pick_q_tile(hw, target=256):
    """Largest multiple-of-8 divisor of hw not exceeding `target` (or hw)."""
    if hw <= target:
        return hw
    for t in range(target, 7, -1):
        if hw % t == 0 and t % 8 == 0:
            return t
    return hw


def fusion_attention(rgb, nir, params, num_heads, *, use_bf16=True, q_tile=None):
    """rgb, nir: (B, C, H, W) float32 (PyTorch NCHW convention)."""
    B, C, H, W = rgb.shape
    HW = H * W
    hd = C // num_heads
    compute_dtype = jnp.bfloat16 if use_bf16 else jnp.float32

    tq = q_tile if q_tile is not None else _pick_q_tile(HW)
    assert HW % tq == 0
    n_q = HW // tq

    # NCHW -> (B, HW, C) channels-last flattened-spatial; activations stay f32
    # (cast to bf16 only for the MXU operands inside the kernel, so the
    # residual add stays exact).
    rgb_f = jnp.transpose(rgb, (0, 2, 3, 1)).reshape(B, HW, C)
    nir_f = jnp.transpose(nir, (0, 2, 3, 1)).reshape(B, HW, C)

    scale = 1.0 / (hd ** 0.5)

    # Conv2d(kernel=1) weight (C_out, C_in, 1, 1) -> (C_in, C_out): y = x @ W + b.
    def prep_w(w, s=1.0):
        return (w.reshape(C, C).T * s).astype(compute_dtype)

    wq = prep_w(params["wq"], scale)                   # 1/sqrt(hd) folded in
    wk = prep_w(params["wk"])
    wv = prep_w(params["wv"])
    bq = (params["bq"] * scale).reshape(1, C).astype(jnp.float32)
    bk = params["bk"].reshape(1, C).astype(jnp.float32)
    bv = params["bv"].reshape(1, C).astype(jnp.float32)
    gamma = params["gamma"].reshape(1).astype(jnp.float32)

    kernel = functools.partial(_fusion_attention_kernel, num_heads, hd,
                               compute_dtype)

    q_spec = pl.BlockSpec((1, tq, C), lambda b, qi: (b, qi, 0))
    kv_spec = pl.BlockSpec((1, HW, C), lambda b, qi: (b, 0, 0))
    w_spec = pl.BlockSpec((C, C), lambda b, qi: (0, 0))    # grid-invariant
    b_spec = pl.BlockSpec((1, C), lambda b, qi: (0, 0))    # grid-invariant

    itemsize = 2 if use_bf16 else 4
    cost = pl.CostEstimate(
        flops=int(B * (2 * HW * C * C * (1 + 2 * n_q) + 4 * HW * HW * C)),
        transcendentals=int(B * num_heads * HW * HW),
        bytes_accessed=int(4 * 3 * B * HW * C + 3 * C * C * itemsize + 3 * C * 4),
    )

    out_flat = pl.pallas_call(
        kernel,
        out_shape=jax.ShapeDtypeStruct((B, HW, C), jnp.float32),
        grid=(B, n_q),
        in_specs=[
            q_spec,                                            # rgb (q tile)
            kv_spec,                                           # nir (full)
            w_spec, b_spec,                                    # Wq, bq
            w_spec, b_spec,                                    # Wk, bk
            w_spec, b_spec,                                    # Wv, bv
            pl.BlockSpec(memory_space=pltpu.MemorySpace.SMEM),  # gamma scalar
        ],
        out_specs=q_spec,
        compiler_params=pltpu.CompilerParams(
            dimension_semantics=("parallel", "parallel"),
            # Safe on every generation (< v7x's 64 MiB physical, > defaults);
            # bump toward ~100 MiB on v5e/v6e for the real C=2048 config.
            vmem_limit_bytes=48 * 1024 * 1024,
        ),
        cost_estimate=cost,
    )(rgb_f, nir_f, wq, bq, wk, bk, wv, bv, gamma)

    # (B, HW, C) -> NCHW
    return jnp.transpose(out_flat.reshape(B, H, W, C), (0, 3, 1, 2))


def fusion_attention_ref(rgb, nir, params, num_heads):
    """Pure-JAX f32 reference mirroring the PyTorch forward exactly."""
    B, C, H, W = rgb.shape
    HW = H * W
    hd = C // num_heads

    def conv1x1(x, w, b):
        y = jnp.einsum("oi,bihw->bohw", w.reshape(C, C), x)
        return y + b.reshape(1, C, 1, 1)

    q = conv1x1(rgb, params["wq"], params["bq"]).reshape(B, num_heads, hd, HW)
    k = conv1x1(nir, params["wk"], params["bk"]).reshape(B, num_heads, hd, HW)
    v = conv1x1(nir, params["wv"], params["bv"]).reshape(B, num_heads, hd, HW)

    scores = jnp.einsum("bhds,bhdt->bhst", q, k) / (hd ** 0.5)
    attn = jax.nn.softmax(scores, axis=-1)
    out = jnp.einsum("bhst,bhdt->bhsd", attn, v)           # (B, nh, HW, hd)
    out = jnp.transpose(out, (0, 1, 3, 2)).reshape(B, C, H, W)
    return params["gamma"].reshape(()) * out + rgb


if __name__ == "__main__":
    # Small shapes consistent with the module (channels divisible by num_heads=8).
    B, C, H, W = 2, 32, 8, 8
    NUM_HEADS = 8

    key = jax.random.PRNGKey(0)
    ks = jax.random.split(key, 8)

    params = {
        "wq": jax.random.normal(ks[0], (C, C, 1, 1), jnp.float32) * 0.05,
        "bq": jax.random.normal(ks[1], (C,), jnp.float32) * 0.05,
        "wk": jax.random.normal(ks[2], (C, C, 1, 1), jnp.float32) * 0.05,
        "bk": jax.random.normal(ks[3], (C,), jnp.float32) * 0.05,
        "wv": jax.random.normal(ks[4], (C, C, 1, 1), jnp.float32) * 0.05,
        "bv": jax.random.normal(ks[5], (C,), jnp.float32) * 0.05,
        # PyTorch inits gamma to 0 (identity output); use a deterministic
        # nonzero value so the attention path actually contributes.
        "gamma": jnp.array([0.5], jnp.float32),
    }

    rgb = jax.random.normal(ks[6], (B, C, H, W), jnp.float32)
    nir = jax.random.normal(ks[7], (B, C, H, W), jnp.float32)

    ref = fusion_attention_ref(rgb, nir, params, NUM_HEADS)

    # Exact f32 path (only the EUP approximate reciprocal differs from ref).
    out_f32 = jax.block_until_ready(
        fusion_attention(rgb, nir, params, NUM_HEADS, use_bf16=False))
    assert out_f32.shape == (B, C, H, W)
    err_f32 = float(jnp.max(jnp.abs(out_f32 - ref)))
    assert err_f32 < 2e-3, f"f32 path mismatch vs reference: {err_f32}"

    # bf16 MXU path (f32 accumulation) — the production configuration.
    out_bf16 = jax.block_until_ready(
        fusion_attention(rgb, nir, params, NUM_HEADS, use_bf16=True))
    assert out_bf16.shape == (B, C, H, W)
    err_bf16 = float(jnp.max(jnp.abs(out_bf16 - ref)))
    assert err_bf16 < 3e-2, f"bf16 path mismatch vs reference: {err_bf16}"

    print("KERNEL_OK")
</pallas_src>

<mosaic_0001>
module attributes {stable_mosaic.version = 11 : i64} {
  func.func @_fusion_attention_kernel(%arg0: i32, %arg1: i32, %arg2: memref<1x64x32xf32, #tpu.memory_space<vmem>>, %arg3: memref<1x64x32xf32, #tpu.memory_space<vmem>>, %arg4: memref<32x32xf32, #tpu.memory_space<vmem>>, %arg5: memref<1x32xf32, #tpu.memory_space<vmem>>, %arg6: memref<32x32xf32, #tpu.memory_space<vmem>>, %arg7: memref<1x32xf32, #tpu.memory_space<vmem>>, %arg8: memref<32x32xf32, #tpu.memory_space<vmem>>, %arg9: memref<1x32xf32, #tpu.memory_space<vmem>>, %arg10: memref<1xf32, #tpu.memory_space<smem>>, %arg11: memref<1x64x32xf32, #tpu.memory_space<vmem>>) attributes {dimension_semantics = [#tpu.dimension_semantics<parallel>, #tpu.dimension_semantics<parallel>], iteration_bounds = array<i64: 2, 1>, scalar_prefetch = 0 : i64, scratch_operands = 0 : i64, tpu.core_type = #tpu.core_type<tc>, window_params = [{transform_indices = @transform_0, window_bounds = array<i64: 1, 64, 32>}, {transform_indices = @transform_1, window_bounds = array<i64: 1, 64, 32>}, {pipeline_mode = #tpu.pipeline_mode<synchronous>, transform_indices = @transform_2, window_bounds = array<i64: 32, 32>}, {pipeline_mode = #tpu.pipeline_mode<synchronous>, transform_indices = @transform_3, window_bounds = array<i64: 1, 32>}, {pipeline_mode = #tpu.pipeline_mode<synchronous>, transform_indices = @transform_4, window_bounds = array<i64: 32, 32>}, {pipeline_mode = #tpu.pipeline_mode<synchronous>, transform_indices = @transform_5, window_bounds = array<i64: 1, 32>}, {pipeline_mode = #tpu.pipeline_mode<synchronous>, transform_indices = @transform_6, window_bounds = array<i64: 32, 32>}, {pipeline_mode = #tpu.pipeline_mode<synchronous>, transform_indices = @transform_7, window_bounds = array<i64: 1, 32>}, {transform_indices = @transform_8, window_bounds = array<i64: 1>}, {transform_indices = @transform_9, window_bounds = array<i64: 1, 64, 32>}]} {
    %c0 = arith.constant 0 : index
    %c0_0 = arith.constant 0 : index
    %c0_1 = arith.constant 0 : index
    %0 = vector.load %arg2[%c0, %c0_0, %c0_1] : memref<1x64x32xf32, #tpu.memory_space<vmem>>, vector<1x64x32xf32>
    %1 = vector.shape_cast %0 : vector<1x64x32xf32> to vector<64x32xf32>
    %c0_2 = arith.constant 0 : index
    %c0_3 = arith.constant 0 : index
    %c0_4 = arith.constant 0 : index
    %2 = vector.load %arg3[%c0_2, %c0_3, %c0_4] : memref<1x64x32xf32, #tpu.memory_space<vmem>>, vector<1x64x32xf32>
    %3 = vector.shape_cast %2 : vector<1x64x32xf32> to vector<64x32xf32>
    %c0_5 = arith.constant 0 : index
    %4 = memref.load %arg10[%c0_5] : memref<1xf32, #tpu.memory_space<smem>>
    %c0_6 = arith.constant 0 : index
    %c0_7 = arith.constant 0 : index
    %5 = vector.load %arg4[%c0_6, %c0_7] : memref<32x32xf32, #tpu.memory_space<vmem>>, vector<32x32xf32>
    %cst = arith.constant dense<0.000000e+00> : vector<64x32xf32>
    %6 = tpu.matmul %1, %5, %cst {dimension_numbers = #tpu.dot_dimension_numbers<[1], [0], [0], [1], [0, 0, 1, 1], [], []>} : vector<64x32xf32>, vector<32x32xf32>, vector<64x32xf32> -> vector<64x32xf32>
    %c0_8 = arith.constant 0 : index
    %c0_9 = arith.constant 0 : index
    %7 = vector.load %arg5[%c0_8, %c0_9] : memref<1x32xf32, #tpu.memory_space<vmem>>, vector<1x32xf32>
    %8 = vector.broadcast %7 : vector<1x32xf32> to vector<64x32xf32>
    %9 = arith.addf %6, %8 : vector<64x32xf32>
    %c0_10 = arith.constant 0 : index
    %c0_11 = arith.constant 0 : index
    %10 = vector.load %arg6[%c0_10, %c0_11] : memref<32x32xf32, #tpu.memory_space<vmem>>, vector<32x32xf32>
    %cst_12 = arith.constant dense<0.000000e+00> : vector<64x32xf32>
    %11 = tpu.matmul %3, %10, %cst_12 {dimension_numbers = #tpu.dot_dimension_numbers<[1], [0], [0], [1], [0, 0, 1, 1], [], []>} : vector<64x32xf32>, vector<32x32xf32>, vector<64x32xf32> -> vector<64x32xf32>
    %c0_13 = arith.constant 0 : index
    %c0_14 = arith.constant 0 : index
    %12 = vector.load %arg7[%c0_13, %c0_14] : memref<1x32xf32, #tpu.memory_space<vmem>>, vector<1x32xf32>
    %13 = vector.broadcast %12 : vector<1x32xf32> to vector<64x32xf32>
    %14 = arith.addf %11, %13 : vector<64x32xf32>
    %c0_15 = arith.constant 0 : index
    %c0_16 = arith.constant 0 : index
    %15 = vector.load %arg8[%c0_15, %c0_16] : memref<32x32xf32, #tpu.memory_space<vmem>>, vector<32x32xf32>
    %cst_17 = arith.constant dense<0.000000e+00> : vector<64x32xf32>
    %16 = tpu.matmul %3, %15, %cst_17 {dimension_numbers = #tpu.dot_dimension_numbers<[1], [0], [0], [1], [0, 0, 1, 1], [], []>} : vector<64x32xf32>, vector<32x32xf32>, vector<64x32xf32> -> vector<64x32xf32>
    %c0_18 = arith.constant 0 : index
    %c0_19 = arith.constant 0 : index
    %17 = vector.load %arg9[%c0_18, %c0_19] : memref<1x32xf32, #tpu.memory_space<vmem>>, vector<1x32xf32>
    %18 = vector.broadcast %17 : vector<1x32xf32> to vector<64x32xf32>
    %19 = arith.addf %16, %18 : vector<64x32xf32>
    %20 = vector.extract_strided_slice %9 {offsets = [0, 0], sizes = [64, 4], strides = [1, 1]} : vector<64x32xf32> to vector<64x4xf32>
    %21 = vector.extract_strided_slice %14 {offsets = [0, 0], sizes = [64, 4], strides = [1, 1]} : vector<64x32xf32> to vector<64x4xf32>
    %cst_20 = arith.constant dense<0.000000e+00> : vector<64x64xf32>
    %22 = tpu.matmul %20, %21, %cst_20 {dimension_numbers = #tpu.dot_dimension_numbers<[1], [1], [0], [0], [0, 0, 1, 0], [], []>} : vector<64x4xf32>, vector<64x4xf32>, vector<64x64xf32> -> vector<64x64xf32>
    %cst_21 = arith.constant dense<0xFF800000> : vector<64xf32>
    %23 = vector.multi_reduction <maximumf>, %22, %cst_21 [1] : vector<64x64xf32> to vector<64xf32>
    %24 = vector.shape_cast %23 : vector<64xf32> to vector<64x1xf32>
    %25 = vector.broadcast %24 : vector<64x1xf32> to vector<64x64xf32>
    %26 = arith.subf %22, %25 : vector<64x64xf32>
    %27 = math.exp %26 : vector<64x64xf32>
    %cst_22 = arith.constant dense<0.000000e+00> : vector<64xf32>
    %28 = vector.multi_reduction <add>, %27, %cst_22 [1] : vector<64x64xf32> to vector<64xf32>
    %29 = vector.shape_cast %28 : vector<64xf32> to vector<64x1xf32>
    %30 = tpu.reciprocal %29 {approx = true} : vector<64x1xf32> -> vector<64x1xf32>
    %31 = vector.broadcast %30 : vector<64x1xf32> to vector<64x64xf32>
    %32 = arith.mulf %27, %31 : vector<64x64xf32>
    %33 = vector.extract_strided_slice %19 {offsets = [0, 0], sizes = [64, 4], strides = [1, 1]} : vector<64x32xf32> to vector<64x4xf32>
    %cst_23 = arith.constant dense<0.000000e+00> : vector<64x4xf32>
    %34 = tpu.matmul %32, %33, %cst_23 {dimension_numbers = #tpu.dot_dimension_numbers<[1], [0], [0], [1], [0, 0, 1, 1], [], []>} : vector<64x64xf32>, vector<64x4xf32>, vector<64x4xf32> -> vector<64x4xf32>
    %35 = vector.broadcast %4 : f32 to vector<64x4xf32>
    %36 = arith.mulf %35, %34 : vector<64x4xf32>
    %37 = vector.extract_strided_slice %1 {offsets = [0, 0], sizes = [64, 4], strides = [1, 1]} : vector<64x32xf32> to vector<64x4xf32>
    %38 = arith.addf %36, %37 : vector<64x4xf32>
    %c0_24 = arith.constant 0 : index
    %c0_25 = arith.constant 0 : index
    %c0_26 = arith.constant 0 : index
    %39 = vector.load %arg11[%c0_24, %c0_25, %c0_26] : memref<1x64x32xf32, #tpu.memory_space<vmem>>, vector<1x64x4xf32>
    %40 = vector.shape_cast %39 : vector<1x64x4xf32> to vector<64x4xf32>
    %41 = vector.shape_cast %38 : vector<64x4xf32> to vector<1x64x4xf32>
    tpu.vector_store %arg11[%c0_24, %c0_25, %c0_26], %41 {strides = array<i32>} : memref<1x64x32xf32, #tpu.memory_space<vmem>>, vector<1x64x4xf32>,
    %42 = vector.extract_strided_slice %9 {offsets = [0, 4], sizes = [64, 4], strides = [1, 1]} : vector<64x32xf32> to vector<64x4xf32>
    %43 = vector.extract_strided_slice %14 {offsets = [0, 4], sizes = [64, 4], strides = [1, 1]} : vector<64x32xf32> to vector<64x4xf32>
    %cst_27 = arith.constant dense<0.000000e+00> : vector<64x64xf32>
    %44 = tpu.matmul %42, %43, %cst_27 {dimension_numbers = #tpu.dot_dimension_numbers<[1], [1], [0], [0], [0, 0, 1, 0], [], []>} : vector<64x4xf32>, vector<64x4xf32>, vector<64x64xf32> -> vector<64x64xf32>
    %cst_28 = arith.constant dense<0xFF800000> : vector<64xf32>
    %45 = vector.multi_reduction <maximumf>, %44, %cst_28 [1] : vector<64x64xf32> to vector<64xf32>
    %46 = vector.shape_cast %45 : vector<64xf32> to vector<64x1xf32>
    %47 = vector.broadcast %46 : vector<64x1xf32> to vector<64x64xf32>
    %48 = arith.subf %44, %47 : vector<64x64xf32>
    %49 = math.exp %48 : vector<64x64xf32>
    %cst_29 = arith.constant dense<0.000000e+00> : vector<64xf32>
    %50 = vector.multi_reduction <add>, %49, %cst_29 [1] : vector<64x64xf32> to vector<64xf32>
    %51 = vector.shape_cast %50 : vector<64xf32> to vector<64x1xf32>
    %52 = tpu.reciprocal %51 {approx = true} : vector<64x1xf32> -> vector<64x1xf32>
    %53 = vector.broadcast %52 : vector<64x1xf32> to vector<64x64xf32>
    %54 = arith.mulf %49, %53 : vector<64x64xf32>
    %55 = vector.extract_strided_slice %19 {offsets = [0, 4], sizes = [64, 4], strides = [1, 1]} : vector<64x32xf32> to vector<64x4xf32>
    %cst_30 = arith.constant dense<0.000000e+00> : vector<64x4xf32>
    %56 = tpu.matmul %54, %55, %cst_30 {dimension_numbers = #tpu.dot_dimension_numbers<[1], [0], [0], [1], [0, 0, 1, 1], [], []>} : vector<64x64xf32>, vector<64x4xf32>, vector<64x4xf32> -> vector<64x4xf32>
    %57 = vector.broadcast %4 : f32 to vector<64x4xf32>
    %58 = arith.mulf %57, %56 : vector<64x4xf32>
    %59 = vector.extract_strided_slice %1 {offsets = [0, 4], sizes = [64, 4], strides = [1, 1]} : vector<64x32xf32> to vector<64x4xf32>
    %60 = arith.addf %58, %59 : vector<64x4xf32>
    %c0_31 = arith.constant 0 : index
    %c0_32 = arith.constant 0 : index
    %c4 = arith.constant 4 : index
    %61 = vector.load %arg11[%c0_31, %c0_32, %c4] : memref<1x64x32xf32, #tpu.memory_space<vmem>>, vector<1x64x4xf32>
    %62 = vector.shape_cast %61 : vector<1x64x4xf32> to vector<64x4xf32>
    %63 = vector.shape_cast %60 : vector<64x4xf32> to vector<1x64x4xf32>
    tpu.vector_store %arg11[%c0_31, %c0_32, %c4], %63 {strides = array<i32>} : memref<1x64x32xf32, #tpu.memory_space<vmem>>, vector<1x64x4xf32>,
    %64 = vector.extract_strided_slice %9 {offsets = [0, 8], sizes = [64, 4], strides = [1, 1]} : vector<64x32xf32> to vector<64x4xf32>
    %65 = vector.extract_strided_slice %14 {offsets = [0, 8], sizes = [64, 4], strides = [1, 1]} : vector<64x32xf32> to vector<64x4xf32>
    %cst_33 = arith.constant dense<0.000000e+00> : vector<64x64xf32>
    %66 = tpu.matmul %64, %65, %cst_33 {dimension_numbers = #tpu.dot_dimension_numbers<[1], [1], [0], [0], [0, 0, 1, 0], [], []>} : vector<64x4xf32>, vector<64x4xf32>, vector<64x64xf32> -> vector<64x64xf32>
    %cst_34 = arith.constant dense<0xFF800000> : vector<64xf32>
    %67 = vector.multi_reduction <maximumf>, %66, %cst_34 [1] : vector<64x64xf32> to vector<64xf32>
    %68 = vector.shape_cast %67 : vector<64xf32> to vector<64x1xf32>
    %69 = vector.broadcast %68 : vector<64x1xf32> to vector<64x64xf32>
    %70 = arith.subf %66, %69 : vector<64x64xf32>
    %71 = math.exp %70 : vector<64x64xf32>
    %cst_35 = arith.constant dense<0.000000e+00> : vector<64xf32>
    %72 = vector.multi_reduction <add>, %71, %cst_35 [1] : vector<64x64xf32> to vector<64xf32>
    %73 = vector.shape_cast %72 : vector<64xf32> to vector<64x1xf32>
    %74 = tpu.reciprocal %73 {approx = true} : vector<64x1xf32> -> vector<64x1xf32>
    %75 = vector.broadcast %74 : vector<64x1xf32> to vector<64x64xf32>
    %76 = arith.mulf %71, %75 : vector<64x64xf32>
    %77 = vector.extract_strided_slice %19 {offsets = [0, 8], sizes = [64, 4], strides = [1, 1]} : vector<64x32xf32> to vector<64x4xf32>
    %cst_36 = arith.constant dense<0.000000e+00> : vector<64x4xf32>
    %78 = tpu.matmul %76, %77, %cst_36 {dimension_numbers = #tpu.dot_dimension_numbers<[1], [0], [0], [1], [0, 0, 1, 1], [], []>} : vector<64x64xf32>, vector<64x4xf32>, vector<64x4xf32> -> vector<64x4xf32>
    %79 = vector.broadcast %4 : f32 to vector<64x4xf32>
    %80 = arith.mulf %79, %78 : vector<64x4xf32>
    %81 = vector.extract_strided_slice %1 {offsets = [0, 8], sizes = [64, 4], strides = [1, 1]} : vector<64x32xf32> to vector<64x4xf32>
    %82 = arith.addf %80, %81 : vector<64x4xf32>
    %c0_37 = arith.constant 0 : index
    %c0_38 = arith.constant 0 : index
    %c8 = arith.constant 8 : index
    %83 = vector.load %arg11[%c0_37, %c0_38, %c8] : memref<1x64x32xf32, #tpu.memory_space<vmem>>, vector<1x64x4xf32>
    %84 = vector.shape_cast %83 : vector<1x64x4xf32> to vector<64x4xf32>
    %85 = vector.shape_cast %82 : vector<64x4xf32> to vector<1x64x4xf32>
    tpu.vector_store %arg11[%c0_37, %c0_38, %c8], %85 {strides = array<i32>} : memref<1x64x32xf32, #tpu.memory_space<vmem>>, vector<1x64x4xf32>,
    %86 = vector.extract_strided_slice %9 {offsets = [0, 12], sizes = [64, 4], strides = [1, 1]} : vector<64x32xf32> to vector<64x4xf32>
    %87 = vector.extract_strided_slice %14 {offsets = [0, 12], sizes = [64, 4], strides = [1, 1]} : vector<64x32xf32> to vector<64x4xf32>
    %cst_39 = arith.constant dense<0.000000e+00> : vector<64x64xf32>
    %88 = tpu.matmul %86, %87, %cst_39 {dimension_numbers = #tpu.dot_dimension_numbers<[1], [1], [0], [0], [0, 0, 1, 0], [], []>} : vector<64x4xf32>, vector<64x4xf32>, vector<64x64xf32> -> vector<64x64xf32>
    %cst_40 = arith.constant dense<0xFF800000> : vector<64xf32>
    %89 = vector.multi_reduction <maximumf>, %88, %cst_40 [1] : vector<64x64xf32> to vector<64xf32>
    %90 = vector.shape_cast %89 : vector<64xf32> to vector<64x1xf32>
    %91 = vector.broadcast %90 : vector<64x1xf32> to vector<64x64xf32>
    %92 = arith.subf %88, %91 : vector<64x64xf32>
    %93 = math.exp %92 : vector<64x64xf32>
    %cst_41 = arith.constant dense<0.000000e+00> : vector<64xf32>
    %94 = vector.multi_reduction <add>, %93, %cst_41 [1] : vector<64x64xf32> to vector<64xf32>
    %95 = vector.shape_cast %94 : vector<64xf32> to vector<64x1xf32>
    %96 = tpu.reciprocal %95 {approx = true} : vector<64x1xf32> -> vector<64x1xf32>
    %97 = vector.broadcast %96 : vector<64x1xf32> to vector<64x64xf32>
    %98 = arith.mulf %93, %97 : vector<64x64xf32>
    %99 = vector.extract_strided_slice %19 {offsets = [0, 12], sizes = [64, 4], strides = [1, 1]} : vector<64x32xf32> to vector<64x4xf32>
    %cst_42 = arith.constant dense<0.000000e+00> : vector<64x4xf32>
    %100 = tpu.matmul %98, %99, %cst_42 {dimension_numbers = #tpu.dot_dimension_numbers<[1], [0], [0], [1], [0, 0, 1, 1], [], []>} : vector<64x64xf32>, vector<64x4xf32>, vector<64x4xf32> -> vector<64x4xf32>
    %101 = vector.broadcast %4 : f32 to vector<64x4xf32>
    %102 = arith.mulf %101, %100 : vector<64x4xf32>
    %103 = vector.extract_strided_slice %1 {offsets = [0, 12], sizes = [64, 4], strides = [1, 1]} : vector<64x32xf32> to vector<64x4xf32>
    %104 = arith.addf %102, %103 : vector<64x4xf32>
    %c0_43 = arith.constant 0 : index
    %c0_44 = arith.constant 0 : index
    %c12 = arith.constant 12 : index
    %105 = vector.load %arg11[%c0_43, %c0_44, %c12] : memref<1x64x32xf32, #tpu.memory_space<vmem>>, vector<1x64x4xf32>
    %106 = vector.shape_cast %105 : vector<1x64x4xf32> to vector<64x4xf32>
    %107 = vector.shape_cast %104 : vector<64x4xf32> to vector<1x64x4xf32>
    tpu.vector_store %arg11[%c0_43, %c0_44, %c12], %107 {strides = array<i32>} : memref<1x64x32xf32, #tpu.memory_space<vmem>>, vector<1x64x4xf32>,
    %108 = vector.extract_strided_slice %9 {offsets = [0, 16], sizes = [64, 4], strides = [1, 1]} : vector<64x32xf32> to vector<64x4xf32>
    %109 = vector.extract_strided_slice %14 {offsets = [0, 16], sizes = [64, 4], strides = [1, 1]} : vector<64x32xf32> to vector<64x4xf32>
    %cst_45 = arith.constant dense<0.000000e+00> : vector<64x64xf32>
    %110 = tpu.matmul %108, %109, %cst_45 {dimension_numbers = #tpu.dot_dimension_numbers<[1], [1], [0], [0], [0, 0, 1, 0], [], []>} : vector<64x4xf32>, vector<64x4xf32>, vector<64x64xf32> -> vector<64x64xf32>
    %cst_46 = arith.constant dense<0xFF800000> : vector<64xf32>
    %111 = vector.multi_reduction <maximumf>, %110, %cst_46 [1] : vector<64x64xf32> to vector<64xf32>
    %112 = vector.shape_cast %111 : vector<64xf32> to vector<64x1xf32>
    %113 = vector.broadcast %112 : vector<64x1xf32> to vector<64x64xf32>
    %114 = arith.subf %110, %113 : vector<64x64xf32>
    %115 = math.exp %114 : vector<64x64xf32>
    %cst_47 = arith.constant dense<0.000000e+00> : vector<64xf32>
    %116 = vector.multi_reduction <add>, %115, %cst_47 [1] : vector<64x64xf32> to vector<64xf32>
    %117 = vector.shape_cast %116 : vector<64xf32> to vector<64x1xf32>
    %118 = tpu.reciprocal %117 {approx = true} : vector<64x1xf32> -> vector<64x1xf32>
    %119 = vector.broadcast %118 : vector<64x1xf32> to vector<64x64xf32>
    %120 = arith.mulf %115, %119 : vector<64x64xf32>
    %121 = vector.extract_strided_slice %19 {offsets = [0, 16], sizes = [64, 4], strides = [1, 1]} : vector<64x32xf32> to vector<64x4xf32>
    %cst_48 = arith.constant dense<0.000000e+00> : vector<64x4xf32>
    %122 = tpu.matmul %120, %121, %cst_48 {dimension_numbers = #tpu.dot_dimension_numbers<[1], [0], [0], [1], [0, 0, 1, 1], [], []>} : vector<64x64xf32>, vector<64x4xf32>, vector<64x4xf32> -> vector<64x4xf32>
    %123 = vector.broadcast %4 : f32 to vector<64x4xf32>
    %124 = arith.mulf %123, %122 : vector<64x4xf32>
    %125 = vector.extract_strided_slice %1 {offsets = [0, 16], sizes = [64, 4], strides = [1, 1]} : vector<64x32xf32> to vector<64x4xf32>
    %126 = arith.addf %124, %125 : vector<64x4xf32>
    %c0_49 = arith.constant 0 : index
    %c0_50 = arith.constant 0 : index
    %c16 = arith.constant 16 : index
    %127 = vector.load %arg11[%c0_49, %c0_50, %c16] : memref<1x64x32xf32, #tpu.memory_space<vmem>>, vector<1x64x4xf32>
    %128 = vector.shape_cast %127 : vector<1x64x4xf32> to vector<64x4xf32>
    %129 = vector.shape_cast %126 : vector<64x4xf32> to vector<1x64x4xf32>
    tpu.vector_store %arg11[%c0_49, %c0_50, %c16], %129 {strides = array<i32>} : memref<1x64x32xf32, #tpu.memory_space<vmem>>, vector<1x64x4xf32>,
    %130 = vector.extract_strided_slice %9 {offsets = [0, 20], sizes = [64, 4], strides = [1, 1]} : vector<64x32xf32> to vector<64x4xf32>
    %131 = vector.extract_strided_slice %14 {offsets = [0, 20], sizes = [64, 4], strides = [1, 1]} : vector<64x32xf32> to vector<64x4xf32>
    %cst_51 = arith.constant dense<0.000000e+00> : vector<64x64xf32>
    %132 = tpu.matmul %130, %131, %cst_51 {dimension_numbers = #tpu.dot_dimension_numbers<[1], [1], [0], [0], [0, 0, 1, 0], [], []>} : vector<64x4xf32>, vector<64x4xf32>, vector<64x64xf32> -> vector<64x64xf32>
    %cst_52 = arith.constant dense<0xFF800000> : vector<64xf32>
    %133 = vector.multi_reduction <maximumf>, %132, %cst_52 [1] : vector<64x64xf32> to vector<64xf32>
    %134 = vector.shape_cast %133 : vector<64xf32> to vector<64x1xf32>
    %135 = vector.broadcast %134 : vector<64x1xf32> to vector<64x64xf32>
    %136 = arith.subf %132, %135 : vector<64x64xf32>
    %137 = math.exp %136 : vector<64x64xf32>
    %cst_53 = arith.constant dense<0.000000e+00> : vector<64xf32>
    %138 = vector.multi_reduction <add>, %137, %cst_53 [1] : vector<64x64xf32> to vector<64xf32>
    %139 = vector.shape_cast %138 : vector<64xf32> to vector<64x1xf32>
    %140 = tpu.reciprocal %139 {approx = true} : vector<64x1xf32> -> vector<64x1xf32>
    %141 = vector.broadcast %140 : vector<64x1xf32> to vector<64x64xf32>
    %142 = arith.mulf %137, %141 : vector<64x64xf32>
    %143 = vector.extract_strided_slice %19 {offsets = [0, 20], sizes = [64, 4], strides = [1, 1]} : vector<64x32xf32> to vector<64x4xf32>
    %cst_54 = arith.constant dense<0.000000e+00> : vector<64x4xf32>
    %144 = tpu.matmul %142, %143, %cst_54 {dimension_numbers = #tpu.dot_dimension_numbers<[1], [0], [0], [1], [0, 0, 1, 1], [], []>} : vector<64x64xf32>, vector<64x4xf32>, vector<64x4xf32> -> vector<64x4xf32>
    %145 = vector.broadcast %4 : f32 to vector<64x4xf32>
    %146 = arith.mulf %145, %144 : vector<64x4xf32>
    %147 = vector.extract_strided_slice %1 {offsets = [0, 20], sizes = [64, 4], strides = [1, 1]} : vector<64x32xf32> to vector<64x4xf32>
    %148 = arith.addf %146, %147 : vector<64x4xf32>
    %c0_55 = arith.constant 0 : index
    %c0_56 = arith.constant 0 : index
    %c20 = arith.constant 20 : index
    %149 = vector.load %arg11[%c0_55, %c0_56, %c20] : memref<1x64x32xf32, #tpu.memory_space<vmem>>, vector<1x64x4xf32>
    %150 = vector.shape_cast %149 : vector<1x64x4xf32> to vector<64x4xf32>
    %151 = vector.shape_cast %148 : vector<64x4xf32> to vector<1x64x4xf32>
    tpu.vector_store %arg11[%c0_55, %c0_56, %c20], %151 {strides = array<i32>} : memref<1x64x32xf32, #tpu.memory_space<vmem>>, vector<1x64x4xf32>,
    %152 = vector.extract_strided_slice %9 {offsets = [0, 24], sizes = [64, 4], strides = [1, 1]} : vector<64x32xf32> to vector<64x4xf32>
    %153 = vector.extract_strided_slice %14 {offsets = [0, 24], sizes = [64, 4], strides = [1, 1]} : vector<64x32xf32> to vector<64x4xf32>
    %cst_57 = arith.constant dense<0.000000e+00> : vector<64x64xf32>
    %154 = tpu.matmul %152, %153, %cst_57 {dimension_numbers = #tpu.dot_dimension_numbers<[1], [1], [0], [0], [0, 0, 1, 0], [], []>} : vector<64x4xf32>, vector<64x4xf32>, vector<64x64xf32> -> vector<64x64xf32>
    %cst_58 = arith.constant dense<0xFF800000> : vector<64xf32>
    %155 = vector.multi_reduction <maximumf>, %154, %cst_58 [1] : vector<64x64xf32> to vector<64xf32>
    %156 = vector.shape_cast %155 : vector<64xf32> to vector<64x1xf32>
    %157 = vector.broadcast %156 : vector<64x1xf32> to vector<64x64xf32>
    %158 = arith.subf %154, %157 : vector<64x64xf32>
    %159 = math.exp %158 : vector<64x64xf32>
    %cst_59 = arith.constant dense<0.000000e+00> : vector<64xf32>
    %160 = vector.multi_reduction <add>, %159, %cst_59 [1] : vector<64x64xf32> to vector<64xf32>
    %161 = vector.shape_cast %160 : vector<64xf32> to vector<64x1xf32>
    %162 = tpu.reciprocal %161 {approx = true} : vector<64x1xf32> -> vector<64x1xf32>
    %163 = vector.broadcast %162 : vector<64x1xf32> to vector<64x64xf32>
    %164 = arith.mulf %159, %163 : vector<64x64xf32>
    %165 = vector.extract_strided_slice %19 {offsets = [0, 24], sizes = [64, 4], strides = [1, 1]} : vector<64x32xf32> to vector<64x4xf32>
    %cst_60 = arith.constant dense<0.000000e+00> : vector<64x4xf32>
    %166 = tpu.matmul %164, %165, %cst_60 {dimension_numbers = #tpu.dot_dimension_numbers<[1], [0], [0], [1], [0, 0, 1, 1], [], []>} : vector<64x64xf32>, vector<64x4xf32>, vector<64x4xf32> -> vector<64x4xf32>
    %167 = vector.broadcast %4 : f32 to vector<64x4xf32>
    %168 = arith.mulf %167, %166 : vector<64x4xf32>
    %169 = vector.extract_strided_slice %1 {offsets = [0, 24], sizes = [64, 4], strides = [1, 1]} : vector<64x32xf32> to vector<64x4xf32>
    %170 = arith.addf %168, %169 : vector<64x4xf32>
    %c0_61 = arith.constant 0 : index
    %c0_62 = arith.constant 0 : index
    %c24 = arith.constant 24 : index
    %171 = vector.load %arg11[%c0_61, %c0_62, %c24] : memref<1x64x32xf32, #tpu.memory_space<vmem>>, vector<1x64x4xf32>
    %172 = vector.shape_cast %171 : vector<1x64x4xf32> to vector<64x4xf32>
    %173 = vector.shape_cast %170 : vector<64x4xf32> to vector<1x64x4xf32>
    tpu.vector_store %arg11[%c0_61, %c0_62, %c24], %173 {strides = array<i32>} : memref<1x64x32xf32, #tpu.memory_space<vmem>>, vector<1x64x4xf32>,
    %174 = vector.extract_strided_slice %9 {offsets = [0, 28], sizes = [64, 4], strides = [1, 1]} : vector<64x32xf32> to vector<64x4xf32>
    %175 = vector.extract_strided_slice %14 {offsets = [0, 28], sizes = [64, 4], strides = [1, 1]} : vector<64x32xf32> to vector<64x4xf32>
    %cst_63 = arith.constant dense<0.000000e+00> : vector<64x64xf32>
    %176 = tpu.matmul %174, %175, %cst_63 {dimension_numbers = #tpu.dot_dimension_numbers<[1], [1], [0], [0], [0, 0, 1, 0], [], []>} : vector<64x4xf32>, vector<64x4xf32>, vector<64x64xf32> -> vector<64x64xf32>
    %cst_64 = arith.constant dense<0xFF800000> : vector<64xf32>
    %177 = vector.multi_reduction <maximumf>, %176, %cst_64 [1] : vector<64x64xf32> to vector<64xf32>
    %178 = vector.shape_cast %177 : vector<64xf32> to vector<64x1xf32>
    %179 = vector.broadcast %178 : vector<64x1xf32> to vector<64x64xf32>
    %180 = arith.subf %176, %179 : vector<64x64xf32>
    %181 = math.exp %180 : vector<64x64xf32>
    %cst_65 = arith.constant dense<0.000000e+00> : vector<64xf32>
    %182 = vector.multi_reduction <add>, %181, %cst_65 [1] : vector<64x64xf32> to vector<64xf32>
    %183 = vector.shape_cast %182 : vector<64xf32> to vector<64x1xf32>
    %184 = tpu.reciprocal %183 {approx = true} : vector<64x1xf32> -> vector<64x1xf32>
    %185 = vector.broadcast %184 : vector<64x1xf32> to vector<64x64xf32>
    %186 = arith.mulf %181, %185 : vector<64x64xf32>
    %187 = vector.extract_strided_slice %19 {offsets = [0, 28], sizes = [64, 4], strides = [1, 1]} : vector<64x32xf32> to vector<64x4xf32>
    %cst_66 = arith.constant dense<0.000000e+00> : vector<64x4xf32>
    %188 = tpu.matmul %186, %187, %cst_66 {dimension_numbers = #tpu.dot_dimension_numbers<[1], [0], [0], [1], [0, 0, 1, 1], [], []>} : vector<64x64xf32>, vector<64x4xf32>, vector<64x4xf32> -> vector<64x4xf32>
    %189 = vector.broadcast %4 : f32 to vector<64x4xf32>
    %190 = arith.mulf %189, %188 : vector<64x4xf32>
    %191 = vector.extract_strided_slice %1 {offsets = [0, 28], sizes = [64, 4], strides = [1, 1]} : vector<64x32xf32> to vector<64x4xf32>
    %192 = arith.addf %190, %191 : vector<64x4xf32>
    %c0_67 = arith.constant 0 : index
    %c0_68 = arith.constant 0 : index
    %c28 = arith.constant 28 : index
    %193 = vector.load %arg11[%c0_67, %c0_68, %c28] : memref<1x64x32xf32, #tpu.memory_space<vmem>>, vector<1x64x4xf32>
    %194 = vector.shape_cast %193 : vector<1x64x4xf32> to vector<64x4xf32>
    %195 = vector.shape_cast %192 : vector<64x4xf32> to vector<1x64x4xf32>
    tpu.vector_store %arg11[%c0_67, %c0_68, %c28], %195 {strides = array<i32>} : memref<1x64x32xf32, #tpu.memory_space<vmem>>, vector<1x64x4xf32>,
    return
  }
  func.func @transform_0(%arg0: i32, %arg1: i32) -> (i32, i32, i32) {
    %c0_i32 = arith.constant 0 : i32
    %c0_i32_0 = arith.constant 0 : i32
    return %arg0, %arg1, %c0_i32 : i32, i32, i32
  }
  func.func @transform_1(%arg0: i32, %arg1: i32) -> (i32, i32, i32) {
    %c0_i32 = arith.constant 0 : i32
    %c0_i32_0 = arith.constant 0 : i32
    %c0_i32_1 = arith.constant 0 : i32
    return %arg0, %c0_i32, %c0_i32_0 : i32, i32, i32
  }
  func.func @transform_2(%arg0: i32, %arg1: i32) -> (i32, i32) {
    %c0_i32 = arith.constant 0 : i32
    %c0_i32_0 = arith.constant 0 : i32
    %c0_i32_1 = arith.constant 0 : i32
    return %c0_i32, %c0_i32_0 : i32, i32
  }
  func.func @transform_3(%arg0: i32, %arg1: i32) -> (i32, i32) {
    %c0_i32 = arith.constant 0 : i32
    %c0_i32_0 = arith.constant 0 : i32
    %c0_i32_1 = arith.constant 0 : i32
    return %c0_i32, %c0_i32_0 : i32, i32
  }
  func.func @transform_4(%arg0: i32, %arg1: i32) -> (i32, i32) {
    %c0_i32 = arith.constant 0 : i32
    %c0_i32_0 = arith.constant 0 : i32
    %c0_i32_1 = arith.constant 0 : i32
    return %c0_i32, %c0_i32_0 : i32, i32
  }
  func.func @transform_5(%arg0: i32, %arg1: i32) -> (i32, i32) {
    %c0_i32 = arith.constant 0 : i32
    %c0_i32_0 = arith.constant 0 : i32
    %c0_i32_1 = arith.constant 0 : i32
    return %c0_i32, %c0_i32_0 : i32, i32
  }
  func.func @transform_6(%arg0: i32, %arg1: i32) -> (i32, i32) {
    %c0_i32 = arith.constant 0 : i32
    %c0_i32_0 = arith.constant 0 : i32
    %c0_i32_1 = arith.constant 0 : i32
    return %c0_i32, %c0_i32_0 : i32, i32
  }
  func.func @transform_7(%arg0: i32, %arg1: i32) -> (i32, i32) {
    %c0_i32 = arith.constant 0 : i32
    %c0_i32_0 = arith.constant 0 : i32
    %c0_i32_1 = arith.constant 0 : i32
    return %c0_i32, %c0_i32_0 : i32, i32
  }
  func.func @transform_8(%arg0: i32, %arg1: i32) -> i32 {
    %c0_i32 = arith.constant 0 : i32
    %c0_i32_0 = arith.constant 0 : i32
    return %c0_i32 : i32
  }
  func.func @transform_9(%arg0: i32, %arg1: i32) -> (i32, i32, i32) {
    %c0_i32 = arith.constant 0 : i32
    %c0_i32_0 = arith.constant 0 : i32
    return %arg0, %arg1, %c0_i32 : i32, i32, i32
  }
}

</mosaic_0001>

<llo_original>
// kernel: tpu_custom_call.1
$region0: #{tpu_custom_call.1}
  #allocation0 [shape = 'u32[]', space=smem, size = 0x4, offset = 0x4, fixed_abs, tag = 'smem constant byte address 0x4 - core index']
  #allocation1 [shape = 'u32[144,128]{1,0:T(1,128)}', space=vmem, size = 0x12000, scoped, tag = 'internal scratch']
  #allocation2 [shape = 'f32[1]{0:T(128)S(6)}', space=smem, size = 0x200, scoped, tag = 'scoped memory for tpu_custom_call.1']
  %s0 = inlined_call_operand.vmem [shape: f32[2,64,32], index: 0, kind: input, shape index: {}]
  %s1 = inlined_call_operand.vmem [shape: f32[2,64,32], index: 1, kind: input, shape index: {}]
  %s2 = inlined_call_operand.vmem [shape: f32[32,32], index: 2, kind: input, shape index: {}]
  %s3 = inlined_call_operand.vmem [shape: f32[1,32], index: 3, kind: input, shape index: {}]
  %s4 = inlined_call_operand.vmem [shape: f32[32,32], index: 4, kind: input, shape index: {}]
  %s5 = inlined_call_operand.vmem [shape: f32[1,32], index: 5, kind: input, shape index: {}]
  %s6 = inlined_call_operand.vmem [shape: f32[32,32], index: 6, kind: input, shape index: {}]
  %s7 = inlined_call_operand.vmem [shape: f32[1,32], index: 7, kind: input, shape index: {}]
  %s8 = inlined_call_operand.<no memory space> [shape: f32[1], index: 8, kind: input, shape index: {}]
  %s9 = inlined_call_operand.vmem [shape: f32[2,64,32], index: 9, kind: output, shape index: {}]
  %s10 = sld [smem:[#allocation0]]
  $region69: #{tpu_custom_call.1} parent=0
    _
  %s12 = ssub.s32 1, %s10
  %s13 = scalar_select 0, %s12, %s10
  %14 = sst [smem:[#allocation2]] %s8
  loop: start=0, step=1, limit=4
  $region2: #{tpu_custom_call.1} parent=0 // loop_pre_header
    _
  $region3: #{tpu_custom_call.1} parent=0 // loop_header
    %s16 = sphi 0, %s20
    %p17 = scmp.ge.s32.totalorder %s16, 4
    %s23 = sphi 0, %s35
    %s24 = sphi 0, %s31
    %s25 = sphi 0, %s23
    %s26 = sphi 0, %s24
    %s27 = sphi 0, %s25
    %s28 = sphi 0, %s26
    %s40 = sphi 0, %s42
    %s43 = sphi 0, %s40
    %s44 = sphi 0, %s43
    %s60 = sphi 0, %s44
    %s66 = sphi 0, %s68
    %s69 = sphi 0, %s66
    %s70 = sphi 0, %s69
    %s86 = sphi 0, %s70
    %s90 = sphi 0, %s90
    %s92 = sphi 0, %s90
    %s93 = sphi 0, %s92
    %s107 = sphi 0, %s93
    %s111 = sphi 0, %s111
    %s113 = sphi 0, %s111
    %s114 = sphi 0, %s113
    %s128 = sphi 0, %s114
    %s132 = sphi 0, %s132
    %s134 = sphi 0, %s132
    %s135 = sphi 0, %s134
    %s149 = sphi 0, %s135
    %s153 = sphi 0, %s153
    %s155 = sphi 0, %s153
    %s156 = sphi 0, %s155
    %s170 = sphi 0, %s156
    %s174 = sphi 0, %s174
    %s176 = sphi 0, %s174
    %s177 = sphi 0, %s176
    %s191 = sphi 0, %s177
    %s195 = sphi 0, %s195
    %s197 = sphi 0, %s195
    %s198 = sphi 0, %s197
    %s212 = sphi 0, %s198
    %s216 = sphi 0, %s216
    %s218 = sphi 0, %s216
    %s219 = sphi 0, %s218
    %s233 = sphi 0, %s219
    %s241 = sphi 0, %s243
    %s244 = sphi 0, %s241
    %s245 = sphi 0, %s244
    %s261 = sphi 0, %s245
  $region4: #{tpu_custom_call.1} parent=0 // loop_header_branch
    %19 = sbr.rel (%p17) target = $region8
  $region5: #{tpu_custom_call.1} parent=0 // loop_body
    %s21 = ssub.s32 %s16, 1
    %s22 = ssub.s32 %s16, 2
    %s29 = sadd.s32 1, %s24
    %p30 = scmp.ge.s32.totalorder %s29, 1
    %s31 = scalar_select %p30, 0, %s29
    %s32 = sadd.s32 1, %s23
    %s33 = scalar_select %p30, %s32, %s23
    %p34 = scmp.ge.s32.totalorder %s33, 2
    %s35 = scalar_select %p34, 0, %s33
    %s36 = ssub.s32 %s23, %s35
    %s37 = ssub.s32 %s24, %s31
    %s38 = sor.u32 %s36, %s37
    %p39 = scmp.eq.s32.totalorder %s38, 0
    %s41 = sadd.s32 %s40, 1
    %s42 = scalar_select %p39, %s40, %s41
    %p45 = pneg %p39
    %p46 = scmp.eq.s32.totalorder %s16, 1
    %p47 = por %p45, %p46
    %p48 = scmp.ne.s32.totalorder %s40, %s43
    %p49 = scmp.eq.s32.totalorder %s16, 0
    %p50 = por %p48, %p49
    %p51 = scmp.ne.s32.totalorder %s40, %s43
    %p52 = scmp.eq.s32.totalorder %s21, 1
    %p53 = por %p51, %p52
    %p54 = scmp.ne.s32.totalorder %s43, %s44
    %p55 = scmp.eq.s32.totalorder %s21, 0
    %p56 = por %p54, %p55
    %p57 = scmp.ne.s32.totalorder %s43, %s44
    %p58 = scmp.eq.s32.totalorder %s22, 1
    %p59 = por %p57, %p58
    %p61 = scmp.ne.s32.totalorder %s44, %s60
    %p62 = scmp.eq.s32.totalorder %s22, 0
    %p63 = por %p61, %p62
    %s64 = ssub.s32 %s23, %s35
    %p65 = scmp.eq.s32.totalorder %s64, 0
    %s67 = sadd.s32 %s66, 1
    %s68 = scalar_select %p65, %s66, %s67
    %p71 = pneg %p65
    %p72 = scmp.eq.s32.totalorder %s16, 1
    %p73 = por %p71, %p72
    %p74 = scmp.ne.s32.totalorder %s66, %s69
    %p75 = scmp.eq.s32.totalorder %s16, 0
    %p76 = por %p74, %p75
    %p77 = scmp.ne.s32.totalorder %s66, %s69
    %p78 = scmp.eq.s32.totalorder %s21, 1
    %p79 = por %p77, %p78
    %p80 = scmp.ne.s32.totalorder %s69, %s70
    %p81 = scmp.eq.s32.totalorder %s21, 0
    %p82 = por %p80, %p81
    %p83 = scmp.ne.s32.totalorder %s69, %s70
    %p84 = scmp.eq.s32.totalorder %s22, 1
    %p85 = por %p83, %p84
    %p87 = scmp.ne.s32.totalorder %s70, %s86
    %p88 = scmp.eq.s32.totalorder %s22, 0
    %p89 = por %p87, %p88
    %s91 = sadd.s32 %s90, 1
    %p94 = scmp.eq.s32.totalorder %s16, 1
    %p95 = scmp.ne.s32.totalorder %s90, %s92
    %p96 = scmp.eq.s32.totalorder %s16, 0
    %p97 = por %p95, %p96
    %p98 = scmp.ne.s32.totalorder %s90, %s92
    %p99 = scmp.eq.s32.totalorder %s21, 1
    %p100 = por %p98, %p99
    %p101 = scmp.ne.s32.totalorder %s92, %s93
    %p102 = scmp.eq.s32.totalorder %s21, 0
    %p103 = por %p101, %p102
    %p104 = scmp.ne.s32.totalorder %s92, %s93
    %p105 = scmp.eq.s32.totalorder %s22, 1
    %p106 = por %p104, %p105
    %p108 = scmp.ne.s32.totalorder %s93, %s107
    %p109 = scmp.eq.s32.totalorder %s22, 0
    %p110 = por %p108, %p109
    %s112 = sadd.s32 %s111, 1
    %p115 = scmp.eq.s32.totalorder %s16, 1
    %p116 = scmp.ne.s32.totalorder %s111, %s113
    %p117 = scmp.eq.s32.totalorder %s16, 0
    %p118 = por %p116, %p117
    %p119 = scmp.ne.s32.totalorder %s111, %s113
    %p120 = scmp.eq.s32.totalorder %s21, 1
    %p121 = por %p119, %p120
    %p122 = scmp.ne.s32.totalorder %s113, %s114
    %p123 = scmp.eq.s32.totalorder %s21, 0
    %p124 = por %p122, %p123
    %p125 = scmp.ne.s32.totalorder %s113, %s114
    %p126 = scmp.eq.s32.totalorder %s22, 1
    %p127 = por %p125, %p126
    %p129 = scmp.ne.s32.totalorder %s114, %s128
    %p130 = scmp.eq.s32.totalorder %s22, 0
    %p131 = por %p129, %p130
    %s133 = sadd.s32 %s132, 1
    %p136 = scmp.eq.s32.totalorder %s16, 1
    %p137 = scmp.ne.s32.totalorder %s132, %s134
    %p138 = scmp.eq.s32.totalorder %s16, 0
    %p139 = por %p137, %p138
    %p140 = scmp.ne.s32.totalorder %s132, %s134
    %p141 = scmp.eq.s32.totalorder %s21, 1
    %p142 = por %p140, %p141
    %p143 = scmp.ne.s32.totalorder %s134, %s135
    %p144 = scmp.eq.s32.totalorder %s21, 0
    %p145 = por %p143, %p144
    %p146 = scmp.ne.s32.totalorder %s134, %s135
    %p147 = scmp.eq.s32.totalorder %s22, 1
    %p148 = por %p146, %p147
    %p150 = scmp.ne.s32.totalorder %s135, %s149
    %p151 = scmp.eq.s32.totalorder %s22, 0
    %p152 = por %p150, %p151
    %s154 = sadd.s32 %s153, 1
    %p157 = scmp.eq.s32.totalorder %s16, 1
    %p158 = scmp.ne.s32.totalorder %s153, %s155
    %p159 = scmp.eq.s32.totalorder %s16, 0
    %p160 = por %p158, %p159
    %p161 = scmp.ne.s32.totalorder %s153, %s155
    %p162 = scmp.eq.s32.totalorder %s21, 1
    %p163 = por %p161, %p162
    %p164 = scmp.ne.s32.totalorder %s155, %s156
    %p165 = scmp.eq.s32.totalorder %s21, 0
    %p166 = por %p164, %p165
    %p167 = scmp.ne.s32.totalorder %s155, %s156
    %p168 = scmp.eq.s32.totalorder %s22, 1
    %p169 = por %p167, %p168
    %p171 = scmp.ne.s32.totalorder %s156, %s170
    %p172 = scmp.eq.s32.totalorder %s22, 0
    %p173 = por %p171, %p172
    %s175 = sadd.s32 %s174, 1
    %p178 = scmp.eq.s32.totalorder %s16, 1
    %p179 = scmp.ne.s32.totalorder %s174, %s176
    %p180 = scmp.eq.s32.totalorder %s16, 0
    %p181 = por %p179, %p180
    %p182 = scmp.ne.s32.totalorder %s174, %s176
    %p183 = scmp.eq.s32.totalorder %s21, 1
    %p184 = por %p182, %p183
    %p185 = scmp.ne.s32.totalorder %s176, %s177
    %p186 = scmp.eq.s32.totalorder %s21, 0
    %p187 = por %p185, %p186
    %p188 = scmp.ne.s32.totalorder %s176, %s177
    %p189 = scmp.eq.s32.totalorder %s22, 1
    %p190 = por %p188, %p189
    %p192 = scmp.ne.s32.totalorder %s177, %s191
    %p193 = scmp.eq.s32.totalorder %s22, 0
    %p194 = por %p192, %p193
    %s196 = sadd.s32 %s195, 1
    %p199 = scmp.eq.s32.totalorder %s16, 1
    %p200 = scmp.ne.s32.totalorder %s195, %s197
    %p201 = scmp.eq.s32.totalorder %s16, 0
    %p202 = por %p200, %p201
    %p203 = scmp.ne.s32.totalorder %s195, %s197
    %p204 = scmp.eq.s32.totalorder %s21, 1
    %p205 = por %p203, %p204
    %p206 = scmp.ne.s32.totalorder %s197, %s198
    %p207 = scmp.eq.s32.totalorder %s21, 0
    %p208 = por %p206, %p207
    %p209 = scmp.ne.s32.totalorder %s197, %s198
    %p210 = scmp.eq.s32.totalorder %s22, 1
    %p211 = por %p209, %p210
    %p213 = scmp.ne.s32.totalorder %s198, %s212
    %p214 = scmp.eq.s32.totalorder %s22, 0
    %p215 = por %p213, %p214
    %s217 = sadd.s32 %s216, 1
    %p220 = scmp.eq.s32.totalorder %s16, 1
    %p221 = scmp.ne.s32.totalorder %s216, %s218
    %p222 = scmp.eq.s32.totalorder %s16, 0
    %p223 = por %p221, %p222
    %p224 = scmp.ne.s32.totalorder %s216, %s218
    %p225 = scmp.eq.s32.totalorder %s21, 1
    %p226 = por %p224, %p225
    %p227 = scmp.ne.s32.totalorder %s218, %s219
    %p228 = scmp.eq.s32.totalorder %s21, 0
    %p229 = por %p227, %p228
    %p230 = scmp.ne.s32.totalorder %s218, %s219
    %p231 = scmp.eq.s32.totalorder %s22, 1
    %p232 = por %p230, %p231
    %p234 = scmp.ne.s32.totalorder %s219, %s233
    %p235 = scmp.eq.s32.totalorder %s22, 0
    %p236 = por %p234, %p235
    %s237 = ssub.s32 %s23, %s35
    %s238 = ssub.s32 %s24, %s31
    %s239 = sor.u32 %s237, %s238
    %p240 = scmp.eq.s32.totalorder %s239, 0
    %s242 = sadd.s32 %s241, 1
    %s243 = scalar_select %p240, %s241, %s242
    %p246 = pneg %p240
    %p247 = scmp.eq.s32.totalorder %s16, 1
    %p248 = por %p246, %p247
    %p249 = scmp.ne.s32.totalorder %s241, %s244
    %p250 = scmp.eq.s32.totalorder %s16, 0
    %p251 = por %p249, %p250
    %p252 = scmp.ne.s32.totalorder %s241, %s244
    %p253 = scmp.eq.s32.totalorder %s21, 1
    %p254 = por %p252, %p253
    %p255 = scmp.ne.s32.totalorder %s244, %s245
    %p256 = scmp.eq.s32.totalorder %s21, 0
    %p257 = por %p255, %p256
    %p258 = scmp.ne.s32.totalorder %s244, %s245
    %p259 = scmp.eq.s32.totalorder %s22, 1
    %p260 = por %p258, %p259
    %p262 = scmp.ne.s32.totalorder %s245, %s261
    %p263 = scmp.eq.s32.totalorder %s22, 0
    %p264 = por %p262, %p263
    %p265 = scmp.le.s32.totalorder 1, %s16
    %p266 = scmp.lt.s32.totalorder %s16, 3
    %p267 = pnand %p265, %p266
    %p268 = pneg %p267
    // Predicated region
    $region9: #{tpu_custom_call.1} parent=5 // pred_check
      _
    $region10: #{tpu_custom_call.1} parent=5 // pred_check_branch
      %270 = sbr.rel (%p267) target = $region12
    $region11: #{tpu_custom_call.1} parent=5 // pred_region
      %s271 = ssub.s32 %s16, 1
      // Predicated region
      $region13: #{tpu_custom_call.1} parent=11 // pred_check
        %p272 = pneg %p103
      $region14: #{tpu_custom_call.1} parent=11 // pred_check_branch
        %274 = sbr.rel (%p272) target = $region16
      $region15: #{tpu_custom_call.1} parent=11 // pred_region
        _
      $region16: #{tpu_custom_call.1} parent=11 // pred_fallthru
        _
      // Predicated region
      $region17: #{tpu_custom_call.1} parent=11 // pred_check
        %p275 = pneg %p124
      $region18: #{tpu_custom_call.1} parent=11 // pred_check_branch
        %277 = sbr.rel (%p275) target = $region20
      $region19: #{tpu_custom_call.1} parent=11 // pred_region
        _
      $region20: #{tpu_custom_call.1} parent=11 // pred_fallthru
        _
      // Predicated region
      $region21: #{tpu_custom_call.1} parent=11 // pred_check
        %p278 = pneg %p145
      $region22: #{tpu_custom_call.1} parent=11 // pred_check_branch
        %280 = sbr.rel (%p278) target = $region24
      $region23: #{tpu_custom_call.1} parent=11 // pred_region
        _
      $region24: #{tpu_custom_call.1} parent=11 // pred_fallthru
        _
      // Predicated region
      $region25: #{tpu_custom_call.1} parent=11 // pred_check
        %p281 = pneg %p166
      $region26: #{tpu_custom_call.1} parent=11 // pred_check_branch
        %283 = sbr.rel (%p281) target = $region28
      $region27: #{tpu_custom_call.1} parent=11 // pred_region
        _
      $region28: #{tpu_custom_call.1} parent=11 // pred_fallthru
        _
      // Predicated region
      $region29: #{tpu_custom_call.1} parent=11 // pred_check
        %p284 = pneg %p187
      $region30: #{tpu_custom_call.1} parent=11 // pred_check_branch
        %286 = sbr.rel (%p284) target = $region32
      $region31: #{tpu_custom_call.1} parent=11 // pred_region
        _
      $region32: #{tpu_custom_call.1} parent=11 // pred_fallthru
        _
      // Predicated region
      $region33: #{tpu_custom_call.1} parent=11 // pred_check
        %p287 = pneg %p208
      $region34: #{tpu_custom_call.1} parent=11 // pred_check_branch
        %289 = sbr.rel (%p287) target = $region36
      $region35: #{tpu_custom_call.1} parent=11 // pred_region
        _
      $region36: #{tpu_custom_call.1} parent=11 // pred_fallthru
        _
      // Predicated region
      $region37: #{tpu_custom_call.1} parent=11 // pred_check
        %p290 = pneg %p229
      $region38: #{tpu_custom_call.1} parent=11 // pred_check_branch
        %292 = sbr.rel (%p290) target = $region40
      $region39: #{tpu_custom_call.1} parent=11 // pred_region
        _
      $region40: #{tpu_custom_call.1} parent=11 // pred_fallthru
        _
    $region12: #{tpu_custom_call.1} parent=5 // pred_fallthru
      _
    %p293 = scmp.lt.s32.totalorder %s16, 2
    // Predicated region
    $region41: #{tpu_custom_call.1} parent=5 // pred_check
      %p294 = pneg %p293
    $region42: #{tpu_custom_call.1} parent=5 // pred_check_branch
      %296 = sbr.rel (%p294) target = $region44
    $region43: #{tpu_custom_call.1} parent=5 // pred_region
      // Predicated region
      $region45: #{tpu_custom_call.1} parent=43 // pred_check
        %p297 = pneg %p50
      $region46: #{tpu_custom_call.1} parent=43 // pred_check_branch
        %299 = sbr.rel (%p297) target = $region48
      $region47: #{tpu_custom_call.1} parent=43 // pred_region
        %s300 = smul.u32 8, %s24
        %p301 = scmp.lt.s32.totalorder %s23, 1
        %s302 = scalar_select %p301, %s23, 1
        %p303 = scmp.lt.s32.totalorder %s300, 7
        %s304 = scalar_select %p303, %s300, 7
        %s305 = smul.addr %s302, 8
        %s306 = sadd.s32 %s304, %s305
        %s307 = smul.addr %s306, 8
        %s308 = scalar_lea.vmem %s0, %s307
        %s309 = smul.u32 8, %s24
      $region48: #{tpu_custom_call.1} parent=43 // pred_fallthru
        _
      // Predicated region
      $region49: #{tpu_custom_call.1} parent=43 // pred_check
        %p310 = pneg %p76
      $region50: #{tpu_custom_call.1} parent=43 // pred_check_branch
        %312 = sbr.rel (%p310) target = $region52
      $region51: #{tpu_custom_call.1} parent=43 // pred_region
        %p313 = scmp.lt.s32.totalorder %s23, 1
        %s314 = scalar_select %p313, %s23, 1
        %s315 = smul.addr %s314, 8
        %s316 = smul.addr %s315, 8
        %s317 = scalar_lea.vmem %s1, %s316
      $region52: #{tpu_custom_call.1} parent=43 // pred_fallthru
        _
    $region44: #{tpu_custom_call.1} parent=5 // pred_fallthru
      _
    %p318 = scmp.le.s32.totalorder 1, %s16
    %p319 = scmp.lt.s32.totalorder %s16, 3
    %p320 = pnand %p318, %p319
    %p321 = pneg %p320
    // Predicated region
    $region53: #{tpu_custom_call.1} parent=5 // pred_check
      _
    $region54: #{tpu_custom_call.1} parent=5 // pred_check_branch
      %323 = sbr.rel (%p320) target = $region56
    $region55: #{tpu_custom_call.1} parent=5 // pred_region
      %s324 = ssub.s32 %s16, 1
      %s325 = smul.u32 8, %s26
      %p326 = scmp.lt.s32.totalorder %s25, 1
      %s327 = scalar_select %p326, %s25, 1
      %p328 = scmp.lt.s32.totalorder %s325, 7
      %s329 = scalar_select %p328, %s325, 7
      %s330 = smul.addr %s327, 8
      %s331 = sadd.s32 %s329, %s330
      %s332 = smul.addr %s331, 8
      %s333 = scalar_lea.vmem %s0, %s332
      %p334 = pneg %p56
      %p335 = pneg %p53
      %p336 = scmp.lt.s32.totalorder %s25, 1
      %s337 = scalar_select %p336, %s25, 1
      %s338 = smul.addr %s337, 8
      %s339 = smul.addr %s338, 8
      %s340 = scalar_lea.vmem %s1, %s339
      %p341 = pneg %p82
      %p342 = pneg %p79
      %p343 = pneg %p103
      %p344 = pneg %p100
      %p345 = pneg %p124
      %p346 = pneg %p121
      %p347 = pneg %p145
      %p348 = pneg %p142
      %p349 = pneg %p166
      %p350 = pneg %p163
      %p351 = pneg %p187
      %p352 = pneg %p184
      %p353 = pneg %p208
      %p354 = pneg %p205
      %p355 = pneg %p229
      %p356 = pneg %p226
      %p357 = pneg %p257
      %p358 = pneg %p254
      %s359 = smul.u32 8, %s26
      %p360 = scmp.lt.s32.totalorder %s25, 1
      %s361 = scalar_select %p360, %s25, 1
      %p362 = scmp.lt.s32.totalorder %s359, 7
      %s363 = scalar_select %p362, %s359, 7
      %s364 = smul.addr %s361, 8
      %s365 = sadd.s32 %s363, %s364
      %s366 = smul.addr %s365, 8
      %s367 = scalar_lea.vmem %s9, %s366
      %s368 = smul.u32 8, %s26
      %p369 = scmp.lt.s32.totalorder %s25, 1
      %s370 = scalar_select %p369, %s25, 1
      %p371 = scmp.lt.s32.totalorder %s368, 7
      %s372 = scalar_select %p371, %s368, 7
      %s373 = smul.addr %s370, 8
      %s374 = sadd.s32 %s372, %s373
      %s375 = smul.addr %s374, 8
      %s376 = scalar_lea.vmem %s0, %s375
      %s377 = smul.u32 8, %s26
      %p378 = scmp.lt.s32.totalorder %s25, 1
      %s379 = scalar_select %p378, %s25, 1
      %s380 = smul.addr %s379, 8
      %s381 = smul.addr %s380, 8
      %s382 = scalar_lea.vmem %s1, %s381
      %s383 = smul.u32 8, %s26
      %p384 = scmp.lt.s32.totalorder %s25, 1
      %s385 = scalar_select %p384, %s25, 1
      %p386 = scmp.lt.s32.totalorder %s383, 7
      %s387 = scalar_select %p386, %s383, 7
      %s388 = smul.addr %s385, 8
      %s389 = sadd.s32 %s387, %s388
      %s390 = smul.addr %s389, 8
      %s391 = scalar_lea.vmem %s9, %s390
      %s392 = smul.u32 8, %s26
      %v393 = vld [vmem:[%s376] sm:$0xff]
      %v394 = vld [vmem:[%s376 + $0x8] sm:$0xff]
      %v395 = vld [vmem:[%s376 + $0x10] sm:$0xff]
      %v396 = vld [vmem:[%s376 + $0x18] sm:$0xff]
      %v397 = vld [vmem:[%s376 + $0x20] sm:$0xff]
      %v398 = vld [vmem:[%s376 + $0x28] sm:$0xff]
      %v399 = vld [vmem:[%s376 + $0x30] sm:$0xff]
      %v400 = vld [vmem:[%s376 + $0x38] sm:$0xff]
      %v401 = vld [vmem:[%s382] sm:$0xff]
      %v402 = vld [vmem:[%s382 + $0x8] sm:$0xff]
      %v403 = vld [vmem:[%s382 + $0x10] sm:$0xff]
      %v404 = vld [vmem:[%s382 + $0x18] sm:$0xff]
      %v405 = vld [vmem:[%s382 + $0x20] sm:$0xff]
      %v406 = vld [vmem:[%s382 + $0x28] sm:$0xff]
      %v407 = vld [vmem:[%s382 + $0x30] sm:$0xff]
      %v408 = vld [vmem:[%s382 + $0x38] sm:$0xff]
      %s409 = sld [smem:[#allocation2]]
      %v410 = vld [vmem:[%s2] sm:$0xff]
      %v411 = vld [vmem:[%s2 + $0x8] sm:$0xff]
      %v412 = vld [vmem:[%s2 + $0x10] sm:$0xff]
      %v413 = vld [vmem:[%s2 + $0x18] sm:$0xff]
      %v414 = vld [vmem:[%s3] sm:$0x1]
      %v416 = vlaneseq
      %v417 = vshrl.u32 %v416, 7
      %v418 = vsub.s32 0, %v417
      %v419 = vrot.slane %v414, %v418
      %vm421 = vcmask 261120
      %v423 = vsel %vm421, %v393, 0
      %v426 = vsel %vm421, %v394, 0
      %v429 = vsel %vm421, %v395, 0
      %v432 = vsel %vm421, %v396, 0
      %v435 = vsel %vm421, %v397, 0
      %v438 = vsel %vm421, %v398, 0
      %v441 = vsel %vm421, %v399, 0
      %v444 = vsel %vm421, %v400, 0
      %446 = vmatprep.subr.mxu0 0.0
      %447 = vmatpush1.msra.mxu0 %v410
      %448 = vmatprep.subr.mxu0 0.0
      %449 = vmatpush1.msra.mxu0 %v411
      %450 = vmatprep.subr.mxu0 0.0
      %451 = vmatpush1.msra.mxu0 %v412
      %452 = vmatprep.subr.mxu0 0.0
      %453 = vmatpush1.msra.mxu0 %v413
      %454 = vmatprep.subr.mxu0 0.0
      %455 = vmatpush1.msra.mxu0 0.0
      %456 = vmatprep.subr.mxu0 0.0
      %457 = vmatpush1.msra.mxu0 0.0
      %458 = vmatprep.subr.mxu0 0.0
      %459 = vmatpush1.msra.mxu0 0.0
      %460 = vmatprep.subr.mxu0 0.0
      %461 = vmatpush1.msra.mxu0 0.0
      %462 = vmatprep.subr.mxu0 0.0
      %463 = vmatpush1.msra.mxu0 0.0
      %464 = vmatprep.subr.mxu0 0.0
      %465 = vmatpush1.msra.mxu0 0.0
      %466 = vmatprep.subr.mxu0 0.0
      %467 = vmatpush1.msra.mxu0 0.0
      %468 = vmatprep.subr.mxu0 0.0
      %469 = vmatpush1.msra.mxu0 0.0
      %470 = vmatprep.subr.mxu0 0.0
      %471 = vmatpush1.msra.mxu0 0.0
      %472 = vmatprep.subr.mxu0 0.0
      %473 = vmatpush1.msra.mxu0 0.0
      %474 = vmatprep.subr.mxu0 0.0
      %475 = vmatpush1.msra.mxu0 0.0
      %476 = vmatprep.subr.mxu0 0.0
      %477 = vmatpush1.msra.mxu0 0.0
      %478 = vmatprep.subr.mxu0 0.0
      %479 = vmatpush1.msra.mxu0 0.0
      %480 = vmatprep.subr.mxu0 0.0
      %481 = vmatpush1.msra.mxu0 0.0
      %482 = vmatprep.subr.mxu0 0.0
      %483 = vmatpush1.msra.mxu0 0.0
      %484 = vmatprep.subr.mxu0 0.0
      %485 = vmatpush1.msra.mxu0 0.0
      %486 = vmatprep.subr.mxu0 0.0
      %487 = vmatpush1.msra.mxu0 0.0
      %488 = vmatprep.subr.mxu0 0.0
      %489 = vmatpush1.msra.mxu0 0.0
      %490 = vmatprep.subr.mxu0 0.0
      %491 = vmatpush1.msra.mxu0 0.0
      %492 = vmatprep.subr.mxu0 0.0
      %493 = vmatpush1.msra.mxu0 0.0
      %494 = vmatprep.subr.mxu0 0.0
      %495 = vmatpush1.msra.mxu0 0.0
      %496 = vmatprep.subr.mxu0 0.0
      %497 = vmatpush1.msra.mxu0 0.0
      %498 = vmatprep.subr.mxu0 0.0
      %499 = vmatpush1.msra.mxu0 0.0
      %500 = vmatprep.subr.mxu0 0.0
      %501 = vmatpush1.msra.mxu0 0.0
      %502 = vmatprep.subr.mxu0 0.0
      %503 = vmatpush1.msra.mxu0 0.0
      %504 = vmatprep.subr.mxu0 0.0
      %505 = vmatpush1.msra.mxu0 0.0
      %506 = vmatprep.subr.mxu0 0.0
      %507 = vmatpush1.msra.mxu0 0.0
      %508 = vmatprep.subr.mxu0 0.0
      %509 = vmatpush1.msra.mxu0 0.0
      %510 = vmatprep.mubr.f32.mxu0 0.0
      %511 = vmatmul.mubr.f32.gmra.mrb[0].mxu0 %v423
      %v512 = vpop.f32.mrb[0].mxu0
      %v513 = vadd.f32 %v419, %v512
      %v514 = vpop.f32.mrb[0].mxu0
      %515 = vmatprep.mubr.f32.mxu0 0.0
      %516 = vmatmul.mubr.f32.gmra.mrb[0].mxu0 %v426
      %v517 = vpop.f32.mrb[0].mxu0
      %v518 = vadd.f32 %v419, %v517
      %v519 = vpop.f32.mrb[0].mxu0
      %520 = vmatprep.mubr.f32.mxu0 0.0
      %521 = vmatmul.mubr.f32.gmra.mrb[0].mxu0 %v429
      %v522 = vpop.f32.mrb[0].mxu0
      %v523 = vadd.f32 %v419, %v522
      %v524 = vpop.f32.mrb[0].mxu0
      %525 = vmatprep.mubr.f32.mxu0 0.0
      %526 = vmatmul.mubr.f32.gmra.mrb[0].mxu0 %v432
      %v527 = vpop.f32.mrb[0].mxu0
      %v528 = vadd.f32 %v419, %v527
      %v529 = vpop.f32.mrb[0].mxu0
      %530 = vmatprep.mubr.f32.mxu0 0.0
      %531 = vmatmul.mubr.f32.gmra.mrb[0].mxu0 %v435
      %v532 = vpop.f32.mrb[0].mxu0
      %v533 = vadd.f32 %v419, %v532
      %v534 = vpop.f32.mrb[0].mxu0
      %535 = vmatprep.mubr.f32.mxu0 0.0
      %536 = vmatmul.mubr.f32.gmra.mrb[0].mxu0 %v438
      %v537 = vpop.f32.mrb[0].mxu0
      %v538 = vadd.f32 %v419, %v537
      %v539 = vpop.f32.mrb[0].mxu0
      %540 = vmatprep.mubr.f32.mxu0 0.0
      %541 = vmatmul.mubr.f32.gmra.mrb[0].mxu0 %v441
      %v542 = vpop.f32.mrb[0].mxu0
      %v543 = vadd.f32 %v419, %v542
      %v544 = vpop.f32.mrb[0].mxu0
      %545 = vmatprep.mubr.f32.mxu0 0.0
      %546 = vmatmul.mubr.f32.gmra.mrb[0].mxu0 %v444
      %v547 = vpop.f32.mrb[0].mxu0
      %v548 = vadd.f32 %v419, %v547
      %v549 = vpop.f32.mrb[0].mxu0
      %550 = vdwg.mxu0
      %v551 = vld [vmem:[%s4] sm:$0xff]
      %v552 = vld [vmem:[%s4 + $0x8] sm:$0xff]
      %v553 = vld [vmem:[%s4 + $0x10] sm:$0xff]
      %v554 = vld [vmem:[%s4 + $0x18] sm:$0xff]
      %v555 = vld [vmem:[%s5] sm:$0x1]
      %v557 = vlaneseq
      %v558 = vshrl.u32 %v557, 7
      %v559 = vsub.s32 0, %v558
      %v560 = vrot.slane %v555, %v559
      %v563 = vsel %vm421, %v401, 0
      %v566 = vsel %vm421, %v402, 0
      %v569 = vsel %vm421, %v403, 0
      %v572 = vsel %vm421, %v404, 0
      %v575 = vsel %vm421, %v405, 0
      %v578 = vsel %vm421, %v406, 0
      %v581 = vsel %vm421, %v407, 0
      %v584 = vsel %vm421, %v408, 0
      %586 = vmatprep.subr.mxu0 0.0
      %587 = vmatpush1.msra.mxu0 %v551
      %588 = vmatprep.subr.mxu0 0.0
      %589 = vmatpush1.msra.mxu0 %v552
      %590 = vmatprep.subr.mxu0 0.0
      %591 = vmatpush1.msra.mxu0 %v553
      %592 = vmatprep.subr.mxu0 0.0
      %593 = vmatpush1.msra.mxu0 %v554
      %594 = vmatprep.subr.mxu0 0.0
      %595 = vmatpush1.msra.mxu0 0.0
      %596 = vmatprep.subr.mxu0 0.0
      %597 = vmatpush1.msra.mxu0 0.0
      %598 = vmatprep.subr.mxu0 0.0
      %599 = vmatpush1.msra.mxu0 0.0
      %600 = vmatprep.subr.mxu0 0.0
      %601 = vmatpush1.msra.mxu0 0.0
      %602 = vmatprep.subr.mxu0 0.0
      %603 = vmatpush1.msra.mxu0 0.0
      %604 = vmatprep.subr.mxu0 0.0
      %605 = vmatpush1.msra.mxu0 0.0
      %606 = vmatprep.subr.mxu0 0.0
      %607 = vmatpush1.msra.mxu0 0.0
      %608 = vmatprep.subr.mxu0 0.0
      %609 = vmatpush1.msra.mxu0 0.0
      %610 = vmatprep.subr.mxu0 0.0
      %611 = vmatpush1.msra.mxu0 0.0
      %612 = vmatprep.subr.mxu0 0.0
      %613 = vmatpush1.msra.mxu0 0.0
      %614 = vmatprep.subr.mxu0 0.0
      %615 = vmatpush1.msra.mxu0 0.0
      %616 = vmatprep.subr.mxu0 0.0
      %617 = vmatpush1.msra.mxu0 0.0
      %618 = vmatprep.subr.mxu0 0.0
      %619 = vmatpush1.msra.mxu0 0.0
      %620 = vmatprep.subr.mxu0 0.0
      %621 = vmatpush1.msra.mxu0 0.0
      %622 = vmatprep.subr.mxu0 0.0
      %623 = vmatpush1.msra.mxu0 0.0
      %624 = vmatprep.subr.mxu0 0.0
      %625 = vmatpush1.msra.mxu0 0.0
      %626 = vmatprep.subr.mxu0 0.0
      %627 = vmatpush1.msra.mxu0 0.0
      %628 = vmatprep.subr.mxu0 0.0
      %629 = vmatpush1.msra.mxu0 0.0
      %630 = vmatprep.subr.mxu0 0.0
      %631 = vmatpush1.msra.mxu0 0.0
      %632 = vmatprep.subr.mxu0 0.0
      %633 = vmatpush1.msra.mxu0 0.0
      %634 = vmatprep.subr.mxu0 0.0
      %635 = vmatpush1.msra.mxu0 0.0
      %636 = vmatprep.subr.mxu0 0.0
      %637 = vmatpush1.msra.mxu0 0.0
      %638 = vmatprep.subr.mxu0 0.0
      %639 = vmatpush1.msra.mxu0 0.0
      %640 = vmatprep.subr.mxu0 0.0
      %641 = vmatpush1.msra.mxu0 0.0
      %642 = vmatprep.subr.mxu0 0.0
      %643 = vmatpush1.msra.mxu0 0.0
      %644 = vmatprep.subr.mxu0 0.0
      %645 = vmatpush1.msra.mxu0 0.0
      %646 = vmatprep.subr.mxu0 0.0
      %647 = vmatpush1.msra.mxu0 0.0
      %648 = vmatprep.subr.mxu0 0.0
      %649 = vmatpush1.msra.mxu0 0.0
      %650 = vmatprep.mubr.f32.mxu0 0.0
      %651 = vmatmul.mubr.f32.gmra.mrb[0].mxu0 %v563
      %v652 = vpop.f32.mrb[0].mxu0
      %v653 = vadd.f32 %v560, %v652
      %v654 = vpop.f32.mrb[0].mxu0
      %655 = vmatprep.mubr.f32.mxu0 0.0
      %656 = vmatmul.mubr.f32.gmra.mrb[0].mxu0 %v566
      %v657 = vpop.f32.mrb[0].mxu0
      %v658 = vadd.f32 %v560, %v657
      %v659 = vpop.f32.mrb[0].mxu0
      %660 = vmatprep.mubr.f32.mxu0 0.0
      %661 = vmatmul.mubr.f32.gmra.mrb[0].mxu0 %v569
      %v662 = vpop.f32.mrb[0].mxu0
      %v663 = vadd.f32 %v560, %v662
      %v664 = vpop.f32.mrb[0].mxu0
      %665 = vmatprep.mubr.f32.mxu0 0.0
      %666 = vmatmul.mubr.f32.gmra.mrb[0].mxu0 %v572
      %v667 = vpop.f32.mrb[0].mxu0
      %v668 = vadd.f32 %v560, %v667
      %v669 = vpop.f32.mrb[0].mxu0
      %670 = vmatprep.mubr.f32.mxu0 0.0
      %671 = vmatmul.mubr.f32.gmra.mrb[0].mxu0 %v575
      %v672 = vpop.f32.mrb[0].mxu0
      %v673 = vadd.f32 %v560, %v672
      %v674 = vpop.f32.mrb[0].mxu0
      %675 = vmatprep.mubr.f32.mxu0 0.0
      %676 = vmatmul.mubr.f32.gmra.mrb[0].mxu0 %v578
      %v677 = vpop.f32.mrb[0].mxu0
      %v678 = vadd.f32 %v560, %v677
      %v679 = vpop.f32.mrb[0].mxu0
      %680 = vmatprep.mubr.f32.mxu0 0.0
      %681 = vmatmul.mubr.f32.gmra.mrb[0].mxu0 %v581
      %v682 = vpop.f32.mrb[0].mxu0
      %v683 = vadd.f32 %v560, %v682
      %v684 = vpop.f32.mrb[0].mxu0
      %685 = vmatprep.mubr.f32.mxu0 0.0
      %686 = vmatmul.mubr.f32.gmra.mrb[0].mxu0 %v584
      %v687 = vpop.f32.mrb[0].mxu0
      %v688 = vadd.f32 %v560, %v687
      %v689 = vpop.f32.mrb[0].mxu0
      %690 = vdwg.mxu0
      %v691 = vld [vmem:[%s6] sm:$0xff]
      %v692 = vld [vmem:[%s6 + $0x8] sm:$0xff]
      %v693 = vld [vmem:[%s6 + $0x10] sm:$0xff]
      %v694 = vld [vmem:[%s6 + $0x18] sm:$0xff]
      %v695 = vld [vmem:[%s7] sm:$0x1]
      %v697 = vlaneseq
      %v698 = vshrl.u32 %v697, 7
      %v699 = vsub.s32 0, %v698
      %v700 = vrot.slane %v695, %v699
      %702 = vmatprep.subr.mxu0 0.0
      %703 = vmatpush1.msra.mxu0 %v691
      %704 = vmatprep.subr.mxu0 0.0
      %705 = vmatpush1.msra.mxu0 %v692
      %706 = vmatprep.subr.mxu0 0.0
      %707 = vmatpush1.msra.mxu0 %v693
      %708 = vmatprep.subr.mxu0 0.0
      %709 = vmatpush1.msra.mxu0 %v694
      %710 = vmatprep.subr.mxu0 0.0
      %711 = vmatpush1.msra.mxu0 0.0
      %712 = vmatprep.subr.mxu0 0.0
      %713 = vmatpush1.msra.mxu0 0.0
      %714 = vmatprep.subr.mxu0 0.0
      %715 = vmatpush1.msra.mxu0 0.0
      %716 = vmatprep.subr.mxu0 0.0
      %717 = vmatpush1.msra.mxu0 0.0
      %718 = vmatprep.subr.mxu0 0.0
      %719 = vmatpush1.msra.mxu0 0.0
      %720 = vmatprep.subr.mxu0 0.0
      %721 = vmatpush1.msra.mxu0 0.0
      %722 = vmatprep.subr.mxu0 0.0
      %723 = vmatpush1.msra.mxu0 0.0
      %724 = vmatprep.subr.mxu0 0.0
      %725 = vmatpush1.msra.mxu0 0.0
      %726 = vmatprep.subr.mxu0 0.0
      %727 = vmatpush1.msra.mxu0 0.0
      %728 = vmatprep.subr.mxu0 0.0
      %729 = vmatpush1.msra.mxu0 0.0
      %730 = vmatprep.subr.mxu0 0.0
      %731 = vmatpush1.msra.mxu0 0.0
      %732 = vmatprep.subr.mxu0 0.0
      %733 = vmatpush1.msra.mxu0 0.0
      %734 = vmatprep.subr.mxu0 0.0
      %735 = vmatpush1.msra.mxu0 0.0
      %736 = vmatprep.subr.mxu0 0.0
      %737 = vmatpush1.msra.mxu0 0.0
      %738 = vmatprep.subr.mxu0 0.0
      %739 = vmatpush1.msra.mxu0 0.0
      %740 = vmatprep.subr.mxu0 0.0
      %741 = vmatpush1.msra.mxu0 0.0
      %742 = vmatprep.subr.mxu0 0.0
      %743 = vmatpush1.msra.mxu0 0.0
      %744 = vmatprep.subr.mxu0 0.0
      %745 = vmatpush1.msra.mxu0 0.0
      %746 = vmatprep.subr.mxu0 0.0
      %747 = vmatpush1.msra.mxu0 0.0
      %748 = vmatprep.subr.mxu0 0.0
      %749 = vmatpush1.msra.mxu0 0.0
      %750 = vmatprep.subr.mxu0 0.0
      %751 = vmatpush1.msra.mxu0 0.0
      %752 = vmatprep.subr.mxu0 0.0
      %753 = vmatpush1.msra.mxu0 0.0
      %754 = vmatprep.subr.mxu0 0.0
      %755 = vmatpush1.msra.mxu0 0.0
      %756 = vmatprep.subr.mxu0 0.0
      %757 = vmatpush1.msra.mxu0 0.0
      %758 = vmatprep.subr.mxu0 0.0
      %759 = vmatpush1.msra.mxu0 0.0
      %760 = vmatprep.subr.mxu0 0.0
      %761 = vmatpush1.msra.mxu0 0.0
      %762 = vmatprep.subr.mxu0 0.0
      %763 = vmatpush1.msra.mxu0 0.0
      %764 = vmatprep.subr.mxu0 0.0
      %765 = vmatpush1.msra.mxu0 0.0
      %766 = vmatprep.mubr.f32.mxu0 0.0
      %767 = vmatmul.mubr.f32.gmra.mrb[0].mxu0 %v563
      %v768 = vpop.f32.mrb[0].mxu0
      %v769 = vadd.f32 %v700, %v768
      %v770 = vpop.f32.mrb[0].mxu0
      %771 = vmatprep.mubr.f32.mxu0 0.0
      %772 = vmatmul.mubr.f32.gmra.mrb[0].mxu0 %v566
      %v773 = vpop.f32.mrb[0].mxu0
      %v774 = vadd.f32 %v700, %v773
      %v775 = vpop.f32.mrb[0].mxu0
      %776 = vmatprep.mubr.f32.mxu0 0.0
      %777 = vmatmul.mubr.f32.gmra.mrb[0].mxu0 %v569
      %v778 = vpop.f32.mrb[0].mxu0
      %v779 = vadd.f32 %v700, %v778
      %v780 = vpop.f32.mrb[0].mxu0
      %781 = vmatprep.mubr.f32.mxu0 0.0
      %782 = vmatmul.mubr.f32.gmra.mrb[0].mxu0 %v572
      %v783 = vpop.f32.mrb[0].mxu0
      %v784 = vadd.f32 %v700, %v783
      %v785 = vpop.f32.mrb[0].mxu0
      %786 = vmatprep.mubr.f32.mxu0 0.0
      %787 = vmatmul.mubr.f32.gmra.mrb[0].mxu0 %v575
      %v788 = vpop.f32.mrb[0].mxu0
      %v789 = vadd.f32 %v700, %v788
      %v790 = vpop.f32.mrb[0].mxu0
      %791 = vmatprep.mubr.f32.mxu0 0.0
      %792 = vmatmul.mubr.f32.gmra.mrb[0].mxu0 %v578
      %v793 = vpop.f32.mrb[0].mxu0
      %v794 = vadd.f32 %v700, %v793
      %v795 = vpop.f32.mrb[0].mxu0
      %796 = vmatprep.mubr.f32.mxu0 0.0
      %797 = vmatmul.mubr.f32.gmra.mrb[0].mxu0 %v581
      %v798 = vpop.f32.mrb[0].mxu0
      %v799 = vadd.f32 %v700, %v798
      %v800 = vpop.f32.mrb[0].mxu0
      %801 = vmatprep.mubr.f32.mxu0 0.0
      %802 = vmatmul.mubr.f32.gmra.mrb[0].mxu0 %v584
      %v803 = vpop.f32.mrb[0].mxu0
      %v804 = vadd.f32 %v700, %v803
      %v805 = vpop.f32.mrb[0].mxu0
      %806 = vdwg.mxu0
      %vm807 = vcmask 31744
      %v809 = vsel %vm807, %v513, 0
      %v812 = vsel %vm807, %v518, 0
      %v815 = vsel %vm807, %v523, 0
      %v818 = vsel %vm807, %v528, 0
      %v821 = vsel %vm807, %v533, 0
      %v824 = vsel %vm807, %v538, 0
      %v827 = vsel %vm807, %v543, 0
      %v830 = vsel %vm807, %v548, 0
      %v833 = vsel %vm807, %v653, 0
      %v836 = vsel %vm807, %v658, 0
      %v839 = vsel %vm807, %v663, 0
      %v842 = vsel %vm807, %v668, 0
      %v845 = vsel %vm807, %v673, 0
      %v848 = vsel %vm807, %v678, 0
      %v851 = vsel %vm807, %v683, 0
      %v854 = vsel %vm807, %v688, 0
      %856 = vmatprep.subr.mxu0 0.0
      %857 = vmatpush1.xpose.msra.mxu0 %v833
      %858 = vmatprep.subr.mxu0 0.0
      %859 = vmatpush1.xpose.msra.mxu0 %v836
      %860 = vmatprep.subr.mxu0 0.0
      %861 = vmatpush1.xpose.msra.mxu0 %v839
      %862 = vmatprep.subr.mxu0 0.0
      %863 = vmatpush1.xpose.msra.mxu0 %v842
      %864 = vmatprep.subr.mxu0 0.0
      %865 = vmatpush1.xpose.msra.mxu0 %v845
      %866 = vmatprep.subr.mxu0 0.0
      %867 = vmatpush1.xpose.msra.mxu0 %v848
      %868 = vmatprep.subr.mxu0 0.0
      %869 = vmatpush1.xpose.msra.mxu0 %v851
      %870 = vmatprep.subr.mxu0 0.0
      %871 = vmatpush1.xpose.msra.mxu0 %v854
      %872 = vmatprep.subr.mxu0 0.0
      %873 = vmatpush1.xpose.msra.mxu0 0.0
      %874 = vmatprep.subr.mxu0 0.0
      %875 = vmatpush1.xpose.msra.mxu0 0.0
      %876 = vmatprep.subr.mxu0 0.0
      %877 = vmatpush1.xpose.msra.mxu0 0.0
      %878 = vmatprep.subr.mxu0 0.0
      %879 = vmatpush1.xpose.msra.mxu0 0.0
      %880 = vmatprep.subr.mxu0 0.0
      %881 = vmatpush1.xpose.msra.mxu0 0.0
      %882 = vmatprep.subr.mxu0 0.0
      %883 = vmatpush1.xpose.msra.mxu0 0.0
      %884 = vmatprep.subr.mxu0 0.0
      %885 = vmatpush1.xpose.msra.mxu0 0.0
      %886 = vmatprep.subr.mxu0 0.0
      %887 = vmatpush1.xpose.msra.mxu0 0.0
      %888 = vmatprep.subr.mxu0 0.0
      %889 = vmatpush1.xpose.msra.mxu0 0.0
      %890 = vmatprep.subr.mxu0 0.0
      %891 = vmatpush1.xpose.msra.mxu0 0.0
      %892 = vmatprep.subr.mxu0 0.0
      %893 = vmatpush1.xpose.msra.mxu0 0.0
      %894 = vmatprep.subr.mxu0 0.0
      %895 = vmatpush1.xpose.msra.mxu0 0.0
      %896 = vmatprep.subr.mxu0 0.0
      %897 = vmatpush1.xpose.msra.mxu0 0.0
      %898 = vmatprep.subr.mxu0 0.0
      %899 = vmatpush1.xpose.msra.mxu0 0.0
      %900 = vmatprep.subr.mxu0 0.0
      %901 = vmatpush1.xpose.msra.mxu0 0.0
      %902 = vmatprep.subr.mxu0 0.0
      %903 = vmatpush1.xpose.msra.mxu0 0.0
      %904 = vmatprep.subr.mxu0 0.0
      %905 = vmatpush1.xpose.msra.mxu0 0.0
      %906 = vmatprep.subr.mxu0 0.0
      %907 = vmatpush1.xpose.msra.mxu0 0.0
      %908 = vmatprep.subr.mxu0 0.0
      %909 = vmatpush1.xpose.msra.mxu0 0.0
      %910 = vmatprep.subr.mxu0 0.0
      %911 = vmatpush1.xpose.msra.mxu0 0.0
      %912 = vmatprep.subr.mxu0 0.0
      %913 = vmatpush1.xpose.msra.mxu0 0.0
      %914 = vmatprep.subr.mxu0 0.0
      %915 = vmatpush1.xpose.msra.mxu0 0.0
      %916 = vmatprep.subr.mxu0 0.0
      %917 = vmatpush1.xpose.msra.mxu0 0.0
      %918 = vmatprep.subr.mxu0 0.0
      %919 = vmatpush1.xpose.msra.mxu0 0.0
      %920 = vmatprep.mubr.f32.mxu0 0.0
      %921 = vmatmul.mubr.f32.gmra.mrb[0].mxu0 %v809
      %v922 = vpop.f32.mrb[0].mxu0
      %v923 = vadd.f32 0.0, %v922
      %v924 = vpop.f32.mrb[0].mxu0
      %925 = vmatprep.mubr.f32.mxu0 0.0
      %926 = vmatmul.mubr.f32.gmra.mrb[0].mxu0 %v812
      %v927 = vpop.f32.mrb[0].mxu0
      %v928 = vadd.f32 0.0, %v927
      %v929 = vpop.f32.mrb[0].mxu0
      %930 = vmatprep.mubr.f32.mxu0 0.0
      %931 = vmatmul.mubr.f32.gmra.mrb[0].mxu0 %v815
      %v932 = vpop.f32.mrb[0].mxu0
      %v933 = vadd.f32 0.0, %v932
      %v934 = vpop.f32.mrb[0].mxu0
      %935 = vmatprep.mubr.f32.mxu0 0.0
      %936 = vmatmul.mubr.f32.gmra.mrb[0].mxu0 %v818
      %v937 = vpop.f32.mrb[0].mxu0
      %v938 = vadd.f32 0.0, %v937
      %v939 = vpop.f32.mrb[0].mxu0
      %940 = vmatprep.mubr.f32.mxu0 0.0
      %941 = vmatmul.mubr.f32.gmra.mrb[0].mxu0 %v821
      %v942 = vpop.f32.mrb[0].mxu0
      %v943 = vadd.f32 0.0, %v942
      %v944 = vpop.f32.mrb[0].mxu0
      %945 = vmatprep.mubr.f32.mxu0 0.0
      %946 = vmatmul.mubr.f32.gmra.mrb[0].mxu0 %v824
      %v947 = vpop.f32.mrb[0].mxu0
      %v948 = vadd.f32 0.0, %v947
      %v949 = vpop.f32.mrb[0].mxu0
      %950 = vmatprep.mubr.f32.mxu0 0.0
      %951 = vmatmul.mubr.f32.gmra.mrb[0].mxu0 %v827
      %v952 = vpop.f32.mrb[0].mxu0
      %v953 = vadd.f32 0.0, %v952
      %v954 = vpop.f32.mrb[0].mxu0
      %955 = vmatprep.mubr.f32.mxu0 0.0
      %956 = vmatmul.mubr.f32.gmra.mrb[0].mxu0 %v830
      %v957 = vpop.f32.mrb[0].mxu0
      %v958 = vadd.f32 0.0, %v957
      %v959 = vpop.f32.mrb[0].mxu0
      %960 = vdwg.mxu0
      %vm961 = vcmask 523264
      %v962 = vsel %vm961, %v923, -inf
      %963 = vmax.xlane.f32.xlu0 %v962
      %v964 = vpop.xlane.xlu0 %963
      %v965 = vsel %vm961, %v928, -inf
      %966 = vmax.xlane.f32.xlu0 %v965
      %v967 = vpop.xlane.xlu0 %966
      %v968 = vsel %vm961, %v933, -inf
      %969 = vmax.xlane.f32.xlu0 %v968
      %v970 = vpop.xlane.xlu0 %969
      %v971 = vsel %vm961, %v938, -inf
      %972 = vmax.xlane.f32.xlu0 %v971
      %v973 = vpop.xlane.xlu0 %972
      %v974 = vsel %vm961, %v943, -inf
      %975 = vmax.xlane.f32.xlu0 %v974
      %v976 = vpop.xlane.xlu0 %975
      %v977 = vsel %vm961, %v948, -inf
      %978 = vmax.xlane.f32.xlu0 %v977
      %v979 = vpop.xlane.xlu0 %978
      %v980 = vsel %vm961, %v953, -inf
      %981 = vmax.xlane.f32.xlu0 %v980
      %v982 = vpop.xlane.xlu0 %981
      %v983 = vsel %vm961, %v958, -inf
      %984 = vmax.xlane.f32.xlu0 %v983
      %v985 = vpop.xlane.xlu0 %984
      %v986 = vsub.f32 %v923, %v964
      %v987 = vsub.f32 %v928, %v967
      %v988 = vsub.f32 %v933, %v970
      %v989 = vsub.f32 %v938, %v973
      %v990 = vsub.f32 %v943, %v976
      %v991 = vsub.f32 %v948, %v979
      %v992 = vsub.f32 %v953, %v982
      %v993 = vsub.f32 %v958, %v985
      %v994 = vmul.f32 %v986, 1.442695
      %v995 = vpow.pop %v994
      %v996 = vmul.f32 %v987, 1.442695
      %v997 = vpow.pop %v996
      %v998 = vmul.f32 %v988, 1.442695
      %v999 = vpow.pop %v998
      %v1000 = vmul.f32 %v989, 1.442695
      %v1001 = vpow.pop %v1000
      %v1002 = vmul.f32 %v990, 1.442695
      %v1003 = vpow.pop %v1002
      %v1004 = vmul.f32 %v991, 1.442695
      %v1005 = vpow.pop %v1004
      %v1006 = vmul.f32 %v992, 1.442695
      %v1007 = vpow.pop %v1006
      %v1008 = vmul.f32 %v993, 1.442695
      %v1009 = vpow.pop %v1008
      %v1010 = vsel %vm961, %v995, 0.0
      %1011 = vadd.xlane.f32.xlu0 %v1010
      %v1012 = vpop.xlane.xlu0 %1011
      %v1013 = vsel %vm961, %v997, 0.0
      %1014 = vadd.xlane.f32.xlu0 %v1013
      %v1015 = vpop.xlane.xlu0 %1014
      %v1016 = vsel %vm961, %v999, 0.0
      %1017 = vadd.xlane.f32.xlu0 %v1016
      %v1018 = vpop.xlane.xlu0 %1017
      %v1019 = vsel %vm961, %v1001, 0.0
      %1020 = vadd.xlane.f32.xlu0 %v1019
      %v1021 = vpop.xlane.xlu0 %1020
      %v1022 = vsel %vm961, %v1003, 0.0
      %1023 = vadd.xlane.f32.xlu0 %v1022
      %v1024 = vpop.xlane.xlu0 %1023
      %v1025 = vsel %vm961, %v1005, 0.0
      %1026 = vadd.xlane.f32.xlu0 %v1025
      %v1027 = vpop.xlane.xlu0 %1026
      %v1028 = vsel %vm961, %v1007, 0.0
      %1029 = vadd.xlane.f32.xlu0 %v1028
      %v1030 = vpop.xlane.xlu0 %1029
      %v1031 = vsel %vm961, %v1009, 0.0
      %1032 = vadd.xlane.f32.xlu0 %v1031
      %v1033 = vpop.xlane.xlu0 %1032
      %v1034 = vrcp.pop %v1012
      %v1035 = vrcp.pop %v1015
      %v1036 = vrcp.pop %v1018
      %v1037 = vrcp.pop %v1021
      %v1038 = vrcp.pop %v1024
      %v1039 = vrcp.pop %v1027
      %v1040 = vrcp.pop %v1030
      %v1041 = vrcp.pop %v1033
      %v1042 = vmul.f32 %v995, %v1034
      %v1043 = vmul.f32 %v997, %v1035
      %v1044 = vmul.f32 %v999, %v1036
      %v1045 = vmul.f32 %v1001, %v1037
      %v1046 = vmul.f32 %v1003, %v1038
      %v1047 = vmul.f32 %v1005, %v1039
      %v1048 = vmul.f32 %v1007, %v1040
      %v1049 = vmul.f32 %v1009, %v1041
      %v1051 = vsel %vm961, %v1042, 0
      %v1054 = vsel %vm961, %v1043, 0
      %v1057 = vsel %vm961, %v1044, 0
      %v1060 = vsel %vm961, %v1045, 0
      %v1063 = vsel %vm961, %v1046, 0
      %v1066 = vsel %vm961, %v1047, 0
      %v1069 = vsel %vm961, %v1048, 0
      %v1072 = vsel %vm961, %v1049, 0
      %1074 = vmatprep.subr.mxu0 0.0
      %1075 = vmatpush1.msra.mxu0 %v769
      %1076 = vmatprep.subr.mxu0 0.0
      %1077 = vmatpush1.msra.mxu0 %v774
      %1078 = vmatprep.subr.mxu0 0.0
      %1079 = vmatpush1.msra.mxu0 %v779
      %1080 = vmatprep.subr.mxu0 0.0
      %1081 = vmatpush1.msra.mxu0 %v784
      %1082 = vmatprep.subr.mxu0 0.0
      %1083 = vmatpush1.msra.mxu0 %v789
      %1084 = vmatprep.subr.mxu0 0.0
      %1085 = vmatpush1.msra.mxu0 %v794
      %1086 = vmatprep.subr.mxu0 0.0
      %1087 = vmatpush1.msra.mxu0 %v799
      %1088 = vmatprep.subr.mxu0 0.0
      %1089 = vmatpush1.msra.mxu0 %v804
      %1090 = vmatprep.subr.mxu0 0.0
      %1091 = vmatpush1.msra.mxu0 0.0
      %1092 = vmatprep.subr.mxu0 0.0
      %1093 = vmatpush1.msra.mxu0 0.0
      %1094 = vmatprep.subr.mxu0 0.0
      %1095 = vmatpush1.msra.mxu0 0.0
      %1096 = vmatprep.subr.mxu0 0.0
      %1097 = vmatpush1.msra.mxu0 0.0
      %1098 = vmatprep.subr.mxu0 0.0
      %1099 = vmatpush1.msra.mxu0 0.0
      %1100 = vmatprep.subr.mxu0 0.0
      %1101 = vmatpush1.msra.mxu0 0.0
      %1102 = vmatprep.subr.mxu0 0.0
      %1103 = vmatpush1.msra.mxu0 0.0
      %1104 = vmatprep.subr.mxu0 0.0
      %1105 = vmatpush1.msra.mxu0 0.0
      %1106 = vmatprep.subr.mxu0 0.0
      %1107 = vmatpush1.msra.mxu0 0.0
      %1108 = vmatprep.subr.mxu0 0.0
      %1109 = vmatpush1.msra.mxu0 0.0
      %1110 = vmatprep.subr.mxu0 0.0
      %1111 = vmatpush1.msra.mxu0 0.0
      %1112 = vmatprep.subr.mxu0 0.0
      %1113 = vmatpush1.msra.mxu0 0.0
      %1114 = vmatprep.subr.mxu0 0.0
      %1115 = vmatpush1.msra.mxu0 0.0
      %1116 = vmatprep.subr.mxu0 0.0
      %1117 = vmatpush1.msra.mxu0 0.0
      %1118 = vmatprep.subr.mxu0 0.0
      %1119 = vmatpush1.msra.mxu0 0.0
      %1120 = vmatprep.subr.mxu0 0.0
      %1121 = vmatpush1.msra.mxu0 0.0
      %1122 = vmatprep.subr.mxu0 0.0
      %1123 = vmatpush1.msra.mxu0 0.0
      %1124 = vmatprep.subr.mxu0 0.0
      %1125 = vmatpush1.msra.mxu0 0.0
      %1126 = vmatprep.subr.mxu0 0.0
      %1127 = vmatpush1.msra.mxu0 0.0
      %1128 = vmatprep.subr.mxu0 0.0
      %1129 = vmatpush1.msra.mxu0 0.0
      %1130 = vmatprep.subr.mxu0 0.0
      %1131 = vmatpush1.msra.mxu0 0.0
      %1132 = vmatprep.subr.mxu0 0.0
      %1133 = vmatpush1.msra.mxu0 0.0
      %1134 = vmatprep.subr.mxu0 0.0
      %1135 = vmatpush1.msra.mxu0 0.0
      %1136 = vmatprep.subr.mxu0 0.0
      %1137 = vmatpush1.msra.mxu0 0.0
      %1138 = vmatprep.mubr.f32.mxu0 0.0
      %1139 = vmatmul.mubr.f32.gmra.mrb[0].mxu0 %v1051
      %v1140 = vpop.f32.mrb[0].mxu0
      %v1141 = vadd.f32 0.0, %v1140
      %v1142 = vpop.f32.mrb[0].mxu0
      %1143 = vmatprep.mubr.f32.mxu0 0.0
      %1144 = vmatmul.mubr.f32.gmra.mrb[0].mxu0 %v1054
      %v1145 = vpop.f32.mrb[0].mxu0
      %v1146 = vadd.f32 0.0, %v1145
      %v1147 = vpop.f32.mrb[0].mxu0
      %1148 = vmatprep.mubr.f32.mxu0 0.0
      %1149 = vmatmul.mubr.f32.gmra.mrb[0].mxu0 %v1057
      %v1150 = vpop.f32.mrb[0].mxu0
      %v1151 = vadd.f32 0.0, %v1150
      %v1152 = vpop.f32.mrb[0].mxu0
      %1153 = vmatprep.mubr.f32.mxu0 0.0
      %1154 = vmatmul.mubr.f32.gmra.mrb[0].mxu0 %v1060
      %v1155 = vpop.f32.mrb[0].mxu0
      %v1156 = vadd.f32 0.0, %v1155
      %v1157 = vpop.f32.mrb[0].mxu0
      %1158 = vmatprep.mubr.f32.mxu0 0.0
      %1159 = vmatmul.mubr.f32.gmra.mrb[0].mxu0 %v1063
      %v1160 = vpop.f32.mrb[0].mxu0
      %v1161 = vadd.f32 0.0, %v1160
      %v1162 = vpop.f32.mrb[0].mxu0
      %1163 = vmatprep.mubr.f32.mxu0 0.0
      %1164 = vmatmul.mubr.f32.gmra.mrb[0].mxu0 %v1066
      %v1165 = vpop.f32.mrb[0].mxu0
      %v1166 = vadd.f32 0.0, %v1165
      %v1167 = vpop.f32.mrb[0].mxu0
      %1168 = vmatprep.mubr.f32.mxu0 0.0
      %1169 = vmatmul.mubr.f32.gmra.mrb[0].mxu0 %v1069
      %v1170 = vpop.f32.mrb[0].mxu0
      %v1171 = vadd.f32 0.0, %v1170
      %v1172 = vpop.f32.mrb[0].mxu0
      %1173 = vmatprep.mubr.f32.mxu0 0.0
      %1174 = vmatmul.mubr.f32.gmra.mrb[0].mxu0 %v1072
      %v1175 = vpop.f32.mrb[0].mxu0
      %v1176 = vadd.f32 0.0, %v1175
      %v1177 = vpop.f32.mrb[0].mxu0
      %1178 = vdwg.mxu0
      %v1179 = vstv %s409
      %v1180 = vmul.f32 %v1179, %v1141
      %v1181 = vmul.f32 %v1179, %v1146
      %v1182 = vmul.f32 %v1179, %v1151
      %v1183 = vmul.f32 %v1179, %v1156
      %v1184 = vmul.f32 %v1179, %v1161
      %v1185 = vmul.f32 %v1179, %v1166
      %v1186 = vmul.f32 %v1179, %v1171
      %v1187 = vmul.f32 %v1179, %v1176
      %v1188 = vadd.f32 %v1180, %v393
      %v1189 = vadd.f32 %v1181, %v394
      %v1190 = vadd.f32 %v1182, %v395
      %v1191 = vadd.f32 %v1183, %v396
      %v1192 = vadd.f32 %v1184, %v397
      %v1193 = vadd.f32 %v1185, %v398
      %v1194 = vadd.f32 %v1186, %v399
      %v1195 = vadd.f32 %v1187, %v400
      %1196 = vst.msk [vmem:[%s391] sm:$0xff] %vm807, %v1188
      %1197 = vst.msk [vmem:[%s391 + $0x8] sm:$0xff] %vm807, %v1189
      %1198 = vst.msk [vmem:[%s391 + $0x10] sm:$0xff] %vm807, %v1190
      %1199 = vst.msk [vmem:[%s391 + $0x18] sm:$0xff] %vm807, %v1191
      %1200 = vst.msk [vmem:[%s391 + $0x20] sm:$0xff] %vm807, %v1192
      %1201 = vst.msk [vmem:[%s391 + $0x28] sm:$0xff] %vm807, %v1193
      %1202 = vst.msk [vmem:[%s391 + $0x30] sm:$0xff] %vm807, %v1194
      %1203 = vst.msk [vmem:[%s391 + $0x38] sm:$0xff] %vm807, %v1195
      %1204 = vrot.lane.b32.xlu0 %v513, 124
      %v1205 = vpop.permute.xlu0 %1204
      %1206 = vrot.lane.b32.xlu0 %v518, 124
      %v1207 = vpop.permute.xlu0 %1206
      %1208 = vrot.lane.b32.xlu0 %v523, 124
      %v1209 = vpop.permute.xlu0 %1208
      %1210 = vrot.lane.b32.xlu0 %v528, 124
      %v1211 = vpop.permute.xlu0 %1210
      %1212 = vrot.lane.b32.xlu0 %v533, 124
      %v1213 = vpop.permute.xlu0 %1212
      %1214 = vrot.lane.b32.xlu0 %v538, 124
      %v1215 = vpop.permute.xlu0 %1214
      %1216 = vrot.lane.b32.xlu0 %v543, 124
      %v1217 = vpop.permute.xlu0 %1216
      %1218 = vrot.lane.b32.xlu0 %v548, 124
      %v1219 = vpop.permute.xlu0 %1218
      %1220 = vrot.lane.b32.xlu0 %v653, 124
      %v1221 = vpop.permute.xlu0 %1220
      %1222 = vrot.lane.b32.xlu0 %v658, 124
      %v1223 = vpop.permute.xlu0 %1222
      %1224 = vrot.lane.b32.xlu0 %v663, 124
      %v1225 = vpop.permute.xlu0 %1224
      %1226 = vrot.lane.b32.xlu0 %v668, 124
      %v1227 = vpop.permute.xlu0 %1226
      %1228 = vrot.lane.b32.xlu0 %v673, 124
      %v1229 = vpop.permute.xlu0 %1228
      %1230 = vrot.lane.b32.xlu0 %v678, 124
      %v1231 = vpop.permute.xlu0 %1230
      %1232 = vrot.lane.b32.xlu0 %v683, 124
      %v1233 = vpop.permute.xlu0 %1232
      %1234 = vrot.lane.b32.xlu0 %v688, 124
      %v1235 = vpop.permute.xlu0 %1234
      %v1236 = vsel %vm807, %v1205, 0
      %v1238 = vsel %vm807, %v1207, 0
      %v1240 = vsel %vm807, %v1209, 0
      %v1242 = vsel %vm807, %v1211, 0
      %v1244 = vsel %vm807, %v1213, 0
      %v1246 = vsel %vm807, %v1215, 0
      %v1248 = vsel %vm807, %v1217, 0
      %v1250 = vsel %vm807, %v1219, 0
      %v1252 = vsel %vm807, %v1221, 0
      %v1254 = vsel %vm807, %v1223, 0
      %v1256 = vsel %vm807, %v1225, 0
      %v1258 = vsel %vm807, %v1227, 0
      %v1260 = vsel %vm807, %v1229, 0
      %v1262 = vsel %vm807, %v1231, 0
      %v1264 = vsel %vm807, %v1233, 0
      %v1266 = vsel %vm807, %v1235, 0
      %1268 = vmatprep.subr.mxu0 0.0
      %1269 = vmatpush1.xpose.msra.mxu0 %v1252
      %1270 = vmatprep.subr.mxu0 0.0
      %1271 = vmatpush1.xpose.msra.mxu0 %v1254
      %1272 = vmatprep.subr.mxu0 0.0
      %1273 = vmatpush1.xpose.msra.mxu0 %v1256
      %1274 = vmatprep.subr.mxu0 0.0
      %1275 = vmatpush1.xpose.msra.mxu0 %v1258
      %1276 = vmatprep.subr.mxu0 0.0
      %1277 = vmatpush1.xpose.msra.mxu0 %v1260
      %1278 = vmatprep.subr.mxu0 0.0
      %1279 = vmatpush1.xpose.msra.mxu0 %v1262
      %1280 = vmatprep.subr.mxu0 0.0
      %1281 = vmatpush1.xpose.msra.mxu0 %v1264
      %1282 = vmatprep.subr.mxu0 0.0
      %1283 = vmatpush1.xpose.msra.mxu0 %v1266
      %1284 = vmatprep.subr.mxu0 0.0
      %1285 = vmatpush1.xpose.msra.mxu0 0.0
      %1286 = vmatprep.subr.mxu0 0.0
      %1287 = vmatpush1.xpose.msra.mxu0 0.0
      %1288 = vmatprep.subr.mxu0 0.0
      %1289 = vmatpush1.xpose.msra.mxu0 0.0
      %1290 = vmatprep.subr.mxu0 0.0
      %1291 = vmatpush1.xpose.msra.mxu0 0.0
      %1292 = vmatprep.subr.mxu0 0.0
      %1293 = vmatpush1.xpose.msra.mxu0 0.0
      %1294 = vmatprep.subr.mxu0 0.0
      %1295 = vmatpush1.xpose.msra.mxu0 0.0
      %1296 = vmatprep.subr.mxu0 0.0
      %1297 = vmatpush1.xpose.msra.mxu0 0.0
      %1298 = vmatprep.subr.mxu0 0.0
      %1299 = vmatpush1.xpose.msra.mxu0 0.0
      %1300 = vmatprep.subr.mxu0 0.0
      %1301 = vmatpush1.xpose.msra.mxu0 0.0
      %1302 = vmatprep.subr.mxu0 0.0
      %1303 = vmatpush1.xpose.msra.mxu0 0.0
      %1304 = vmatprep.subr.mxu0 0.0
      %1305 = vmatpush1.xpose.msra.mxu0 0.0
      %1306 = vmatprep.subr.mxu0 0.0
      %1307 = vmatpush1.xpose.msra.mxu0 0.0
      %1308 = vmatprep.subr.mxu0 0.0
      %1309 = vmatpush1.xpose.msra.mxu0 0.0
      %1310 = vmatprep.subr.mxu0 0.0
      %1311 = vmatpush1.xpose.msra.mxu0 0.0
      %1312 = vmatprep.subr.mxu0 0.0
      %1313 = vmatpush1.xpose.msra.mxu0 0.0
      %1314 = vmatprep.subr.mxu0 0.0
      %1315 = vmatpush1.xpose.msra.mxu0 0.0
      %1316 = vmatprep.subr.mxu0 0.0
      %1317 = vmatpush1.xpose.msra.mxu0 0.0
      %1318 = vmatprep.subr.mxu0 0.0
      %1319 = vmatpush1.xpose.msra.mxu0 0.0
      %1320 = vmatprep.subr.mxu0 0.0
      %1321 = vmatpush1.xpose.msra.mxu0 0.0
      %1322 = vmatprep.subr.mxu0 0.0
      %1323 = vmatpush1.xpose.msra.mxu0 0.0
      %1324 = vmatprep.subr.mxu0 0.0
      %1325 = vmatpush1.xpose.msra.mxu0 0.0
      %1326 = vmatprep.subr.mxu0 0.0
      %1327 = vmatpush1.xpose.msra.mxu0 0.0
      %1328 = vmatprep.subr.mxu0 0.0
      %1329 = vmatpush1.xpose.msra.mxu0 0.0
      %1330 = vmatprep.subr.mxu0 0.0
      %1331 = vmatpush1.xpose.msra.mxu0 0.0
      %1332 = vmatprep.mubr.f32.mxu0 0.0
      %1333 = vmatmul.mubr.f32.gmra.mrb[0].mxu0 %v1236
      %v1334 = vpop.f32.mrb[0].mxu0
      %v1335 = vadd.f32 0.0, %v1334
      %v1336 = vpop.f32.mrb[0].mxu0
      %1337 = vmatprep.mubr.f32.mxu0 0.0
      %1338 = vmatmul.mubr.f32.gmra.mrb[0].mxu0 %v1238
      %v1339 = vpop.f32.mrb[0].mxu0
      %v1340 = vadd.f32 0.0, %v1339
      %v1341 = vpop.f32.mrb[0].mxu0
      %1342 = vmatprep.mubr.f32.mxu0 0.0
      %1343 = vmatmul.mubr.f32.gmra.mrb[0].mxu0 %v1240
      %v1344 = vpop.f32.mrb[0].mxu0
      %v1345 = vadd.f32 0.0, %v1344
      %v1346 = vpop.f32.mrb[0].mxu0
      %1347 = vmatprep.mubr.f32.mxu0 0.0
      %1348 = vmatmul.mubr.f32.gmra.mrb[0].mxu0 %v1242
      %v1349 = vpop.f32.mrb[0].mxu0
      %v1350 = vadd.f32 0.0, %v1349
      %v1351 = vpop.f32.mrb[0].mxu0
      %1352 = vmatprep.mubr.f32.mxu0 0.0
      %1353 = vmatmul.mubr.f32.gmra.mrb[0].mxu0 %v1244
      %v1354 = vpop.f32.mrb[0].mxu0
      %v1355 = vadd.f32 0.0, %v1354
      %v1356 = vpop.f32.mrb[0].mxu0
      %1357 = vmatprep.mubr.f32.mxu0 0.0
      %1358 = vmatmul.mubr.f32.gmra.mrb[0].mxu0 %v1246
      %v1359 = vpop.f32.mrb[0].mxu0
      %v1360 = vadd.f32 0.0, %v1359
      %v1361 = vpop.f32.mrb[0].mxu0
      %1362 = vmatprep.mubr.f32.mxu0 0.0
      %1363 = vmatmul.mubr.f32.gmra.mrb[0].mxu0 %v1248
      %v1364 = vpop.f32.mrb[0].mxu0
      %v1365 = vadd.f32 0.0, %v1364
      %v1366 = vpop.f32.mrb[0].mxu0
      %1367 = vmatprep.mubr.f32.mxu0 0.0
      %1368 = vmatmul.mubr.f32.gmra.mrb[0].mxu0 %v1250
      %v1369 = vpop.f32.mrb[0].mxu0
      %v1370 = vadd.f32 0.0, %v1369
      %v1371 = vpop.f32.mrb[0].mxu0
      %1372 = vdwg.mxu0
      %v1373 = vsel %vm961, %v1335, -inf
      %1374 = vmax.xlane.f32.xlu0 %v1373
      %v1375 = vpop.xlane.xlu0 %1374
      %v1376 = vsel %vm961, %v1340, -inf
      %1377 = vmax.xlane.f32.xlu0 %v1376
      %v1378 = vpop.xlane.xlu0 %1377
      %v1379 = vsel %vm961, %v1345, -inf
      %1380 = vmax.xlane.f32.xlu0 %v1379
      %v1381 = vpop.xlane.xlu0 %1380
      %v1382 = vsel %vm961, %v1350, -inf
      %1383 = vmax.xlane.f32.xlu0 %v1382
      %v1384 = vpop.xlane.xlu0 %1383
      %v1385 = vsel %vm961, %v1355, -inf
      %1386 = vmax.xlane.f32.xlu0 %v1385
      %v1387 = vpop.xlane.xlu0 %1386
      %v1388 = vsel %vm961, %v1360, -inf
      %1389 = vmax.xlane.f32.xlu0 %v1388
      %v1390 = vpop.xlane.xlu0 %1389
      %v1391 = vsel %vm961, %v1365, -inf
      %1392 = vmax.xlane.f32.xlu0 %v1391
      %v1393 = vpop.xlane.xlu0 %1392
      %v1394 = vsel %vm961, %v1370, -inf
      %1395 = vmax.xlane.f32.xlu0 %v1394
      %v1396 = vpop.xlane.xlu0 %1395
      %v1397 = vsub.f32 %v1335, %v1375
      %v1398 = vsub.f32 %v1340, %v1378
      %v1399 = vsub.f32 %v1345, %v1381
      %v1400 = vsub.f32 %v1350, %v1384
      %v1401 = vsub.f32 %v1355, %v1387
      %v1402 = vsub.f32 %v1360, %v1390
      %v1403 = vsub.f32 %v1365, %v1393
      %v1404 = vsub.f32 %v1370, %v1396
      %v1405 = vmul.f32 %v1397, 1.442695
      %v1406 = vpow.pop %v1405
      %v1407 = vmul.f32 %v1398, 1.442695
      %v1408 = vpow.pop %v1407
      %v1409 = vmul.f32 %v1399, 1.442695
      %v1410 = vpow.pop %v1409
      %v1411 = vmul.f32 %v1400, 1.442695
      %v1412 = vpow.pop %v1411
      %v1413 = vmul.f32 %v1401, 1.442695
      %v1414 = vpow.pop %v1413
      %v1415 = vmul.f32 %v1402, 1.442695
      %v1416 = vpow.pop %v1415
      %v1417 = vmul.f32 %v1403, 1.442695
      %v1418 = vpow.pop %v1417
      %v1419 = vmul.f32 %v1404, 1.442695
      %v1420 = vpow.pop %v1419
      %v1421 = vsel %vm961, %v1406, 0.0
      %1422 = vadd.xlane.f32.xlu0 %v1421
      %v1423 = vpop.xlane.xlu0 %1422
      %v1424 = vsel %vm961, %v1408, 0.0
      %1425 = vadd.xlane.f32.xlu0 %v1424
      %v1426 = vpop.xlane.xlu0 %1425
      %v1427 = vsel %vm961, %v1410, 0.0
      %1428 = vadd.xlane.f32.xlu0 %v1427
      %v1429 = vpop.xlane.xlu0 %1428
      %v1430 = vsel %vm961, %v1412, 0.0
      %1431 = vadd.xlane.f32.xlu0 %v1430
      %v1432 = vpop.xlane.xlu0 %1431
      %v1433 = vsel %vm961, %v1414, 0.0
      %1434 = vadd.xlane.f32.xlu0 %v1433
      %v1435 = vpop.xlane.xlu0 %1434
      %v1436 = vsel %vm961, %v1416, 0.0
      %1437 = vadd.xlane.f32.xlu0 %v1436
      %v1438 = vpop.xlane.xlu0 %1437
      %v1439 = vsel %vm961, %v1418, 0.0
      %1440 = vadd.xlane.f32.xlu0 %v1439
      %v1441 = vpop.xlane.xlu0 %1440
      %v1442 = vsel %vm961, %v1420, 0.0
      %1443 = vadd.xlane.f32.xlu0 %v1442
      %v1444 = vpop.xlane.xlu0 %1443
      %v1445 = vrcp.pop %v1423
      %v1446 = vrcp.pop %v1426
      %v1447 = vrcp.pop %v1429
      %v1448 = vrcp.pop %v1432
      %v1449 = vrcp.pop %v1435
      %v1450 = vrcp.pop %v1438
      %v1451 = vrcp.pop %v1441
      %v1452 = vrcp.pop %v1444
      %v1453 = vmul.f32 %v1406, %v1445
      %v1454 = vmul.f32 %v1408, %v1446
      %v1455 = vmul.f32 %v1410, %v1447
      %v1456 = vmul.f32 %v1412, %v1448
      %v1457 = vmul.f32 %v1414, %v1449
      %v1458 = vmul.f32 %v1416, %v1450
      %v1459 = vmul.f32 %v1418, %v1451
      %v1460 = vmul.f32 %v1420, %v1452
      %1469 = vrot.lane.b32.xlu0 %v769, 124
      %v1470 = vpop.permute.xlu0 %1469
      %1471 = vrot.lane.b32.xlu0 %v774, 124
      %v1472 = vpop.permute.xlu0 %1471
      %1473 = vrot.lane.b32.xlu0 %v779, 124
      %v1474 = vpop.permute.xlu0 %1473
      %1475 = vrot.lane.b32.xlu0 %v784, 124
      %v1476 = vpop.permute.xlu0 %1475
      %1477 = vrot.lane.b32.xlu0 %v789, 124
      %v1478 = vpop.permute.xlu0 %1477
      %1479 = vrot.lane.b32.xlu0 %v794, 124
      %v1480 = vpop.permute.xlu0 %1479
      %1481 = vrot.lane.b32.xlu0 %v799, 124
      %v1482 = vpop.permute.xlu0 %1481
      %1483 = vrot.lane.b32.xlu0 %v804, 124
      %v1484 = vpop.permute.xlu0 %1483
      %v1494 = vsel %vm961, %v1453, 0
      %v1497 = vsel %vm961, %v1454, 0
      %v1500 = vsel %vm961, %v1455, 0
      %v1503 = vsel %vm961, %v1456, 0
      %v1506 = vsel %vm961, %v1457, 0
      %v1509 = vsel %vm961, %v1458, 0
      %v1512 = vsel %vm961, %v1459, 0
      %v1515 = vsel %vm961, %v1460, 0
      %1517 = vmatprep.subr.mxu0 0.0
      %1518 = vmatpush1.msra.mxu0 %v1470
      %1519 = vmatprep.subr.mxu0 0.0
      %1520 = vmatpush1.msra.mxu0 %v1472
      %1521 = vmatprep.subr.mxu0 0.0
      %1522 = vmatpush1.msra.mxu0 %v1474
      %1523 = vmatprep.subr.mxu0 0.0
      %1524 = vmatpush1.msra.mxu0 %v1476
      %1525 = vmatprep.subr.mxu0 0.0
      %1526 = vmatpush1.msra.mxu0 %v1478
      %1527 = vmatprep.subr.mxu0 0.0
      %1528 = vmatpush1.msra.mxu0 %v1480
      %1529 = vmatprep.subr.mxu0 0.0
      %1530 = vmatpush1.msra.mxu0 %v1482
      %1531 = vmatprep.subr.mxu0 0.0
      %1532 = vmatpush1.msra.mxu0 %v1484
      %1533 = vmatprep.subr.mxu0 0.0
      %1534 = vmatpush1.msra.mxu0 0.0
      %1535 = vmatprep.subr.mxu0 0.0
      %1536 = vmatpush1.msra.mxu0 0.0
      %1537 = vmatprep.subr.mxu0 0.0
      %1538 = vmatpush1.msra.mxu0 0.0
      %1539 = vmatprep.subr.mxu0 0.0
      %1540 = vmatpush1.msra.mxu0 0.0
      %1541 = vmatprep.subr.mxu0 0.0
      %1542 = vmatpush1.msra.mxu0 0.0
      %1543 = vmatprep.subr.mxu0 0.0
      %1544 = vmatpush1.msra.mxu0 0.0
      %1545 = vmatprep.subr.mxu0 0.0
      %1546 = vmatpush1.msra.mxu0 0.0
      %1547 = vmatprep.subr.mxu0 0.0
      %1548 = vmatpush1.msra.mxu0 0.0
      %1549 = vmatprep.subr.mxu0 0.0
      %1550 = vmatpush1.msra.mxu0 0.0
      %1551 = vmatprep.subr.mxu0 0.0
      %1552 = vmatpush1.msra.mxu0 0.0
      %1553 = vmatprep.subr.mxu0 0.0
      %1554 = vmatpush1.msra.mxu0 0.0
      %1555 = vmatprep.subr.mxu0 0.0
      %1556 = vmatpush1.msra.mxu0 0.0
      %1557 = vmatprep.subr.mxu0 0.0
      %1558 = vmatpush1.msra.mxu0 0.0
      %1559 = vmatprep.subr.mxu0 0.0
      %1560 = vmatpush1.msra.mxu0 0.0
      %1561 = vmatprep.subr.mxu0 0.0
      %1562 = vmatpush1.msra.mxu0 0.0
      %1563 = vmatprep.subr.mxu0 0.0
      %1564 = vmatpush1.msra.mxu0 0.0
      %1565 = vmatprep.subr.mxu0 0.0
      %1566 = vmatpush1.msra.mxu0 0.0
      %1567 = vmatprep.subr.mxu0 0.0
      %1568 = vmatpush1.msra.mxu0 0.0
      %1569 = vmatprep.subr.mxu0 0.0
      %1570 = vmatpush1.msra.mxu0 0.0
      %1571 = vmatprep.subr.mxu0 0.0
      %1572 = vmatpush1.msra.mxu0 0.0
      %1573 = vmatprep.subr.mxu0 0.0
      %1574 = vmatpush1.msra.mxu0 0.0
      %1575 = vmatprep.subr.mxu0 0.0
      %1576 = vmatpush1.msra.mxu0 0.0
      %1577 = vmatprep.subr.mxu0 0.0
      %1578 = vmatpush1.msra.mxu0 0.0
      %1579 = vmatprep.subr.mxu0 0.0
      %1580 = vmatpush1.msra.mxu0 0.0
      %1581 = vmatprep.mubr.f32.mxu0 0.0
      %1582 = vmatmul.mubr.f32.gmra.mrb[0].mxu0 %v1494
      %v1583 = vpop.f32.mrb[0].mxu0
      %v1584 = vadd.f32 0.0, %v1583
      %v1585 = vpop.f32.mrb[0].mxu0
      %1586 = vmatprep.mubr.f32.mxu0 0.0
      %1587 = vmatmul.mubr.f32.gmra.mrb[0].mxu0 %v1497
      %v1588 = vpop.f32.mrb[0].mxu0
      %v1589 = vadd.f32 0.0, %v1588
      %v1590 = vpop.f32.mrb[0].mxu0
      %1591 = vmatprep.mubr.f32.mxu0 0.0
      %1592 = vmatmul.mubr.f32.gmra.mrb[0].mxu0 %v1500
      %v1593 = vpop.f32.mrb[0].mxu0
      %v1594 = vadd.f32 0.0, %v1593
      %v1595 = vpop.f32.mrb[0].mxu0
      %1596 = vmatprep.mubr.f32.mxu0 0.0
      %1597 = vmatmul.mubr.f32.gmra.mrb[0].mxu0 %v1503
      %v1598 = vpop.f32.mrb[0].mxu0
      %v1599 = vadd.f32 0.0, %v1598
      %v1600 = vpop.f32.mrb[0].mxu0
      %1601 = vmatprep.mubr.f32.mxu0 0.0
      %1602 = vmatmul.mubr.f32.gmra.mrb[0].mxu0 %v1506
      %v1603 = vpop.f32.mrb[0].mxu0
      %v1604 = vadd.f32 0.0, %v1603
      %v1605 = vpop.f32.mrb[0].mxu0
      %1606 = vmatprep.mubr.f32.mxu0 0.0
      %1607 = vmatmul.mubr.f32.gmra.mrb[0].mxu0 %v1509
      %v1608 = vpop.f32.mrb[0].mxu0
      %v1609 = vadd.f32 0.0, %v1608
      %v1610 = vpop.f32.mrb[0].mxu0
      %1611 = vmatprep.mubr.f32.mxu0 0.0
      %1612 = vmatmul.mubr.f32.gmra.mrb[0].mxu0 %v1512
      %v1613 = vpop.f32.mrb[0].mxu0
      %v1614 = vadd.f32 0.0, %v1613
      %v1615 = vpop.f32.mrb[0].mxu0
      %1616 = vmatprep.mubr.f32.mxu0 0.0
      %1617 = vmatmul.mubr.f32.gmra.mrb[0].mxu0 %v1515
      %v1618 = vpop.f32.mrb[0].mxu0
      %v1619 = vadd.f32 0.0, %v1618
      %v1620 = vpop.f32.mrb[0].mxu0
      %1621 = vdwg.mxu0
      %v1622 = vmul.f32 %v1179, %v1584
      %v1623 = vmul.f32 %v1179, %v1589
      %v1624 = vmul.f32 %v1179, %v1594
      %v1625 = vmul.f32 %v1179, %v1599
      %v1626 = vmul.f32 %v1179, %v1604
      %v1627 = vmul.f32 %v1179, %v1609
      %v1628 = vmul.f32 %v1179, %v1614
      %v1629 = vmul.f32 %v1179, %v1619
      %1630 = vrot.lane.b32.xlu0 %v393, 124
      %v1631 = vpop.permute.xlu0 %1630
      %1632 = vrot.lane.b32.xlu0 %v394, 124
      %v1633 = vpop.permute.xlu0 %1632
      %1634 = vrot.lane.b32.xlu0 %v395, 124
      %v1635 = vpop.permute.xlu0 %1634
      %1636 = vrot.lane.b32.xlu0 %v396, 124
      %v1637 = vpop.permute.xlu0 %1636
      %1638 = vrot.lane.b32.xlu0 %v397, 124
      %v1639 = vpop.permute.xlu0 %1638
      %1640 = vrot.lane.b32.xlu0 %v398, 124
      %v1641 = vpop.permute.xlu0 %1640
      %1642 = vrot.lane.b32.xlu0 %v399, 124
      %v1643 = vpop.permute.xlu0 %1642
      %1644 = vrot.lane.b32.xlu0 %v400, 124
      %v1645 = vpop.permute.xlu0 %1644
      %v1654 = vadd.f32 %v1622, %v1631
      %v1655 = vadd.f32 %v1623, %v1633
      %v1656 = vadd.f32 %v1624, %v1635
      %v1657 = vadd.f32 %v1625, %v1637
      %v1658 = vadd.f32 %v1626, %v1639
      %v1659 = vadd.f32 %v1627, %v1641
      %v1660 = vadd.f32 %v1628, %v1643
      %v1661 = vadd.f32 %v1629, %v1645
      %1670 = vrot.lane.b32.xlu0 %v1654, 4
      %v1671 = vpop.permute.xlu0 %1670
      %1672 = vrot.lane.b32.xlu0 %v1655, 4
      %v1673 = vpop.permute.xlu0 %1672
      %1674 = vrot.lane.b32.xlu0 %v1656, 4
      %v1675 = vpop.permute.xlu0 %1674
      %1676 = vrot.lane.b32.xlu0 %v1657, 4
      %v1677 = vpop.permute.xlu0 %1676
      %1678 = vrot.lane.b32.xlu0 %v1658, 4
      %v1679 = vpop.permute.xlu0 %1678
      %1680 = vrot.lane.b32.xlu0 %v1659, 4
      %v1681 = vpop.permute.xlu0 %1680
      %1682 = vrot.lane.b32.xlu0 %v1660, 4
      %v1683 = vpop.permute.xlu0 %1682
      %1684 = vrot.lane.b32.xlu0 %v1661, 4
      %v1685 = vpop.permute.xlu0 %1684
      %vm1694 = vcmask 64544
      %1695 = vst.msk [vmem:[%s391] sm:$0xff] %vm1694, %v1671
      %1696 = vst.msk [vmem:[%s391 + $0x8] sm:$0xff] %vm1694, %v1673
      %1697 = vst.msk [vmem:[%s391 + $0x10] sm:$0xff] %vm1694, %v1675
      %1698 = vst.msk [vmem:[%s391 + $0x18] sm:$0xff] %vm1694, %v1677
      %1699 = vst.msk [vmem:[%s391 + $0x20] sm:$0xff] %vm1694, %v1679
      %1700 = vst.msk [vmem:[%s391 + $0x28] sm:$0xff] %vm1694, %v1681
      %1701 = vst.msk [vmem:[%s391 + $0x30] sm:$0xff] %vm1694, %v1683
      %1702 = vst.msk [vmem:[%s391 + $0x38] sm:$0xff] %vm1694, %v1685
      %1703 = vrot.lane.b32.xlu0 %v513, 120
      %v1704 = vpop.permute.xlu0 %1703
      %1705 = vrot.lane.b32.xlu0 %v518, 120
      %v1706 = vpop.permute.xlu0 %1705
      %1707 = vrot.lane.b32.xlu0 %v523, 120
      %v1708 = vpop.permute.xlu0 %1707
      %1709 = vrot.lane.b32.xlu0 %v528, 120
      %v1710 = vpop.permute.xlu0 %1709
      %1711 = vrot.lane.b32.xlu0 %v533, 120
      %v1712 = vpop.permute.xlu0 %1711
      %1713 = vrot.lane.b32.xlu0 %v538, 120
      %v1714 = vpop.permute.xlu0 %1713
      %1715 = vrot.lane.b32.xlu0 %v543, 120
      %v1716 = vpop.permute.xlu0 %1715
      %1717 = vrot.lane.b32.xlu0 %v548, 120
      %v1718 = vpop.permute.xlu0 %1717
      %1719 = vrot.lane.b32.xlu0 %v653, 120
      %v1720 = vpop.permute.xlu0 %1719
      %1721 = vrot.lane.b32.xlu0 %v658, 120
      %v1722 = vpop.permute.xlu0 %1721
      %1723 = vrot.lane.b32.xlu0 %v663, 120
      %v1724 = vpop.permute.xlu0 %1723
      %1725 = vrot.lane.b32.xlu0 %v668, 120
      %v1726 = vpop.permute.xlu0 %1725
      %1727 = vrot.lane.b32.xlu0 %v673, 120
      %v1728 = vpop.permute.xlu0 %1727
      %1729 = vrot.lane.b32.xlu0 %v678, 120
      %v1730 = vpop.permute.xlu0 %1729
      %1731 = vrot.lane.b32.xlu0 %v683, 120
      %v1732 = vpop.permute.xlu0 %1731
      %1733 = vrot.lane.b32.xlu0 %v688, 120
      %v1734 = vpop.permute.xlu0 %1733
      %v1735 = vsel %vm807, %v1704, 0
      %v1737 = vsel %vm807, %v1706, 0
      %v1739 = vsel %vm807, %v1708, 0
      %v1741 = vsel %vm807, %v1710, 0
      %v1743 = vsel %vm807, %v1712, 0
      %v1745 = vsel %vm807, %v1714, 0
      %v1747 = vsel %vm807, %v1716, 0
      %v1749 = vsel %vm807, %v1718, 0
      %v1751 = vsel %vm807, %v1720, 0
      %v1753 = vsel %vm807, %v1722, 0
      %v1755 = vsel %vm807, %v1724, 0
      %v1757 = vsel %vm807, %v1726, 0
      %v1759 = vsel %vm807, %v1728, 0
      %v1761 = vsel %vm807, %v1730, 0
      %v1763 = vsel %vm807, %v1732, 0
      %v1765 = vsel %vm807, %v1734, 0
      %1767 = vmatprep.subr.mxu0 0.0
      %1768 = vmatpush1.xpose.msra.mxu0 %v1751
      %1769 = vmatprep.subr.mxu0 0.0
      %1770 = vmatpush1.xpose.msra.mxu0 %v1753
      %1771 = vmatprep.subr.mxu0 0.0
      %1772 = vmatpush1.xpose.msra.mxu0 %v1755
      %1773 = vmatprep.subr.mxu0 0.0
      %1774 = vmatpush1.xpose.msra.mxu0 %v1757
      %1775 = vmatprep.subr.mxu0 0.0
      %1776 = vmatpush1.xpose.msra.mxu0 %v1759
      %1777 = vmatprep.subr.mxu0 0.0
      %1778 = vmatpush1.xpose.msra.mxu0 %v1761
      %1779 = vmatprep.subr.mxu0 0.0
      %1780 = vmatpush1.xpose.msra.mxu0 %v1763
      %1781 = vmatprep.subr.mxu0 0.0
      %1782 = vmatpush1.xpose.msra.mxu0 %v1765
      %1783 = vmatprep.subr.mxu0 0.0
      %1784 = vmatpush1.xpose.msra.mxu0 0.0
      %1785 = vmatprep.subr.mxu0 0.0
      %1786 = vmatpush1.xpose.msra.mxu0 0.0
      %1787 = vmatprep.subr.mxu0 0.0
      %1788 = vmatpush1.xpose.msra.mxu0 0.0
      %1789 = vmatprep.subr.mxu0 0.0
      %1790 = vmatpush1.xpose.msra.mxu0 0.0
      %1791 = vmatprep.subr.mxu0 0.0
      %1792 = vmatpush1.xpose.msra.mxu0 0.0
      %1793 = vmatprep.subr.mxu0 0.0
      %1794 = vmatpush1.xpose.msra.mxu0 0.0
      %1795 = vmatprep.subr.mxu0 0.0
      %1796 = vmatpush1.xpose.msra.mxu0 0.0
      %1797 = vmatprep.subr.mxu0 0.0
      %1798 = vmatpush1.xpose.msra.mxu0 0.0
      %1799 = vmatprep.subr.mxu0 0.0
      %1800 = vmatpush1.xpose.msra.mxu0 0.0
      %1801 = vmatprep.subr.mxu0 0.0
      %1802 = vmatpush1.xpose.msra.mxu0 0.0
      %1803 = vmatprep.subr.mxu0 0.0
      %1804 = vmatpush1.xpose.msra.mxu0 0.0
      %1805 = vmatprep.subr.mxu0 0.0
      %1806 = vmatpush1.xpose.msra.mxu0 0.0
      %1807 = vmatprep.subr.mxu0 0.0
      %1808 = vmatpush1.xpose.msra.mxu0 0.0
      %1809 = vmatprep.subr.mxu0 0.0
      %1810 = vmatpush1.xpose.msra.mxu0 0.0
      %1811 = vmatprep.subr.mxu0 0.0
      %1812 = vmatpush1.xpose.msra.mxu0 0.0
      %1813 = vmatprep.subr.mxu0 0.0
      %1814 = vmatpush1.xpose.msra.mxu0 0.0
      %1815 = vmatprep.subr.mxu0 0.0
      %1816 = vmatpush1.xpose.msra.mxu0 0.0
      %1817 = vmatprep.subr.mxu0 0.0
      %1818 = vmatpush1.xpose.msra.mxu0 0.0
      %1819 = vmatprep.subr.mxu0 0.0
      %1820 = vmatpush1.xpose.msra.mxu0 0.0
      %1821 = vmatprep.subr.mxu0 0.0
      %1822 = vmatpush1.xpose.msra.mxu0 0.0
      %1823 = vmatprep.subr.mxu0 0.0
      %1824 = vmatpush1.xpose.msra.mxu0 0.0
      %1825 = vmatprep.subr.mxu0 0.0
      %1826 = vmatpush1.xpose.msra.mxu0 0.0
      %1827 = vmatprep.subr.mxu0 0.0
      %1828 = vmatpush1.xpose.msra.mxu0 0.0
      %1829 = vmatprep.subr.mxu0 0.0
      %1830 = vmatpush1.xpose.msra.mxu0 0.0
      %1831 = vmatprep.mubr.f32.mxu0 0.0
      %1832 = vmatmul.mubr.f32.gmra.mrb[0].mxu0 %v1735
      %v1833 = vpop.f32.mrb[0].mxu0
      %v1834 = vadd.f32 0.0, %v1833
      %v1835 = vpop.f32.mrb[0].mxu0
      %1836 = vmatprep.mubr.f32.mxu0 0.0
      %1837 = vmatmul.mubr.f32.gmra.mrb[0].mxu0 %v1737
      %v1838 = vpop.f32.mrb[0].mxu0
      %v1839 = vadd.f32 0.0, %v1838
      %v1840 = vpop.f32.mrb[0].mxu0
      %1841 = vmatprep.mubr.f32.mxu0 0.0
      %1842 = vmatmul.mubr.f32.gmra.mrb[0].mxu0 %v1739
      %v1843 = vpop.f32.mrb[0].mxu0
      %v1844 = vadd.f32 0.0, %v1843
      %v1845 = vpop.f32.mrb[0].mxu0
      %1846 = vmatprep.mubr.f32.mxu0 0.0
      %1847 = vmatmul.mubr.f32.gmra.mrb[0].mxu0 %v1741
      %v1848 = vpop.f32.mrb[0].mxu0
      %v1849 = vadd.f32 0.0, %v1848
      %v1850 = vpop.f32.mrb[0].mxu0
      %1851 = vmatprep.mubr.f32.mxu0 0.0
      %1852 = vmatmul.mubr.f32.gmra.mrb[0].mxu0 %v1743
      %v1853 = vpop.f32.mrb[0].mxu0
      %v1854 = vadd.f32 0.0, %v1853
      %v1855 = vpop.f32.mrb[0].mxu0
      %1856 = vmatprep.mubr.f32.mxu0 0.0
      %1857 = vmatmul.mubr.f32.gmra.mrb[0].mxu0 %v1745
      %v1858 = vpop.f32.mrb[0].mxu0
      %v1859 = vadd.f32 0.0, %v1858
      %v1860 = vpop.f32.mrb[0].mxu0
      %1861 = vmatprep.mubr.f32.mxu0 0.0
      %1862 = vmatmul.mubr.f32.gmra.mrb[0].mxu0 %v1747
      %v1863 = vpop.f32.mrb[0].mxu0
      %v1864 = vadd.f32 0.0, %v1863
      %v1865 = vpop.f32.mrb[0].mxu0
      %1866 = vmatprep.mubr.f32.mxu0 0.0
      %1867 = vmatmul.mubr.f32.gmra.mrb[0].mxu0 %v1749
      %v1868 = vpop.f32.mrb[0].mxu0
      %v1869 = vadd.f32 0.0, %v1868
      %v1870 = vpop.f32.mrb[0].mxu0
      %1871 = vdwg.mxu0
      %v1872 = vsel %vm961, %v1834, -inf
      %1873 = vmax.xlane.f32.xlu0 %v1872
      %v1874 = vpop.xlane.xlu0 %1873
      %v1875 = vsel %vm961, %v1839, -inf
      %1876 = vmax.xlane.f32.xlu0 %v1875
      %v1877 = vpop.xlane.xlu0 %1876
      %v1878 = vsel %vm961, %v1844, -inf
      %1879 = vmax.xlane.f32.xlu0 %v1878
      %v1880 = vpop.xlane.xlu0 %1879
      %v1881 = vsel %vm961, %v1849, -inf
      %1882 = vmax.xlane.f32.xlu0 %v1881
      %v1883 = vpop.xlane.xlu0 %1882
      %v1884 = vsel %vm961, %v1854, -inf
      %1885 = vmax.xlane.f32.xlu0 %v1884
      %v1886 = vpop.xlane.xlu0 %1885
      %v1887 = vsel %vm961, %v1859, -inf
      %1888 = vmax.xlane.f32.xlu0 %v1887
      %v1889 = vpop.xlane.xlu0 %1888
      %v1890 = vsel %vm961, %v1864, -inf
      %1891 = vmax.xlane.f32.xlu0 %v1890
      %v1892 = vpop.xlane.xlu0 %1891
      %v1893 = vsel %vm961, %v1869, -inf
      %1894 = vmax.xlane.f32.xlu0 %v1893
      %v1895 = vpop.xlane.xlu0 %1894
      %v1896 = vsub.f32 %v1834, %v1874
      %v1897 = vsub.f32 %v1839, %v1877
      %v1898 = vsub.f32 %v1844, %v1880
      %v1899 = vsub.f32 %v1849, %v1883
      %v1900 = vsub.f32 %v1854, %v1886
      %v1901 = vsub.f32 %v1859, %v1889
      %v1902 = vsub.f32 %v1864, %v1892
      %v1903 = vsub.f32 %v1869, %v1895
      %v1904 = vmul.f32 %v1896, 1.442695
      %v1905 = vpow.pop %v1904
      %v1906 = vmul.f32 %v1897, 1.442695
      %v1907 = vpow.pop %v1906
      %v1908 = vmul.f32 %v1898, 1.442695
      %v1909 = vpow.pop %v1908
      %v1910 = vmul.f32 %v1899, 1.442695
      %v1911 = vpow.pop %v1910
      %v1912 = vmul.f32 %v1900, 1.442695
      %v1913 = vpow.pop %v1912
      %v1914 = vmul.f32 %v1901, 1.442695
      %v1915 = vpow.pop %v1914
      %v1916 = vmul.f32 %v1902, 1.442695
      %v1917 = vpow.pop %v1916
      %v1918 = vmul.f32 %v1903, 1.442695
      %v1919 = vpow.pop %v1918
      %v1920 = vsel %vm961, %v1905, 0.0
      %1921 = vadd.xlane.f32.xlu0 %v1920
      %v1922 = vpop.xlane.xlu0 %1921
      %v1923 = vsel %vm961, %v1907, 0.0
      %1924 = vadd.xlane.f32.xlu0 %v1923
      %v1925 = vpop.xlane.xlu0 %1924
      %v1926 = vsel %vm961, %v1909, 0.0
      %1927 = vadd.xlane.f32.xlu0 %v1926
      %v1928 = vpop.xlane.xlu0 %1927
      %v1929 = vsel %vm961, %v1911, 0.0
      %1930 = vadd.xlane.f32.xlu0 %v1929
      %v1931 = vpop.xlane.xlu0 %1930
      %v1932 = vsel %vm961, %v1913, 0.0
      %1933 = vadd.xlane.f32.xlu0 %v1932
      %v1934 = vpop.xlane.xlu0 %1933
      %v1935 = vsel %vm961, %v1915, 0.0
      %1936 = vadd.xlane.f32.xlu0 %v1935
      %v1937 = vpop.xlane.xlu0 %1936
      %v1938 = vsel %vm961, %v1917, 0.0
      %1939 = vadd.xlane.f32.xlu0 %v1938
      %v1940 = vpop.xlane.xlu0 %1939
      %v1941 = vsel %vm961, %v1919, 0.0
      %1942 = vadd.xlane.f32.xlu0 %v1941
      %v1943 = vpop.xlane.xlu0 %1942
      %v1944 = vrcp.pop %v1922
      %v1945 = vrcp.pop %v1925
      %v1946 = vrcp.pop %v1928
      %v1947 = vrcp.pop %v1931
      %v1948 = vrcp.pop %v1934
      %v1949 = vrcp.pop %v1937
      %v1950 = vrcp.pop %v1940
      %v1951 = vrcp.pop %v1943
      %v1952 = vmul.f32 %v1905, %v1944
      %v1953 = vmul.f32 %v1907, %v1945
      %v1954 = vmul.f32 %v1909, %v1946
      %v1955 = vmul.f32 %v1911, %v1947
      %v1956 = vmul.f32 %v1913, %v1948
      %v1957 = vmul.f32 %v1915, %v1949
      %v1958 = vmul.f32 %v1917, %v1950
      %v1959 = vmul.f32 %v1919, %v1951
      %1960 = vrot.lane.b32.xlu0 %v769, 120
      %v1961 = vpop.permute.xlu0 %1960
      %1962 = vrot.lane.b32.xlu0 %v774, 120
      %v1963 = vpop.permute.xlu0 %1962
      %1964 = vrot.lane.b32.xlu0 %v779, 120
      %v1965 = vpop.permute.xlu0 %1964
      %1966 = vrot.lane.b32.xlu0 %v784, 120
      %v1967 = vpop.permute.xlu0 %1966
      %1968 = vrot.lane.b32.xlu0 %v789, 120
      %v1969 = vpop.permute.xlu0 %1968
      %1970 = vrot.lane.b32.xlu0 %v794, 120
      %v1971 = vpop.permute.xlu0 %1970
      %1972 = vrot.lane.b32.xlu0 %v799, 120
      %v1973 = vpop.permute.xlu0 %1972
      %1974 = vrot.lane.b32.xlu0 %v804, 120
      %v1975 = vpop.permute.xlu0 %1974
      %v1985 = vsel %vm961, %v1952, 0
      %v1988 = vsel %vm961, %v1953, 0
      %v1991 = vsel %vm961, %v1954, 0
      %v1994 = vsel %vm961, %v1955, 0
      %v1997 = vsel %vm961, %v1956, 0
      %v2000 = vsel %vm961, %v1957, 0
      %v2003 = vsel %vm961, %v1958, 0
      %v2006 = vsel %vm961, %v1959, 0
      %2008 = vmatprep.subr.mxu0 0.0
      %2009 = vmatpush1.msra.mxu0 %v1961
      %2010 = vmatprep.subr.mxu0 0.0
      %2011 = vmatpush1.msra.mxu0 %v1963
      %2012 = vmatprep.subr.mxu0 0.0
      %2013 = vmatpush1.msra.mxu0 %v1965
      %2014 = vmatprep.subr.mxu0 0.0
      %2015 = vmatpush1.msra.mxu0 %v1967
      %2016 = vmatprep.subr.mxu0 0.0
      %2017 = vmatpush1.msra.mxu0 %v1969
      %2018 = vmatprep.subr.mxu0 0.0
      %2019 = vmatpush1.msra.mxu0 %v1971
      %2020 = vmatprep.subr.mxu0 0.0
      %2021 = vmatpush1.msra.mxu0 %v1973
      %2022 = vmatprep.subr.mxu0 0.0
      %2023 = vmatpush1.msra.mxu0 %v1975
      %2024 = vmatprep.subr.mxu0 0.0
      %2025 = vmatpush1.msra.mxu0 0.0
      %2026 = vmatprep.subr.mxu0 0.0
      %2027 = vmatpush1.msra.mxu0 0.0
      %2028 = vmatprep.subr.mxu0 0.0
      %2029 = vmatpush1.msra.mxu0 0.0
      %2030 = vmatprep.subr.mxu0 0.0
      %2031 = vmatpush1.msra.mxu0 0.0
      %2032 = vmatprep.subr.mxu0 0.0
      %2033 = vmatpush1.msra.mxu0 0.0
      %2034 = vmatprep.subr.mxu0 0.0
      %2035 = vmatpush1.msra.mxu0 0.0
      %2036 = vmatprep.subr.mxu0 0.0
      %2037 = vmatpush1.msra.mxu0 0.0
      %2038 = vmatprep.subr.mxu0 0.0
      %2039 = vmatpush1.msra.mxu0 0.0
      %2040 = vmatprep.subr.mxu0 0.0
      %2041 = vmatpush1.msra.mxu0 0.0
      %2042 = vmatprep.subr.mxu0 0.0
      %2043 = vmatpush1.msra.mxu0 0.0
      %2044 = vmatprep.subr.mxu0 0.0
      %2045 = vmatpush1.msra.mxu0 0.0
      %2046 = vmatprep.subr.mxu0 0.0
      %2047 = vmatpush1.msra.mxu0 0.0
      %2048 = vmatprep.subr.mxu0 0.0
      %2049 = vmatpush1.msra.mxu0 0.0
      %2050 = vmatprep.subr.mxu0 0.0
      %2051 = vmatpush1.msra.mxu0 0.0
      %2052 = vmatprep.subr.mxu0 0.0
      %2053 = vmatpush1.msra.mxu0 0.0
      %2054 = vmatprep.subr.mxu0 0.0
      %2055 = vmatpush1.msra.mxu0 0.0
      %2056 = vmatprep.subr.mxu0 0.0
      %2057 = vmatpush1.msra.mxu0 0.0
      %2058 = vmatprep.subr.mxu0 0.0
      %2059 = vmatpush1.msra.mxu0 0.0
      %2060 = vmatprep.subr.mxu0 0.0
      %2061 = vmatpush1.msra.mxu0 0.0
      %2062 = vmatprep.subr.mxu0 0.0
      %2063 = vmatpush1.msra.mxu0 0.0
      %2064 = vmatprep.subr.mxu0 0.0
      %2065 = vmatpush1.msra.mxu0 0.0
      %2066 = vmatprep.subr.mxu0 0.0
      %2067 = vmatpush1.msra.mxu0 0.0
      %2068 = vmatprep.subr.mxu0 0.0
      %2069 = vmatpush1.msra.mxu0 0.0
      %2070 = vmatprep.subr.mxu0 0.0
      %2071 = vmatpush1.msra.mxu0 0.0
      %2072 = vmatprep.mubr.f32.mxu0 0.0
      %2073 = vmatmul.mubr.f32.gmra.mrb[0].mxu0 %v1985
      %v2074 = vpop.f32.mrb[0].mxu0
      %v2075 = vadd.f32 0.0, %v2074
      %v2076 = vpop.f32.mrb[0].mxu0
      %2077 = vmatprep.mubr.f32.mxu0 0.0
      %2078 = vmatmul.mubr.f32.gmra.mrb[0].mxu0 %v1988
      %v2079 = vpop.f32.mrb[0].mxu0
      %v2080 = vadd.f32 0.0, %v2079
      %v2081 = vpop.f32.mrb[0].mxu0
      %2082 = vmatprep.mubr.f32.mxu0 0.0
      %2083 = vmatmul.mubr.f32.gmra.mrb[0].mxu0 %v1991
      %v2084 = vpop.f32.mrb[0].mxu0
      %v2085 = vadd.f32 0.0, %v2084
      %v2086 = vpop.f32.mrb[0].mxu0
      %2087 = vmatprep.mubr.f32.mxu0 0.0
      %2088 = vmatmul.mubr.f32.gmra.mrb[0].mxu0 %v1994
      %v2089 = vpop.f32.mrb[0].mxu0
      %v2090 = vadd.f32 0.0, %v2089
      %v2091 = vpop.f32.mrb[0].mxu0
      %2092 = vmatprep.mubr.f32.mxu0 0.0
      %2093 = vmatmul.mubr.f32.gmra.mrb[0].mxu0 %v1997
      %v2094 = vpop.f32.mrb[0].mxu0
      %v2095 = vadd.f32 0.0, %v2094
      %v2096 = vpop.f32.mrb[0].mxu0
      %2097 = vmatprep.mubr.f32.mxu0 0.0
      %2098 = vmatmul.mubr.f32.gmra.mrb[0].mxu0 %v2000
      %v2099 = vpop.f32.mrb[0].mxu0
      %v2100 = vadd.f32 0.0, %v2099
      %v2101 = vpop.f32.mrb[0].mxu0
      %2102 = vmatprep.mubr.f32.mxu0 0.0
      %2103 = vmatmul.mubr.f32.gmra.mrb[0].mxu0 %v2003
      %v2104 = vpop.f32.mrb[0].mxu0
      %v2105 = vadd.f32 0.0, %v2104
      %v2106 = vpop.f32.mrb[0].mxu0
      %2107 = vmatprep.mubr.f32.mxu0 0.0
      %2108 = vmatmul.mubr.f32.gmra.mrb[0].mxu0 %v2006
      %v2109 = vpop.f32.mrb[0].mxu0
      %v2110 = vadd.f32 0.0, %v2109
      %v2111 = vpop.f32.mrb[0].mxu0
      %2112 = vdwg.mxu0
      %v2113 = vmul.f32 %v1179, %v2075
      %v2114 = vmul.f32 %v1179, %v2080
      %v2115 = vmul.f32 %v1179, %v2085
      %v2116 = vmul.f32 %v1179, %v2090
      %v2117 = vmul.f32 %v1179, %v2095
      %v2118 = vmul.f32 %v1179, %v2100
      %v2119 = vmul.f32 %v1179, %v2105
      %v2120 = vmul.f32 %v1179, %v2110
      %2121 = vrot.lane.b32.xlu0 %v393, 120
      %v2122 = vpop.permute.xlu0 %2121
      %2123 = vrot.lane.b32.xlu0 %v394, 120
      %v2124 = vpop.permute.xlu0 %2123
      %2125 = vrot.lane.b32.xlu0 %v395, 120
      %v2126 = vpop.permute.xlu0 %2125
      %2127 = vrot.lane.b32.xlu0 %v396, 120
      %v2128 = vpop.permute.xlu0 %2127
      %2129 = vrot.lane.b32.xlu0 %v397, 120
      %v2130 = vpop.permute.xlu0 %2129
      %2131 = vrot.lane.b32.xlu0 %v398, 120
      %v2132 = vpop.permute.xlu0 %2131
      %2133 = vrot.lane.b32.xlu0 %v399, 120
      %v2134 = vpop.permute.xlu0 %2133
      %2135 = vrot.lane.b32.xlu0 %v400, 120
      %v2136 = vpop.permute.xlu0 %2135
      %v2145 = vadd.f32 %v2113, %v2122
      %v2146 = vadd.f32 %v2114, %v2124
      %v2147 = vadd.f32 %v2115, %v2126
      %v2148 = vadd.f32 %v2116, %v2128
      %v2149 = vadd.f32 %v2117, %v2130
      %v2150 = vadd.f32 %v2118, %v2132
      %v2151 = vadd.f32 %v2119, %v2134
      %v2152 = vadd.f32 %v2120, %v2136
      %2161 = vrot.lane.b32.xlu0 %v2145, 8
      %v2162 = vpop.permute.xlu0 %2161
      %2163 = vrot.lane.b32.xlu0 %v2146, 8
      %v2164 = vpop.permute.xlu0 %2163
      %2165 = vrot.lane.b32.xlu0 %v2147, 8
      %v2166 = vpop.permute.xlu0 %2165
      %2167 = vrot.lane.b32.xlu0 %v2148, 8
      %v2168 = vpop.permute.xlu0 %2167
      %2169 = vrot.lane.b32.xlu0 %v2149, 8
      %v2170 = vpop.permute.xlu0 %2169
      %2171 = vrot.lane.b32.xlu0 %v2150, 8
      %v2172 = vpop.permute.xlu0 %2171
      %2173 = vrot.lane.b32.xlu0 %v2151, 8
      %v2174 = vpop.permute.xlu0 %2173
      %2175 = vrot.lane.b32.xlu0 %v2152, 8
      %v2176 = vpop.permute.xlu0 %2175
      %vm2185 = vcmask 97344
      %2186 = vst.msk [vmem:[%s391] sm:$0xff] %vm2185, %v2162
      %2187 = vst.msk [vmem:[%s391 + $0x8] sm:$0xff] %vm2185, %v2164
      %2188 = vst.msk [vmem:[%s391 + $0x10] sm:$0xff] %vm2185, %v2166
      %2189 = vst.msk [vmem:[%s391 + $0x18] sm:$0xff] %vm2185, %v2168
      %2190 = vst.msk [vmem:[%s391 + $0x20] sm:$0xff] %vm2185, %v2170
      %2191 = vst.msk [vmem:[%s391 + $0x28] sm:$0xff] %vm2185, %v2172
      %2192 = vst.msk [vmem:[%s391 + $0x30] sm:$0xff] %vm2185, %v2174
      %2193 = vst.msk [vmem:[%s391 + $0x38] sm:$0xff] %vm2185, %v2176
      %2194 = vrot.lane.b32.xlu0 %v513, 116
      %v2195 = vpop.permute.xlu0 %2194
      %2196 = vrot.lane.b32.xlu0 %v518, 116
      %v2197 = vpop.permute.xlu0 %2196
      %2198 = vrot.lane.b32.xlu0 %v523, 116
      %v2199 = vpop.permute.xlu0 %2198
      %2200 = vrot.lane.b32.xlu0 %v528, 116
      %v2201 = vpop.permute.xlu0 %2200
      %2202 = vrot.lane.b32.xlu0 %v533, 116
      %v2203 = vpop.permute.xlu0 %2202
      %2204 = vrot.lane.b32.xlu0 %v538, 116
      %v2205 = vpop.permute.xlu0 %2204
      %2206 = vrot.lane.b32.xlu0 %v543, 116
      %v2207 = vpop.permute.xlu0 %2206
      %2208 = vrot.lane.b32.xlu0 %v548, 116
      %v2209 = vpop.permute.xlu0 %2208
      %2210 = vrot.lane.b32.xlu0 %v653, 116
      %v2211 = vpop.permute.xlu0 %2210
      %2212 = vrot.lane.b32.xlu0 %v658, 116
      %v2213 = vpop.permute.xlu0 %2212
      %2214 = vrot.lane.b32.xlu0 %v663, 116
      %v2215 = vpop.permute.xlu0 %2214
      %2216 = vrot.lane.b32.xlu0 %v668, 116
      %v2217 = vpop.permute.xlu0 %2216
      %2218 = vrot.lane.b32.xlu0 %v673, 116
      %v2219 = vpop.permute.xlu0 %2218
      %2220 = vrot.lane.b32.xlu0 %v678, 116
      %v2221 = vpop.permute.xlu0 %2220
      %2222 = vrot.lane.b32.xlu0 %v683, 116
      %v2223 = vpop.permute.xlu0 %2222
      %2224 = vrot.lane.b32.xlu0 %v688, 116
      %v2225 = vpop.permute.xlu0 %2224
      %v2226 = vsel %vm807, %v2195, 0
      %v2228 = vsel %vm807, %v2197, 0
      %v2230 = vsel %vm807, %v2199, 0
      %v2232 = vsel %vm807, %v2201, 0
      %v2234 = vsel %vm807, %v2203, 0
      %v2236 = vsel %vm807, %v2205, 0
      %v2238 = vsel %vm807, %v2207, 0
      %v2240 = vsel %vm807, %v2209, 0
      %v2242 = vsel %vm807, %v2211, 0
      %v2244 = vsel %vm807, %v2213, 0
      %v2246 = vsel %vm807, %v2215, 0
      %v2248 = vsel %vm807, %v2217, 0
      %v2250 = vsel %vm807, %v2219, 0
      %v2252 = vsel %vm807, %v2221, 0
      %v2254 = vsel %vm807, %v2223, 0
      %v2256 = vsel %vm807, %v2225, 0
      %2258 = vmatprep.subr.mxu0 0.0
      %2259 = vmatpush1.xpose.msra.mxu0 %v2242
      %2260 = vmatprep.subr.mxu0 0.0
      %2261 = vmatpush1.xpose.msra.mxu0 %v2244
      %2262 = vmatprep.subr.mxu0 0.0
      %2263 = vmatpush1.xpose.msra.mxu0 %v2246
      %2264 = vmatprep.subr.mxu0 0.0
      %2265 = vmatpush1.xpose.msra.mxu0 %v2248
      %2266 = vmatprep.subr.mxu0 0.0
      %2267 = vmatpush1.xpose.msra.mxu0 %v2250
      %2268 = vmatprep.subr.mxu0 0.0
      %2269 = vmatpush1.xpose.msra.mxu0 %v2252
      %2270 = vmatprep.subr.mxu0 0.0
      %2271 = vmatpush1.xpose.msra.mxu0 %v2254
      %2272 = vmatprep.subr.mxu0 0.0
      %2273 = vmatpush1.xpose.msra.mxu0 %v2256
      %2274 = vmatprep.subr.mxu0 0.0
      %2275 = vmatpush1.xpose.msra.mxu0 0.0
      %2276 = vmatprep.subr.mxu0 0.0
      %2277 = vmatpush1.xpose.msra.mxu0 0.0
      %2278 = vmatprep.subr.mxu0 0.0
      %2279 = vmatpush1.xpose.msra.mxu0 0.0
      %2280 = vmatprep.subr.mxu0 0.0
      %2281 = vmatpush1.xpose.msra.mxu0 0.0
      %2282 = vmatprep.subr.mxu0 0.0
      %2283 = vmatpush1.xpose.msra.mxu0 0.0
      %2284 = vmatprep.subr.mxu0 0.0
      %2285 = vmatpush1.xpose.msra.mxu0 0.0
      %2286 = vmatprep.subr.mxu0 0.0
      %2287 = vmatpush1.xpose.msra.mxu0 0.0
      %2288 = vmatprep.subr.mxu0 0.0
      %2289 = vmatpush1.xpose.msra.mxu0 0.0
      %2290 = vmatprep.subr.mxu0 0.0
      %2291 = vmatpush1.xpose.msra.mxu0 0.0
      %2292 = vmatprep.subr.mxu0 0.0
      %2293 = vmatpush1.xpose.msra.mxu0 0.0
      %2294 = vmatprep.subr.mxu0 0.0
      %2295 = vmatpush1.xpose.msra.mxu0 0.0
      %2296 = vmatprep.subr.mxu0 0.0
      %2297 = vmatpush1.xpose.msra.mxu0 0.0
      %2298 = vmatprep.subr.mxu0 0.0
      %2299 = vmatpush1.xpose.msra.mxu0 0.0
      %2300 = vmatprep.subr.mxu0 0.0
      %2301 = vmatpush1.xpose.msra.mxu0 0.0
      %2302 = vmatprep.subr.mxu0 0.0
      %2303 = vmatpush1.xpose.msra.mxu0 0.0
      %2304 = vmatprep.subr.mxu0 0.0
      %2305 = vmatpush1.xpose.msra.mxu0 0.0
      %2306 = vmatprep.subr.mxu0 0.0
      %2307 = vmatpush1.xpose.msra.mxu0 0.0
      %2308 = vmatprep.subr.mxu0 0.0
      %2309 = vmatpush1.xpose.msra.mxu0 0.0
      %2310 = vmatprep.subr.mxu0 0.0
      %2311 = vmatpush1.xpose.msra.mxu0 0.0
      %2312 = vmatprep.subr.mxu0 0.0
      %2313 = vmatpush1.xpose.msra.mxu0 0.0
      %2314 = vmatprep.subr.mxu0 0.0
      %2315 = vmatpush1.xpose.msra.mxu0 0.0
      %2316 = vmatprep.subr.mxu0 0.0
      %2317 = vmatpush1.xpose.msra.mxu0 0.0
      %2318 = vmatprep.subr.mxu0 0.0
      %2319 = vmatpush1.xpose.msra.mxu0 0.0
      %2320 = vmatprep.subr.mxu0 0.0
      %2321 = vmatpush1.xpose.msra.mxu0 0.0
      %2322 = vmatprep.mubr.f32.mxu0 0.0
      %2323 = vmatmul.mubr.f32.gmra.mrb[0].mxu0 %v2226
      %v2324 = vpop.f32.mrb[0].mxu0
      %v2325 = vadd.f32 0.0, %v2324
      %v2326 = vpop.f32.mrb[0].mxu0
      %2327 = vmatprep.mubr.f32.mxu0 0.0
      %2328 = vmatmul.mubr.f32.gmra.mrb[0].mxu0 %v2228
      %v2329 = vpop.f32.mrb[0].mxu0
      %v2330 = vadd.f32 0.0, %v2329
      %v2331 = vpop.f32.mrb[0].mxu0
      %2332 = vmatprep.mubr.f32.mxu0 0.0
      %2333 = vmatmul.mubr.f32.gmra.mrb[0].mxu0 %v2230
      %v2334 = vpop.f32.mrb[0].mxu0
      %v2335 = vadd.f32 0.0, %v2334
      %v2336 = vpop.f32.mrb[0].mxu0
      %2337 = vmatprep.mubr.f32.mxu0 0.0
      %2338 = vmatmul.mubr.f32.gmra.mrb[0].mxu0 %v2232
      %v2339 = vpop.f32.mrb[0].mxu0
      %v2340 = vadd.f32 0.0, %v2339
      %v2341 = vpop.f32.mrb[0].mxu0
      %2342 = vmatprep.mubr.f32.mxu0 0.0
      %2343 = vmatmul.mubr.f32.gmra.mrb[0].mxu0 %v2234
      %v2344 = vpop.f32.mrb[0].mxu0
      %v2345 = vadd.f32 0.0, %v2344
      %v2346 = vpop.f32.mrb[0].mxu0
      %2347 = vmatprep.mubr.f32.mxu0 0.0
      %2348 = vmatmul.mubr.f32.gmra.mrb[0].mxu0 %v2236
      %v2349 = vpop.f32.mrb[0].mxu0
      %v2350 = vadd.f32 0.0, %v2349
      %v2351 = vpop.f32.mrb[0].mxu0
      %2352 = vmatprep.mubr.f32.mxu0 0.0
      %2353 = vmatmul.mubr.f32.gmra.mrb[0].mxu0 %v2238
      %v2354 = vpop.f32.mrb[0].mxu0
      %v2355 = vadd.f32 0.0, %v2354
      %v2356 = vpop.f32.mrb[0].mxu0
      %2357 = vmatprep.mubr.f32.mxu0 0.0
      %2358 = vmatmul.mubr.f32.gmra.mrb[0].mxu0 %v2240
      %v2359 = vpop.f32.mrb[0].mxu0
      %v2360 = vadd.f32 0.0, %v2359
      %v2361 = vpop.f32.mrb[0].mxu0
      %2362 = vdwg.mxu0
      %v2363 = vsel %vm961, %v2325, -inf
      %2364 = vmax.xlane.f32.xlu0 %v2363
      %v2365 = vpop.xlane.xlu0 %2364
      %v2366 = vsel %vm961, %v2330, -inf
      %2367 = vmax.xlane.f32.xlu0 %v2366
      %v2368 = vpop.xlane.xlu0 %2367
      %v2369 = vsel %vm961, %v2335, -inf
      %2370 = vmax.xlane.f32.xlu0 %v2369
      %v2371 = vpop.xlane.xlu0 %2370
      %v2372 = vsel %vm961, %v2340, -inf
      %2373 = vmax.xlane.f32.xlu0 %v2372
      %v2374 = vpop.xlane.xlu0 %2373
      %v2375 = vsel %vm961, %v2345, -inf
      %2376 = vmax.xlane.f32.xlu0 %v2375
      %v2377 = vpop.xlane.xlu0 %2376
      %v2378 = vsel %vm961, %v2350, -inf
      %2379 = vmax.xlane.f32.xlu0 %v2378
      %v2380 = vpop.xlane.xlu0 %2379
      %v2381 = vsel %vm961, %v2355, -inf
      %2382 = vmax.xlane.f32.xlu0 %v2381
      %v2383 = vpop.xlane.xlu0 %2382
      %v2384 = vsel %vm961, %v2360, -inf
      %2385 = vmax.xlane.f32.xlu0 %v2384
      %v2386 = vpop.xlane.xlu0 %2385
      %v2387 = vsub.f32 %v2325, %v2365
      %v2388 = vsub.f32 %v2330, %v2368
      %v2389 = vsub.f32 %v2335, %v2371
      %v2390 = vsub.f32 %v2340, %v2374
      %v2391 = vsub.f32 %v2345, %v2377
      %v2392 = vsub.f32 %v2350, %v2380
      %v2393 = vsub.f32 %v2355, %v2383
      %v2394 = vsub.f32 %v2360, %v2386
      %v2395 = vmul.f32 %v2387, 1.442695
      %v2396 = vpow.pop %v2395
      %v2397 = vmul.f32 %v2388, 1.442695
      %v2398 = vpow.pop %v2397
      %v2399 = vmul.f32 %v2389, 1.442695
      %v2400 = vpow.pop %v2399
      %v2401 = vmul.f32 %v2390, 1.442695
      %v2402 = vpow.pop %v2401
      %v2403 = vmul.f32 %v2391, 1.442695
      %v2404 = vpow.pop %v2403
      %v2405 = vmul.f32 %v2392, 1.442695
      %v2406 = vpow.pop %v2405
      %v2407 = vmul.f32 %v2393, 1.442695
      %v2408 = vpow.pop %v2407
      %v2409 = vmul.f32 %v2394, 1.442695
      %v2410 = vpow.pop %v2409
      %v2411 = vsel %vm961, %v2396, 0.0
      %2412 = vadd.xlane.f32.xlu0 %v2411
      %v2413 = vpop.xlane.xlu0 %2412
      %v2414 = vsel %vm961, %v2398, 0.0
      %2415 = vadd.xlane.f32.xlu0 %v2414
      %v2416 = vpop.xlane.xlu0 %2415
      %v2417 = vsel %vm961, %v2400, 0.0
      %2418 = vadd.xlane.f32.xlu0 %v2417
      %v2419 = vpop.xlane.xlu0 %2418
      %v2420 = vsel %vm961, %v2402, 0.0
      %2421 = vadd.xlane.f32.xlu0 %v2420
      %v2422 = vpop.xlane.xlu0 %2421
      %v2423 = vsel %vm961, %v2404, 0.0
      %2424 = vadd.xlane.f32.xlu0 %v2423
      %v2425 = vpop.xlane.xlu0 %2424
      %v2426 = vsel %vm961, %v2406, 0.0
      %2427 = vadd.xlane.f32.xlu0 %v2426
      %v2428 = vpop.xlane.xlu0 %2427
      %v2429 = vsel %vm961, %v2408, 0.0
      %2430 = vadd.xlane.f32.xlu0 %v2429
      %v2431 = vpop.xlane.xlu0 %2430
      %v2432 = vsel %vm961, %v2410, 0.0
      %2433 = vadd.xlane.f32.xlu0 %v2432
      %v2434 = vpop.xlane.xlu0 %2433
      %v2435 = vrcp.pop %v2413
      %v2436 = vrcp.pop %v2416
      %v2437 = vrcp.pop %v2419
      %v2438 = vrcp.pop %v2422
      %v2439 = vrcp.pop %v2425
      %v2440 = vrcp.pop %v2428
      %v2441 = vrcp.pop %v2431
      %v2442 = vrcp.pop %v2434
      %v2443 = vmul.f32 %v2396, %v2435
      %v2444 = vmul.f32 %v2398, %v2436
      %v2445 = vmul.f32 %v2400, %v2437
      %v2446 = vmul.f32 %v2402, %v2438
      %v2447 = vmul.f32 %v2404, %v2439
      %v2448 = vmul.f32 %v2406, %v2440
      %v2449 = vmul.f32 %v2408, %v2441
      %v2450 = vmul.f32 %v2410, %v2442
      %2451 = vrot.lane.b32.xlu0 %v769, 116
      %v2452 = vpop.permute.xlu0 %2451
      %2453 = vrot.lane.b32.xlu0 %v774, 116
      %v2454 = vpop.permute.xlu0 %2453
      %2455 = vrot.lane.b32.xlu0 %v779, 116
      %v2456 = vpop.permute.xlu0 %2455
      %2457 = vrot.lane.b32.xlu0 %v784, 116
      %v2458 = vpop.permute.xlu0 %2457
      %2459 = vrot.lane.b32.xlu0 %v789, 116
      %v2460 = vpop.permute.xlu0 %2459
      %2461 = vrot.lane.b32.xlu0 %v794, 116
      %v2462 = vpop.permute.xlu0 %2461
      %2463 = vrot.lane.b32.xlu0 %v799, 116
      %v2464 = vpop.permute.xlu0 %2463
      %2465 = vrot.lane.b32.xlu0 %v804, 116
      %v2466 = vpop.permute.xlu0 %2465
      %v2476 = vsel %vm961, %v2443, 0
      %v2479 = vsel %vm961, %v2444, 0
      %v2482 = vsel %vm961, %v2445, 0
      %v2485 = vsel %vm961, %v2446, 0
      %v2488 = vsel %vm961, %v2447, 0
      %v2491 = vsel %vm961, %v2448, 0
      %v2494 = vsel %vm961, %v2449, 0
      %v2497 = vsel %vm961, %v2450, 0
      %2499 = vmatprep.subr.mxu0 0.0
      %2500 = vmatpush1.msra.mxu0 %v2452
      %2501 = vmatprep.subr.mxu0 0.0
      %2502 = vmatpush1.msra.mxu0 %v2454
      %2503 = vmatprep.subr.mxu0 0.0
      %2504 = vmatpush1.msra.mxu0 %v2456
      %2505 = vmatprep.subr.mxu0 0.0
      %2506 = vmatpush1.msra.mxu0 %v2458
      %2507 = vmatprep.subr.mxu0 0.0
      %2508 = vmatpush1.msra.mxu0 %v2460
      %2509 = vmatprep.subr.mxu0 0.0
      %2510 = vmatpush1.msra.mxu0 %v2462
      %2511 = vmatprep.subr.mxu0 0.0
      %2512 = vmatpush1.msra.mxu0 %v2464
      %2513 = vmatprep.subr.mxu0 0.0
      %2514 = vmatpush1.msra.mxu0 %v2466
      %2515 = vmatprep.subr.mxu0 0.0
      %2516 = vmatpush1.msra.mxu0 0.0
      %2517 = vmatprep.subr.mxu0 0.0
      %2518 = vmatpush1.msra.mxu0 0.0
      %2519 = vmatprep.subr.mxu0 0.0
      %2520 = vmatpush1.msra.mxu0 0.0
      %2521 = vmatprep.subr.mxu0 0.0
      %2522 = vmatpush1.msra.mxu0 0.0
      %2523 = vmatprep.subr.mxu0 0.0
      %2524 = vmatpush1.msra.mxu0 0.0
      %2525 = vmatprep.subr.mxu0 0.0
      %2526 = vmatpush1.msra.mxu0 0.0
      %2527 = vmatprep.subr.mxu0 0.0
      %2528 = vmatpush1.msra.mxu0 0.0
      %2529 = vmatprep.subr.mxu0 0.0
      %2530 = vmatpush1.msra.mxu0 0.0
      %2531 = vmatprep.subr.mxu0 0.0
      %2532 = vmatpush1.msra.mxu0 0.0
      %2533 = vmatprep.subr.mxu0 0.0
      %2534 = vmatpush1.msra.mxu0 0.0
      %2535 = vmatprep.subr.mxu0 0.0
      %2536 = vmatpush1.msra.mxu0 0.0
      %2537 = vmatprep.subr.mxu0 0.0
      %2538 = vmatpush1.msra.mxu0 0.0
      %2539 = vmatprep.subr.mxu0 0.0
      %2540 = vmatpush1.msra.mxu0 0.0
      %2541 = vmatprep.subr.mxu0 0.0
      %2542 = vmatpush1.msra.mxu0 0.0
      %2543 = vmatprep.subr.mxu0 0.0
      %2544 = vmatpush1.msra.mxu0 0.0
      %2545 = vmatprep.subr.mxu0 0.0
      %2546 = vmatpush1.msra.mxu0 0.0
      %2547 = vmatprep.subr.mxu0 0.0
      %2548 = vmatpush1.msra.mxu0 0.0
      %2549 = vmatprep.subr.mxu0 0.0
      %2550 = vmatpush1.msra.mxu0 0.0
      %2551 = vmatprep.subr.mxu0 0.0
      %2552 = vmatpush1.msra.mxu0 0.0
      %2553 = vmatprep.subr.mxu0 0.0
      %2554 = vmatpush1.msra.mxu0 0.0
      %2555 = vmatprep.subr.mxu0 0.0
      %2556 = vmatpush1.msra.mxu0 0.0
      %2557 = vmatprep.subr.mxu0 0.0
      %2558 = vmatpush1.msra.mxu0 0.0
      %2559 = vmatprep.subr.mxu0 0.0
      %2560 = vmatpush1.msra.mxu0 0.0
      %2561 = vmatprep.subr.mxu0 0.0
      %2562 = vmatpush1.msra.mxu0 0.0
      %2563 = vmatprep.mubr.f32.mxu0 0.0
      %2564 = vmatmul.mubr.f32.gmra.mrb[0].mxu0 %v2476
      %v2565 = vpop.f32.mrb[0].mxu0
      %v2566 = vadd.f32 0.0, %v2565
      %v2567 = vpop.f32.mrb[0].mxu0
      %2568 = vmatprep.mubr.f32.mxu0 0.0
      %2569 = vmatmul.mubr.f32.gmra.mrb[0].mxu0 %v2479
      %v2570 = vpop.f32.mrb[0].mxu0
      %v2571 = vadd.f32 0.0, %v2570
      %v2572 = vpop.f32.mrb[0].mxu0
      %2573 = vmatprep.mubr.f32.mxu0 0.0
      %2574 = vmatmul.mubr.f32.gmra.mrb[0].mxu0 %v2482
      %v2575 = vpop.f32.mrb[0].mxu0
      %v2576 = vadd.f32 0.0, %v2575
      %v2577 = vpop.f32.mrb[0].mxu0
      %2578 = vmatprep.mubr.f32.mxu0 0.0
      %2579 = vmatmul.mubr.f32.gmra.mrb[0].mxu0 %v2485
      %v2580 = vpop.f32.mrb[0].mxu0
      %v2581 = vadd.f32 0.0, %v2580
      %v2582 = vpop.f32.mrb[0].mxu0
      %2583 = vmatprep.mubr.f32.mxu0 0.0
      %2584 = vmatmul.mubr.f32.gmra.mrb[0].mxu0 %v2488
      %v2585 = vpop.f32.mrb[0].mxu0
      %v2586 = vadd.f32 0.0, %v2585
      %v2587 = vpop.f32.mrb[0].mxu0
      %2588 = vmatprep.mubr.f32.mxu0 0.0
      %2589 = vmatmul.mubr.f32.gmra.mrb[0].mxu0 %v2491
      %v2590 = vpop.f32.mrb[0].mxu0
      %v2591 = vadd.f32 0.0, %v2590
      %v2592 = vpop.f32.mrb[0].mxu0
      %2593 = vmatprep.mubr.f32.mxu0 0.0
      %2594 = vmatmul.mubr.f32.gmra.mrb[0].mxu0 %v2494
      %v2595 = vpop.f32.mrb[0].mxu0
      %v2596 = vadd.f32 0.0, %v2595
      %v2597 = vpop.f32.mrb[0].mxu0
      %2598 = vmatprep.mubr.f32.mxu0 0.0
      %2599 = vmatmul.mubr.f32.gmra.mrb[0].mxu0 %v2497
      %v2600 = vpop.f32.mrb[0].mxu0
      %v2601 = vadd.f32 0.0, %v2600
      %v2602 = vpop.f32.mrb[0].mxu0
      %2603 = vdwg.mxu0
      %v2604 = vmul.f32 %v1179, %v2566
      %v2605 = vmul.f32 %v1179, %v2571
      %v2606 = vmul.f32 %v1179, %v2576
      %v2607 = vmul.f32 %v1179, %v2581
      %v2608 = vmul.f32 %v1179, %v2586
      %v2609 = vmul.f32 %v1179, %v2591
      %v2610 = vmul.f32 %v1179, %v2596
      %v2611 = vmul.f32 %v1179, %v2601
      %2612 = vrot.lane.b32.xlu0 %v393, 116
      %v2613 = vpop.permute.xlu0 %2612
      %2614 = vrot.lane.b32.xlu0 %v394, 116
      %v2615 = vpop.permute.xlu0 %2614
      %2616 = vrot.lane.b32.xlu0 %v395, 116
      %v2617 = vpop.permute.xlu0 %2616
      %2618 = vrot.lane.b32.xlu0 %v396, 116
      %v2619 = vpop.permute.xlu0 %2618
      %2620 = vrot.lane.b32.xlu0 %v397, 116
      %v2621 = vpop.permute.xlu0 %2620
      %2622 = vrot.lane.b32.xlu0 %v398, 116
      %v2623 = vpop.permute.xlu0 %2622
      %2624 = vrot.lane.b32.xlu0 %v399, 116
      %v2625 = vpop.permute.xlu0 %2624
      %2626 = vrot.lane.b32.xlu0 %v400, 116
      %v2627 = vpop.permute.xlu0 %2626
      %v2636 = vadd.f32 %v2604, %v2613
      %v2637 = vadd.f32 %v2605, %v2615
      %v2638 = vadd.f32 %v2606, %v2617
      %v2639 = vadd.f32 %v2607, %v2619
      %v2640 = vadd.f32 %v2608, %v2621
      %v2641 = vadd.f32 %v2609, %v2623
      %v2642 = vadd.f32 %v2610, %v2625
      %v2643 = vadd.f32 %v2611, %v2627
      %2652 = vrot.lane.b32.xlu0 %v2636, 12
      %v2653 = vpop.permute.xlu0 %2652
      %2654 = vrot.lane.b32.xlu0 %v2637, 12
      %v2655 = vpop.permute.xlu0 %2654
      %2656 = vrot.lane.b32.xlu0 %v2638, 12
      %v2657 = vpop.permute.xlu0 %2656
      %2658 = vrot.lane.b32.xlu0 %v2639, 12
      %v2659 = vpop.permute.xlu0 %2658
      %2660 = vrot.lane.b32.xlu0 %v2640, 12
      %v2661 = vpop.permute.xlu0 %2660
      %2662 = vrot.lane.b32.xlu0 %v2641, 12
      %v2663 = vpop.permute.xlu0 %2662
      %2664 = vrot.lane.b32.xlu0 %v2642, 12
      %v2665 = vpop.permute.xlu0 %2664
      %2666 = vrot.lane.b32.xlu0 %v2643, 12
      %v2667 = vpop.permute.xlu0 %2666
      %vm2676 = vcmask 130144
      %2677 = vst.msk [vmem:[%s391] sm:$0xff] %vm2676, %v2653
      %2678 = vst.msk [vmem:[%s391 + $0x8] sm:$0xff] %vm2676, %v2655
      %2679 = vst.msk [vmem:[%s391 + $0x10] sm:$0xff] %vm2676, %v2657
      %2680 = vst.msk [vmem:[%s391 + $0x18] sm:$0xff] %vm2676, %v2659
      %2681 = vst.msk [vmem:[%s391 + $0x20] sm:$0xff] %vm2676, %v2661
      %2682 = vst.msk [vmem:[%s391 + $0x28] sm:$0xff] %vm2676, %v2663
      %2683 = vst.msk [vmem:[%s391 + $0x30] sm:$0xff] %vm2676, %v2665
      %2684 = vst.msk [vmem:[%s391 + $0x38] sm:$0xff] %vm2676, %v2667
      %2685 = vrot.lane.b32.xlu0 %v513, 112
      %v2686 = vpop.permute.xlu0 %2685
      %2687 = vrot.lane.b32.xlu0 %v518, 112
      %v2688 = vpop.permute.xlu0 %2687
      %2689 = vrot.lane.b32.xlu0 %v523, 112
      %v2690 = vpop.permute.xlu0 %2689
      %2691 = vrot.lane.b32.xlu0 %v528, 112
      %v2692 = vpop.permute.xlu0 %2691
      %2693 = vrot.lane.b32.xlu0 %v533, 112
      %v2694 = vpop.permute.xlu0 %2693
      %2695 = vrot.lane.b32.xlu0 %v538, 112
      %v2696 = vpop.permute.xlu0 %2695
      %2697 = vrot.lane.b32.xlu0 %v543, 112
      %v2698 = vpop.permute.xlu0 %2697
      %2699 = vrot.lane.b32.xlu0 %v548, 112
      %v2700 = vpop.permute.xlu0 %2699
      %2701 = vrot.lane.b32.xlu0 %v653, 112
      %v2702 = vpop.permute.xlu0 %2701
      %2703 = vrot.lane.b32.xlu0 %v658, 112
      %v2704 = vpop.permute.xlu0 %2703
      %2705 = vrot.lane.b32.xlu0 %v663, 112
      %v2706 = vpop.permute.xlu0 %2705
      %2707 = vrot.lane.b32.xlu0 %v668, 112
      %v2708 = vpop.permute.xlu0 %2707
      %2709 = vrot.lane.b32.xlu0 %v673, 112
      %v2710 = vpop.permute.xlu0 %2709
      %2711 = vrot.lane.b32.xlu0 %v678, 112
      %v2712 = vpop.permute.xlu0 %2711
      %2713 = vrot.lane.b32.xlu0 %v683, 112
      %v2714 = vpop.permute.xlu0 %2713
      %2715 = vrot.lane.b32.xlu0 %v688, 112
      %v2716 = vpop.permute.xlu0 %2715
      %v2717 = vsel %vm807, %v2686, 0
      %v2719 = vsel %vm807, %v2688, 0
      %v2721 = vsel %vm807, %v2690, 0
      %v2723 = vsel %vm807, %v2692, 0
      %v2725 = vsel %vm807, %v2694, 0
      %v2727 = vsel %vm807, %v2696, 0
      %v2729 = vsel %vm807, %v2698, 0
      %v2731 = vsel %vm807, %v2700, 0
      %v2733 = vsel %vm807, %v2702, 0
      %v2735 = vsel %vm807, %v2704, 0
      %v2737 = vsel %vm807, %v2706, 0
      %v2739 = vsel %vm807, %v2708, 0
      %v2741 = vsel %vm807, %v2710, 0
      %v2743 = vsel %vm807, %v2712, 0
      %v2745 = vsel %vm807, %v2714, 0
      %v2747 = vsel %vm807, %v2716, 0
      %2749 = vmatprep.subr.mxu0 0.0
      %2750 = vmatpush1.xpose.msra.mxu0 %v2733
      %2751 = vmatprep.subr.mxu0 0.0
      %2752 = vmatpush1.xpose.msra.mxu0 %v2735
      %2753 = vmatprep.subr.mxu0 0.0
      %2754 = vmatpush1.xpose.msra.mxu0 %v2737
      %2755 = vmatprep.subr.mxu0 0.0
      %2756 = vmatpush1.xpose.msra.mxu0 %v2739
      %2757 = vmatprep.subr.mxu0 0.0
      %2758 = vmatpush1.xpose.msra.mxu0 %v2741
      %2759 = vmatprep.subr.mxu0 0.0
      %2760 = vmatpush1.xpose.msra.mxu0 %v2743
      %2761 = vmatprep.subr.mxu0 0.0
      %2762 = vmatpush1.xpose.msra.mxu0 %v2745
      %2763 = vmatprep.subr.mxu0 0.0
      %2764 = vmatpush1.xpose.msra.mxu0 %v2747
      %2765 = vmatprep.subr.mxu0 0.0
      %2766 = vmatpush1.xpose.msra.mxu0 0.0
      %2767 = vmatprep.subr.mxu0 0.0
      %2768 = vmatpush1.xpose.msra.mxu0 0.0
      %2769 = vmatprep.subr.mxu0 0.0
      %2770 = vmatpush1.xpose.msra.mxu0 0.0
      %2771 = vmatprep.subr.mxu0 0.0
      %2772 = vmatpush1.xpose.msra.mxu0 0.0
      %2773 = vmatprep.subr.mxu0 0.0
      %2774 = vmatpush1.xpose.msra.mxu0 0.0
      %2775 = vmatprep.subr.mxu0 0.0
      %2776 = vmatpush1.xpose.msra.mxu0 0.0
      %2777 = vmatprep.subr.mxu0 0.0
      %2778 = vmatpush1.xpose.msra.mxu0 0.0
      %2779 = vmatprep.subr.mxu0 0.0
      %2780 = vmatpush1.xpose.msra.mxu0 0.0
      %2781 = vmatprep.subr.mxu0 0.0
      %2782 = vmatpush1.xpose.msra.mxu0 0.0
      %2783 = vmatprep.subr.mxu0 0.0
      %2784 = vmatpush1.xpose.msra.mxu0 0.0
      %2785 = vmatprep.subr.mxu0 0.0
      %2786 = vmatpush1.xpose.msra.mxu0 0.0
      %2787 = vmatprep.subr.mxu0 0.0
      %2788 = vmatpush1.xpose.msra.mxu0 0.0
      %2789 = vmatprep.subr.mxu0 0.0
      %2790 = vmatpush1.xpose.msra.mxu0 0.0
      %2791 = vmatprep.subr.mxu0 0.0
      %2792 = vmatpush1.xpose.msra.mxu0 0.0
      %2793 = vmatprep.subr.mxu0 0.0
      %2794 = vmatpush1.xpose.msra.mxu0 0.0
      %2795 = vmatprep.subr.mxu0 0.0
      %2796 = vmatpush1.xpose.msra.mxu0 0.0
      %2797 = vmatprep.subr.mxu0 0.0
      %2798 = vmatpush1.xpose.msra.mxu0 0.0
      %2799 = vmatprep.subr.mxu0 0.0
      %2800 = vmatpush1.xpose.msra.mxu0 0.0
      %2801 = vmatprep.subr.mxu0 0.0
      %2802 = vmatpush1.xpose.msra.mxu0 0.0
      %2803 = vmatprep.subr.mxu0 0.0
      %2804 = vmatpush1.xpose.msra.mxu0 0.0
      %2805 = vmatprep.subr.mxu0 0.0
      %2806 = vmatpush1.xpose.msra.mxu0 0.0
      %2807 = vmatprep.subr.mxu0 0.0
      %2808 = vmatpush1.xpose.msra.mxu0 0.0
      %2809 = vmatprep.subr.mxu0 0.0
      %2810 = vmatpush1.xpose.msra.mxu0 0.0
      %2811 = vmatprep.subr.mxu0 0.0
      %2812 = vmatpush1.xpose.msra.mxu0 0.0
      %2813 = vmatprep.mubr.f32.mxu0 0.0
      %2814 = vmatmul.mubr.f32.gmra.mrb[0].mxu0 %v2717
      %v2815 = vpop.f32.mrb[0].mxu0
      %v2816 = vadd.f32 0.0, %v2815
      %v2817 = vpop.f32.mrb[0].mxu0
      %2818 = vmatprep.mubr.f32.mxu0 0.0
      %2819 = vmatmul.mubr.f32.gmra.mrb[0].mxu0 %v2719
      %v2820 = vpop.f32.mrb[0].mxu0
      %v2821 = vadd.f32 0.0, %v2820
      %v2822 = vpop.f32.mrb[0].mxu0
      %2823 = vmatprep.mubr.f32.mxu0 0.0
      %2824 = vmatmul.mubr.f32.gmra.mrb[0].mxu0 %v2721
      %v2825 = vpop.f32.mrb[0].mxu0
      %v2826 = vadd.f32 0.0, %v2825
      %v2827 = vpop.f32.mrb[0].mxu0
      %2828 = vmatprep.mubr.f32.mxu0 0.0
      %2829 = vmatmul.mubr.f32.gmra.mrb[0].mxu0 %v2723
      %v2830 = vpop.f32.mrb[0].mxu0
      %v2831 = vadd.f32 0.0, %v2830
      %v2832 = vpop.f32.mrb[0].mxu0
      %2833 = vmatprep.mubr.f32.mxu0 0.0
      %2834 = vmatmul.mubr.f32.gmra.mrb[0].mxu0 %v2725
      %v2835 = vpop.f32.mrb[0].mxu0
      %v2836 = vadd.f32 0.0, %v2835
      %v2837 = vpop.f32.mrb[0].mxu0
      %2838 = vmatprep.mubr.f32.mxu0 0.0
      %2839 = vmatmul.mubr.f32.gmra.mrb[0].mxu0 %v2727
      %v2840 = vpop.f32.mrb[0].mxu0
      %v2841 = vadd.f32 0.0, %v2840
      %v2842 = vpop.f32.mrb[0].mxu0
      %2843 = vmatprep.mubr.f32.mxu0 0.0
      %2844 = vmatmul.mubr.f32.gmra.mrb[0].mxu0 %v2729
      %v2845 = vpop.f32.mrb[0].mxu0
      %v2846 = vadd.f32 0.0, %v2845
      %v2847 = vpop.f32.mrb[0].mxu0
      %2848 = vmatprep.mubr.f32.mxu0 0.0
      %2849 = vmatmul.mubr.f32.gmra.mrb[0].mxu0 %v2731
      %v2850 = vpop.f32.mrb[0].mxu0
      %v2851 = vadd.f32 0.0, %v2850
      %v2852 = vpop.f32.mrb[0].mxu0
      %2853 = vdwg.mxu0
      %v2854 = vsel %vm961, %v2816, -inf
      %2855 = vmax.xlane.f32.xlu0 %v2854
      %v2856 = vpop.xlane.xlu0 %2855
      %v2857 = vsel %vm961, %v2821, -inf
      %2858 = vmax.xlane.f32.xlu0 %v2857
      %v2859 = vpop.xlane.xlu0 %2858
      %v2860 = vsel %vm961, %v2826, -inf
      %2861 = vmax.xlane.f32.xlu0 %v2860
      %v2862 = vpop.xlane.xlu0 %2861
      %v2863 = vsel %vm961, %v2831, -inf
      %2864 = vmax.xlane.f32.xlu0 %v2863
      %v2865 = vpop.xlane.xlu0 %2864
      %v2866 = vsel %vm961, %v2836, -inf
      %2867 = vmax.xlane.f32.xlu0 %v2866
      %v2868 = vpop.xlane.xlu0 %2867
      %v2869 = vsel %vm961, %v2841, -inf
      %2870 = vmax.xlane.f32.xlu0 %v2869
      %v2871 = vpop.xlane.xlu0 %2870
      %v2872 = vsel %vm961, %v2846, -inf
      %2873 = vmax.xlane.f32.xlu0 %v2872
      %v2874 = vpop.xlane.xlu0 %2873
      %v2875 = vsel %vm961, %v2851, -inf
      %2876 = vmax.xlane.f32.xlu0 %v2875
      %v2877 = vpop.xlane.xlu0 %2876
      %v2878 = vsub.f32 %v2816, %v2856
      %v2879 = vsub.f32 %v2821, %v2859
      %v2880 = vsub.f32 %v2826, %v2862
      %v2881 = vsub.f32 %v2831, %v2865
      %v2882 = vsub.f32 %v2836, %v2868
      %v2883 = vsub.f32 %v2841, %v2871
      %v2884 = vsub.f32 %v2846, %v2874
      %v2885 = vsub.f32 %v2851, %v2877
      %v2886 = vmul.f32 %v2878, 1.442695
      %v2887 = vpow.pop %v2886
      %v2888 = vmul.f32 %v2879, 1.442695
      %v2889 = vpow.pop %v2888
      %v2890 = vmul.f32 %v2880, 1.442695
      %v2891 = vpow.pop %v2890
      %v2892 = vmul.f32 %v2881, 1.442695
      %v2893 = vpow.pop %v2892
      %v2894 = vmul.f32 %v2882, 1.442695
      %v2895 = vpow.pop %v2894
      %v2896 = vmul.f32 %v2883, 1.442695
      %v2897 = vpow.pop %v2896
      %v2898 = vmul.f32 %v2884, 1.442695
      %v2899 = vpow.pop %v2898
      %v2900 = vmul.f32 %v2885, 1.442695
      %v2901 = vpow.pop %v2900
      %v2902 = vsel %vm961, %v2887, 0.0
      %2903 = vadd.xlane.f32.xlu0 %v2902
      %v2904 = vpop.xlane.xlu0 %2903
      %v2905 = vsel %vm961, %v2889, 0.0
      %2906 = vadd.xlane.f32.xlu0 %v2905
      %v2907 = vpop.xlane.xlu0 %2906
      %v2908 = vsel %vm961, %v2891, 0.0
      %2909 = vadd.xlane.f32.xlu0 %v2908
      %v2910 = vpop.xlane.xlu0 %2909
      %v2911 = vsel %vm961, %v2893, 0.0
      %2912 = vadd.xlane.f32.xlu0 %v2911
      %v2913 = vpop.xlane.xlu0 %2912
      %v2914 = vsel %vm961, %v2895, 0.0
      %2915 = vadd.xlane.f32.xlu0 %v2914
      %v2916 = vpop.xlane.xlu0 %2915
      %v2917 = vsel %vm961, %v2897, 0.0
      %2918 = vadd.xlane.f32.xlu0 %v2917
      %v2919 = vpop.xlane.xlu0 %2918
      %v2920 = vsel %vm961, %v2899, 0.0
      %2921 = vadd.xlane.f32.xlu0 %v2920
      %v2922 = vpop.xlane.xlu0 %2921
      %v2923 = vsel %vm961, %v2901, 0.0
      %2924 = vadd.xlane.f32.xlu0 %v2923
      %v2925 = vpop.xlane.xlu0 %2924
      %v2926 = vrcp.pop %v2904
      %v2927 = vrcp.pop %v2907
      %v2928 = vrcp.pop %v2910
      %v2929 = vrcp.pop %v2913
      %v2930 = vrcp.pop %v2916
      %v2931 = vrcp.pop %v2919
      %v2932 = vrcp.pop %v2922
      %v2933 = vrcp.pop %v2925
      %v2934 = vmul.f32 %v2887, %v2926
      %v2935 = vmul.f32 %v2889, %v2927
      %v2936 = vmul.f32 %v2891, %v2928
      %v2937 = vmul.f32 %v2893, %v2929
      %v2938 = vmul.f32 %v2895, %v2930
      %v2939 = vmul.f32 %v2897, %v2931
      %v2940 = vmul.f32 %v2899, %v2932
      %v2941 = vmul.f32 %v2901, %v2933
      %2942 = vrot.lane.b32.xlu0 %v769, 112
      %v2943 = vpop.permute.xlu0 %2942
      %2944 = vrot.lane.b32.xlu0 %v774, 112
      %v2945 = vpop.permute.xlu0 %2944
      %2946 = vrot.lane.b32.xlu0 %v779, 112
      %v2947 = vpop.permute.xlu0 %2946
      %2948 = vrot.lane.b32.xlu0 %v784, 112
      %v2949 = vpop.permute.xlu0 %2948
      %2950 = vrot.lane.b32.xlu0 %v789, 112
      %v2951 = vpop.permute.xlu0 %2950
      %2952 = vrot.lane.b32.xlu0 %v794, 112
      %v2953 = vpop.permute.xlu0 %2952
      %2954 = vrot.lane.b32.xlu0 %v799, 112
      %v2955 = vpop.permute.xlu0 %2954
      %2956 = vrot.lane.b32.xlu0 %v804, 112
      %v2957 = vpop.permute.xlu0 %2956
      %v2967 = vsel %vm961, %v2934, 0
      %v2970 = vsel %vm961, %v2935, 0
      %v2973 = vsel %vm961, %v2936, 0
      %v2976 = vsel %vm961, %v2937, 0
      %v2979 = vsel %vm961, %v2938, 0
      %v2982 = vsel %vm961, %v2939, 0
      %v2985 = vsel %vm961, %v2940, 0
      %v2988 = vsel %vm961, %v2941, 0
      %2990 = vmatprep.subr.mxu0 0.0
      %2991 = vmatpush1.msra.mxu0 %v2943
      %2992 = vmatprep.subr.mxu0 0.0
      %2993 = vmatpush1.msra.mxu0 %v2945
      %2994 = vmatprep.subr.mxu0 0.0
      %2995 = vmatpush1.msra.mxu0 %v2947
      %2996 = vmatprep.subr.mxu0 0.0
      %2997 = vmatpush1.msra.mxu0 %v2949
      %2998 = vmatprep.subr.mxu0 0.0
      %2999 = vmatpush1.msra.mxu0 %v2951
      %3000 = vmatprep.subr.mxu0 0.0
      %3001 = vmatpush1.msra.mxu0 %v2953
      %3002 = vmatprep.subr.mxu0 0.0
      %3003 = vmatpush1.msra.mxu0 %v2955
      %3004 = vmatprep.subr.mxu0 0.0
      %3005 = vmatpush1.msra.mxu0 %v2957
      %3006 = vmatprep.subr.mxu0 0.0
      %3007 = vmatpush1.msra.mxu0 0.0
      %3008 = vmatprep.subr.mxu0 0.0
      %3009 = vmatpush1.msra.mxu0 0.0
      %3010 = vmatprep.subr.mxu0 0.0
      %3011 = vmatpush1.msra.mxu0 0.0
      %3012 = vmatprep.subr.mxu0 0.0
      %3013 = vmatpush1.msra.mxu0 0.0
      %3014 = vmatprep.subr.mxu0 0.0
      %3015 = vmatpush1.msra.mxu0 0.0
      %3016 = vmatprep.subr.mxu0 0.0
      %3017 = vmatpush1.msra.mxu0 0.0
      %3018 = vmatprep.subr.mxu0 0.0
      %3019 = vmatpush1.msra.mxu0 0.0
      %3020 = vmatprep.subr.mxu0 0.0
      %3021 = vmatpush1.msra.mxu0 0.0
      %3022 = vmatprep.subr.mxu0 0.0
      %3023 = vmatpush1.msra.mxu0 0.0
      %3024 = vmatprep.subr.mxu0 0.0
      %3025 = vmatpush1.msra.mxu0 0.0
      %3026 = vmatprep.subr.mxu0 0.0
      %3027 = vmatpush1.msra.mxu0 0.0
      %3028 = vmatprep.subr.mxu0 0.0
      %3029 = vmatpush1.msra.mxu0 0.0
      %3030 = vmatprep.subr.mxu0 0.0
      %3031 = vmatpush1.msra.mxu0 0.0
      %3032 = vmatprep.subr.mxu0 0.0
      %3033 = vmatpush1.msra.mxu0 0.0
      %3034 = vmatprep.subr.mxu0 0.0
      %3035 = vmatpush1.msra.mxu0 0.0
      %3036 = vmatprep.subr.mxu0 0.0
      %3037 = vmatpush1.msra.mxu0 0.0
      %3038 = vmatprep.subr.mxu0 0.0
      %3039 = vmatpush1.msra.mxu0 0.0
      %3040 = vmatprep.subr.mxu0 0.0
      %3041 = vmatpush1.msra.mxu0 0.0
      %3042 = vmatprep.subr.mxu0 0.0
      %3043 = vmatpush1.msra.mxu0 0.0
      %3044 = vmatprep.subr.mxu0 0.0
      %3045 = vmatpush1.msra.mxu0 0.0
      %3046 = vmatprep.subr.mxu0 0.0
      %3047 = vmatpush1.msra.mxu0 0.0
      %3048 = vmatprep.subr.mxu0 0.0
      %3049 = vmatpush1.msra.mxu0 0.0
      %3050 = vmatprep.subr.mxu0 0.0
      %3051 = vmatpush1.msra.mxu0 0.0
      %3052 = vmatprep.subr.mxu0 0.0
      %3053 = vmatpush1.msra.mxu0 0.0
      %3054 = vmatprep.mubr.f32.mxu0 0.0
      %3055 = vmatmul.mubr.f32.gmra.mrb[0].mxu0 %v2967
      %v3056 = vpop.f32.mrb[0].mxu0
      %v3057 = vadd.f32 0.0, %v3056
      %v3058 = vpop.f32.mrb[0].mxu0
      %3059 = vmatprep.mubr.f32.mxu0 0.0
      %3060 = vmatmul.mubr.f32.gmra.mrb[0].mxu0 %v2970
      %v3061 = vpop.f32.mrb[0].mxu0
      %v3062 = vadd.f32 0.0, %v3061
      %v3063 = vpop.f32.mrb[0].mxu0
      %3064 = vmatprep.mubr.f32.mxu0 0.0
      %3065 = vmatmul.mubr.f32.gmra.mrb[0].mxu0 %v2973
      %v3066 = vpop.f32.mrb[0].mxu0
      %v3067 = vadd.f32 0.0, %v3066
      %v3068 = vpop.f32.mrb[0].mxu0
      %3069 = vmatprep.mubr.f32.mxu0 0.0
      %3070 = vmatmul.mubr.f32.gmra.mrb[0].mxu0 %v2976
      %v3071 = vpop.f32.mrb[0].mxu0
      %v3072 = vadd.f32 0.0, %v3071
      %v3073 = vpop.f32.mrb[0].mxu0
      %3074 = vmatprep.mubr.f32.mxu0 0.0
      %3075 = vmatmul.mubr.f32.gmra.mrb[0].mxu0 %v2979
      %v3076 = vpop.f32.mrb[0].mxu0
      %v3077 = vadd.f32 0.0, %v3076
      %v3078 = vpop.f32.mrb[0].mxu0
      %3079 = vmatprep.mubr.f32.mxu0 0.0
      %3080 = vmatmul.mubr.f32.gmra.mrb[0].mxu0 %v2982
      %v3081 = vpop.f32.mrb[0].mxu0
      %v3082 = vadd.f32 0.0, %v3081
      %v3083 = vpop.f32.mrb[0].mxu0
      %3084 = vmatprep.mubr.f32.mxu0 0.0
      %3085 = vmatmul.mubr.f32.gmra.mrb[0].mxu0 %v2985
      %v3086 = vpop.f32.mrb[0].mxu0
      %v3087 = vadd.f32 0.0, %v3086
      %v3088 = vpop.f32.mrb[0].mxu0
      %3089 = vmatprep.mubr.f32.mxu0 0.0
      %3090 = vmatmul.mubr.f32.gmra.mrb[0].mxu0 %v2988
      %v3091 = vpop.f32.mrb[0].mxu0
      %v3092 = vadd.f32 0.0, %v3091
      %v3093 = vpop.f32.mrb[0].mxu0
      %3094 = vdwg.mxu0
      %v3095 = vmul.f32 %v1179, %v3057
      %v3096 = vmul.f32 %v1179, %v3062
      %v3097 = vmul.f32 %v1179, %v3067
      %v3098 = vmul.f32 %v1179, %v3072
      %v3099 = vmul.f32 %v1179, %v3077
      %v3100 = vmul.f32 %v1179, %v3082
      %v3101 = vmul.f32 %v1179, %v3087
      %v3102 = vmul.f32 %v1179, %v3092
      %3103 = vrot.lane.b32.xlu0 %v393, 112
      %v3104 = vpop.permute.xlu0 %3103
      %3105 = vrot.lane.b32.xlu0 %v394, 112
      %v3106 = vpop.permute.xlu0 %3105
      %3107 = vrot.lane.b32.xlu0 %v395, 112
      %v3108 = vpop.permute.xlu0 %3107
      %3109 = vrot.lane.b32.xlu0 %v396, 112
      %v3110 = vpop.permute.xlu0 %3109
      %3111 = vrot.lane.b32.xlu0 %v397, 112
      %v3112 = vpop.permute.xlu0 %3111
      %3113 = vrot.lane.b32.xlu0 %v398, 112
      %v3114 = vpop.permute.xlu0 %3113
      %3115 = vrot.lane.b32.xlu0 %v399, 112
      %v3116 = vpop.permute.xlu0 %3115
      %3117 = vrot.lane.b32.xlu0 %v400, 112
      %v3118 = vpop.permute.xlu0 %3117
      %v3127 = vadd.f32 %v3095, %v3104
      %v3128 = vadd.f32 %v3096, %v3106
      %v3129 = vadd.f32 %v3097, %v3108
      %v3130 = vadd.f32 %v3098, %v3110
      %v3131 = vadd.f32 %v3099, %v3112
      %v3132 = vadd.f32 %v3100, %v3114
      %v3133 = vadd.f32 %v3101, %v3116
      %v3134 = vadd.f32 %v3102, %v3118
      %3143 = vrot.lane.b32.xlu0 %v3127, 16
      %v3144 = vpop.permute.xlu0 %3143
      %3145 = vrot.lane.b32.xlu0 %v3128, 16
      %v3146 = vpop.permute.xlu0 %3145
      %3147 = vrot.lane.b32.xlu0 %v3129, 16
      %v3148 = vpop.permute.xlu0 %3147
      %3149 = vrot.lane.b32.xlu0 %v3130, 16
      %v3150 = vpop.permute.xlu0 %3149
      %3151 = vrot.lane.b32.xlu0 %v3131, 16
      %v3152 = vpop.permute.xlu0 %3151
      %3153 = vrot.lane.b32.xlu0 %v3132, 16
      %v3154 = vpop.permute.xlu0 %3153
      %3155 = vrot.lane.b32.xlu0 %v3133, 16
      %v3156 = vpop.permute.xlu0 %3155
      %3157 = vrot.lane.b32.xlu0 %v3134, 16
      %v3158 = vpop.permute.xlu0 %3157
      %vm3167 = vcmask 162944
      %3168 = vst.msk [vmem:[%s391] sm:$0xff] %vm3167, %v3144
      %3169 = vst.msk [vmem:[%s391 + $0x8] sm:$0xff] %vm3167, %v3146
      %3170 = vst.msk [vmem:[%s391 + $0x10] sm:$0xff] %vm3167, %v3148
      %3171 = vst.msk [vmem:[%s391 + $0x18] sm:$0xff] %vm3167, %v3150
      %3172 = vst.msk [vmem:[%s391 + $0x20] sm:$0xff] %vm3167, %v3152
      %3173 = vst.msk [vmem:[%s391 + $0x28] sm:$0xff] %vm3167, %v3154
      %3174 = vst.msk [vmem:[%s391 + $0x30] sm:$0xff] %vm3167, %v3156
      %3175 = vst.msk [vmem:[%s391 + $0x38] sm:$0xff] %vm3167, %v3158
      %3176 = vrot.lane.b32.xlu0 %v513, 108
      %v3177 = vpop.permute.xlu0 %3176
      %3178 = vrot.lane.b32.xlu0 %v518, 108
      %v3179 = vpop.permute.xlu0 %3178
      %3180 = vrot.lane.b32.xlu0 %v523, 108
      %v3181 = vpop.permute.xlu0 %3180
      %3182 = vrot.lane.b32.xlu0 %v528, 108
      %v3183 = vpop.permute.xlu0 %3182
      %3184 = vrot.lane.b32.xlu0 %v533, 108
      %v3185 = vpop.permute.xlu0 %3184
      %3186 = vrot.lane.b32.xlu0 %v538, 108
      %v3187 = vpop.permute.xlu0 %3186
      %3188 = vrot.lane.b32.xlu0 %v543, 108
      %v3189 = vpop.permute.xlu0 %3188
      %3190 = vrot.lane.b32.xlu0 %v548, 108
      %v3191 = vpop.permute.xlu0 %3190
      %3192 = vrot.lane.b32.xlu0 %v653, 108
      %v3193 = vpop.permute.xlu0 %3192
      %3194 = vrot.lane.b32.xlu0 %v658, 108
      %v3195 = vpop.permute.xlu0 %3194
      %3196 = vrot.lane.b32.xlu0 %v663, 108
      %v3197 = vpop.permute.xlu0 %3196
      %3198 = vrot.lane.b32.xlu0 %v668, 108
      %v3199 = vpop.permute.xlu0 %3198
      %3200 = vrot.lane.b32.xlu0 %v673, 108
      %v3201 = vpop.permute.xlu0 %3200
      %3202 = vrot.lane.b32.xlu0 %v678, 108
      %v3203 = vpop.permute.xlu0 %3202
      %3204 = vrot.lane.b32.xlu0 %v683, 108
      %v3205 = vpop.permute.xlu0 %3204
      %3206 = vrot.lane.b32.xlu0 %v688, 108
      %v3207 = vpop.permute.xlu0 %3206
      %v3208 = vsel %vm807, %v3177, 0
      %v3210 = vsel %vm807, %v3179, 0
      %v3212 = vsel %vm807, %v3181, 0
      %v3214 = vsel %vm807, %v3183, 0
      %v3216 = vsel %vm807, %v3185, 0
      %v3218 = vsel %vm807, %v3187, 0
      %v3220 = vsel %vm807, %v3189, 0
      %v3222 = vsel %vm807, %v3191, 0
      %v3224 = vsel %vm807, %v3193, 0
      %v3226 = vsel %vm807, %v3195, 0
      %v3228 = vsel %vm807, %v3197, 0
      %v3230 = vsel %vm807, %v3199, 0
      %v3232 = vsel %vm807, %v3201, 0
      %v3234 = vsel %vm807, %v3203, 0
      %v3236 = vsel %vm807, %v3205, 0
      %v3238 = vsel %vm807, %v3207, 0
      %3240 = vmatprep.subr.mxu0 0.0
      %3241 = vmatpush1.xpose.msra.mxu0 %v3224
      %3242 = vmatprep.subr.mxu0 0.0
      %3243 = vmatpush1.xpose.msra.mxu0 %v3226
      %3244 = vmatprep.subr.mxu0 0.0
      %3245 = vmatpush1.xpose.msra.mxu0 %v3228
      %3246 = vmatprep.subr.mxu0 0.0
      %3247 = vmatpush1.xpose.msra.mxu0 %v3230
      %3248 = vmatprep.subr.mxu0 0.0
      %3249 = vmatpush1.xpose.msra.mxu0 %v3232
      %3250 = vmatprep.subr.mxu0 0.0
      %3251 = vmatpush1.xpose.msra.mxu0 %v3234
      %3252 = vmatprep.subr.mxu0 0.0
      %3253 = vmatpush1.xpose.msra.mxu0 %v3236
      %3254 = vmatprep.subr.mxu0 0.0
      %3255 = vmatpush1.xpose.msra.mxu0 %v3238
      %3256 = vmatprep.subr.mxu0 0.0
      %3257 = vmatpush1.xpose.msra.mxu0 0.0
      %3258 = vmatprep.subr.mxu0 0.0
      %3259 = vmatpush1.xpose.msra.mxu0 0.0
      %3260 = vmatprep.subr.mxu0 0.0
      %3261 = vmatpush1.xpose.msra.mxu0 0.0
      %3262 = vmatprep.subr.mxu0 0.0
      %3263 = vmatpush1.xpose.msra.mxu0 0.0
      %3264 = vmatprep.subr.mxu0 0.0
      %3265 = vmatpush1.xpose.msra.mxu0 0.0
      %3266 = vmatprep.subr.mxu0 0.0
      %3267 = vmatpush1.xpose.msra.mxu0 0.0
      %3268 = vmatprep.subr.mxu0 0.0
      %3269 = vmatpush1.xpose.msra.mxu0 0.0
      %3270 = vmatprep.subr.mxu0 0.0
      %3271 = vmatpush1.xpose.msra.mxu0 0.0
      %3272 = vmatprep.subr.mxu0 0.0
      %3273 = vmatpush1.xpose.msra.mxu0 0.0
      %3274 = vmatprep.subr.mxu0 0.0
      %3275 = vmatpush1.xpose.msra.mxu0 0.0
      %3276 = vmatprep.subr.mxu0 0.0
      %3277 = vmatpush1.xpose.msra.mxu0 0.0
      %3278 = vmatprep.subr.mxu0 0.0
      %3279 = vmatpush1.xpose.msra.mxu0 0.0
      %3280 = vmatprep.subr.mxu0 0.0
      %3281 = vmatpush1.xpose.msra.mxu0 0.0
      %3282 = vmatprep.subr.mxu0 0.0
      %3283 = vmatpush1.xpose.msra.mxu0 0.0
      %3284 = vmatprep.subr.mxu0 0.0
      %3285 = vmatpush1.xpose.msra.mxu0 0.0
      %3286 = vmatprep.subr.mxu0 0.0
      %3287 = vmatpush1.xpose.msra.mxu0 0.0
      %3288 = vmatprep.subr.mxu0 0.0
      %3289 = vmatpush1.xpose.msra.mxu0 0.0
      %3290 = vmatprep.subr.mxu0 0.0
      %3291 = vmatpush1.xpose.msra.mxu0 0.0
      %3292 = vmatprep.subr.mxu0 0.0
      %3293 = vmatpush1.xpose.msra.mxu0 0.0
      %3294 = vmatprep.subr.mxu0 0.0
      %3295 = vmatpush1.xpose.msra.mxu0 0.0
      %3296 = vmatprep.subr.mxu0 0.0
      %3297 = vmatpush1.xpose.msra.mxu0 0.0
      %3298 = vmatprep.subr.mxu0 0.0
      %3299 = vmatpush1.xpose.msra.mxu0 0.0
      %3300 = vmatprep.subr.mxu0 0.0
      %3301 = vmatpush1.xpose.msra.mxu0 0.0
      %3302 = vmatprep.subr.mxu0 0.0
      %3303 = vmatpush1.xpose.msra.mxu0 0.0
      %3304 = vmatprep.mubr.f32.mxu0 0.0
      %3305 = vmatmul.mubr.f32.gmra.mrb[0].mxu0 %v3208
      %v3306 = vpop.f32.mrb[0].mxu0
      %v3307 = vadd.f32 0.0, %v3306
      %v3308 = vpop.f32.mrb[0].mxu0
      %3309 = vmatprep.mubr.f32.mxu0 0.0
      %3310 = vmatmul.mubr.f32.gmra.mrb[0].mxu0 %v3210
      %v3311 = vpop.f32.mrb[0].mxu0
      %v3312 = vadd.f32 0.0, %v3311
      %v3313 = vpop.f32.mrb[0].mxu0
      %3314 = vmatprep.mubr.f32.mxu0 0.0
      %3315 = vmatmul.mubr.f32.gmra.mrb[0].mxu0 %v3212
      %v3316 = vpop.f32.mrb[0].mxu0
      %v3317 = vadd.f32 0.0, %v3316
      %v3318 = vpop.f32.mrb[0].mxu0
      %3319 = vmatprep.mubr.f32.mxu0 0.0
      %3320 = vmatmul.mubr.f32.gmra.mrb[0].mxu0 %v3214
      %v3321 = vpop.f32.mrb[0].mxu0
      %v3322 = vadd.f32 0.0, %v3321
      %v3323 = vpop.f32.mrb[0].mxu0
      %3324 = vmatprep.mubr.f32.mxu0 0.0
      %3325 = vmatmul.mubr.f32.gmra.mrb[0].mxu0 %v3216
      %v3326 = vpop.f32.mrb[0].mxu0
      %v3327 = vadd.f32 0.0, %v3326
      %v3328 = vpop.f32.mrb[0].mxu0
      %3329 = vmatprep.mubr.f32.mxu0 0.0
      %3330 = vmatmul.mubr.f32.gmra.mrb[0].mxu0 %v3218
      %v3331 = vpop.f32.mrb[0].mxu0
      %v3332 = vadd.f32 0.0, %v3331
      %v3333 = vpop.f32.mrb[0].mxu0
      %3334 = vmatprep.mubr.f32.mxu0 0.0
      %3335 = vmatmul.mubr.f32.gmra.mrb[0].mxu0 %v3220
      %v3336 = vpop.f32.mrb[0].mxu0
      %v3337 = vadd.f32 0.0, %v3336
      %v3338 = vpop.f32.mrb[0].mxu0
      %3339 = vmatprep.mubr.f32.mxu0 0.0
      %3340 = vmatmul.mubr.f32.gmra.mrb[0].mxu0 %v3222
      %v3341 = vpop.f32.mrb[0].mxu0
      %v3342 = vadd.f32 0.0, %v3341
      %v3343 = vpop.f32.mrb[0].mxu0
      %3344 = vdwg.mxu0
      %v3345 = vsel %vm961, %v3307, -inf
      %3346 = vmax.xlane.f32.xlu0 %v3345
      %v3347 = vpop.xlane.xlu0 %3346
      %v3348 = vsel %vm961, %v3312, -inf
      %3349 = vmax.xlane.f32.xlu0 %v3348
      %v3350 = vpop.xlane.xlu0 %3349
      %v3351 = vsel %vm961, %v3317, -inf
      %3352 = vmax.xlane.f32.xlu0 %v3351
      %v3353 = vpop.xlane.xlu0 %3352
      %v3354 = vsel %vm961, %v3322, -inf
      %3355 = vmax.xlane.f32.xlu0 %v3354
      %v3356 = vpop.xlane.xlu0 %3355
      %v3357 = vsel %vm961, %v3327, -inf
      %3358 = vmax.xlane.f32.xlu0 %v3357
      %v3359 = vpop.xlane.xlu0 %3358
      %v3360 = vsel %vm961, %v3332, -inf
      %3361 = vmax.xlane.f32.xlu0 %v3360
      %v3362 = vpop.xlane.xlu0 %3361
      %v3363 = vsel %vm961, %v3337, -inf
      %3364 = vmax.xlane.f32.xlu0 %v3363
      %v3365 = vpop.xlane.xlu0 %3364
      %v3366 = vsel %vm961, %v3342, -inf
      %3367 = vmax.xlane.f32.xlu0 %v3366
      %v3368 = vpop.xlane.xlu0 %3367
      %v3369 = vsub.f32 %v3307, %v3347
      %v3370 = vsub.f32 %v3312, %v3350
      %v3371 = vsub.f32 %v3317, %v3353
      %v3372 = vsub.f32 %v3322, %v3356
      %v3373 = vsub.f32 %v3327, %v3359
      %v3374 = vsub.f32 %v3332, %v3362
      %v3375 = vsub.f32 %v3337, %v3365
      %v3376 = vsub.f32 %v3342, %v3368
      %v3377 = vmul.f32 %v3369, 1.442695
      %v3378 = vpow.pop %v3377
      %v3379 = vmul.f32 %v3370, 1.442695
      %v3380 = vpow.pop %v3379
      %v3381 = vmul.f32 %v3371, 1.442695
      %v3382 = vpow.pop %v3381
      %v3383 = vmul.f32 %v3372, 1.442695
      %v3384 = vpow.pop %v3383
      %v3385 = vmul.f32 %v3373, 1.442695
      %v3386 = vpow.pop %v3385
      %v3387 = vmul.f32 %v3374, 1.442695
      %v3388 = vpow.pop %v3387
      %v3389 = vmul.f32 %v3375, 1.442695
      %v3390 = vpow.pop %v3389
      %v3391 = vmul.f32 %v3376, 1.442695
      %v3392 = vpow.pop %v3391
      %v3393 = vsel %vm961, %v3378, 0.0
      %3394 = vadd.xlane.f32.xlu0 %v3393
      %v3395 = vpop.xlane.xlu0 %3394
      %v3396 = vsel %vm961, %v3380, 0.0
      %3397 = vadd.xlane.f32.xlu0 %v3396
      %v3398 = vpop.xlane.xlu0 %3397
      %v3399 = vsel %vm961, %v3382, 0.0
      %3400 = vadd.xlane.f32.xlu0 %v3399
      %v3401 = vpop.xlane.xlu0 %3400
      %v3402 = vsel %vm961, %v3384, 0.0
      %3403 = vadd.xlane.f32.xlu0 %v3402
      %v3404 = vpop.xlane.xlu0 %3403
      %v3405 = vsel %vm961, %v3386, 0.0
      %3406 = vadd.xlane.f32.xlu0 %v3405
      %v3407 = vpop.xlane.xlu0 %3406
      %v3408 = vsel %vm961, %v3388, 0.0
      %3409 = vadd.xlane.f32.xlu0 %v3408
      %v3410 = vpop.xlane.xlu0 %3409
      %v3411 = vsel %vm961, %v3390, 0.0
      %3412 = vadd.xlane.f32.xlu0 %v3411
      %v3413 = vpop.xlane.xlu0 %3412
      %v3414 = vsel %vm961, %v3392, 0.0
      %3415 = vadd.xlane.f32.xlu0 %v3414
      %v3416 = vpop.xlane.xlu0 %3415
      %v3417 = vrcp.pop %v3395
      %v3418 = vrcp.pop %v3398
      %v3419 = vrcp.pop %v3401
      %v3420 = vrcp.pop %v3404
      %v3421 = vrcp.pop %v3407
      %v3422 = vrcp.pop %v3410
      %v3423 = vrcp.pop %v3413
      %v3424 = vrcp.pop %v3416
      %v3425 = vmul.f32 %v3378, %v3417
      %v3426 = vmul.f32 %v3380, %v3418
      %v3427 = vmul.f32 %v3382, %v3419
      %v3428 = vmul.f32 %v3384, %v3420
      %v3429 = vmul.f32 %v3386, %v3421
      %v3430 = vmul.f32 %v3388, %v3422
      %v3431 = vmul.f32 %v3390, %v3423
      %v3432 = vmul.f32 %v3392, %v3424
      %3433 = vrot.lane.b32.xlu0 %v769, 108
      %v3434 = vpop.permute.xlu0 %3433
      %3435 = vrot.lane.b32.xlu0 %v774, 108
      %v3436 = vpop.permute.xlu0 %3435
      %3437 = vrot.lane.b32.xlu0 %v779, 108
      %v3438 = vpop.permute.xlu0 %3437
      %3439 = vrot.lane.b32.xlu0 %v784, 108
      %v3440 = vpop.permute.xlu0 %3439
      %3441 = vrot.lane.b32.xlu0 %v789, 108
      %v3442 = vpop.permute.xlu0 %3441
      %3443 = vrot.lane.b32.xlu0 %v794, 108
      %v3444 = vpop.permute.xlu0 %3443
      %3445 = vrot.lane.b32.xlu0 %v799, 108
      %v3446 = vpop.permute.xlu0 %3445
      %3447 = vrot.lane.b32.xlu0 %v804, 108
      %v3448 = vpop.permute.xlu0 %3447
      %v3458 = vsel %vm961, %v3425, 0
      %v3461 = vsel %vm961, %v3426, 0
      %v3464 = vsel %vm961, %v3427, 0
      %v3467 = vsel %vm961, %v3428, 0
      %v3470 = vsel %vm961, %v3429, 0
      %v3473 = vsel %vm961, %v3430, 0
      %v3476 = vsel %vm961, %v3431, 0
      %v3479 = vsel %vm961, %v3432, 0
      %3481 = vmatprep.subr.mxu0 0.0
      %3482 = vmatpush1.msra.mxu0 %v3434
      %3483 = vmatprep.subr.mxu0 0.0
      %3484 = vmatpush1.msra.mxu0 %v3436
      %3485 = vmatprep.subr.mxu0 0.0
      %3486 = vmatpush1.msra.mxu0 %v3438
      %3487 = vmatprep.subr.mxu0 0.0
      %3488 = vmatpush1.msra.mxu0 %v3440
      %3489 = vmatprep.subr.mxu0 0.0
      %3490 = vmatpush1.msra.mxu0 %v3442
      %3491 = vmatprep.subr.mxu0 0.0
      %3492 = vmatpush1.msra.mxu0 %v3444
      %3493 = vmatprep.subr.mxu0 0.0
      %3494 = vmatpush1.msra.mxu0 %v3446
      %3495 = vmatprep.subr.mxu0 0.0
      %3496 = vmatpush1.msra.mxu0 %v3448
      %3497 = vmatprep.subr.mxu0 0.0
      %3498 = vmatpush1.msra.mxu0 0.0
      %3499 = vmatprep.subr.mxu0 0.0
      %3500 = vmatpush1.msra.mxu0 0.0
      %3501 = vmatprep.subr.mxu0 0.0
      %3502 = vmatpush1.msra.mxu0 0.0
      %3503 = vmatprep.subr.mxu0 0.0
      %3504 = vmatpush1.msra.mxu0 0.0
      %3505 = vmatprep.subr.mxu0 0.0
      %3506 = vmatpush1.msra.mxu0 0.0
      %3507 = vmatprep.subr.mxu0 0.0
      %3508 = vmatpush1.msra.mxu0 0.0
      %3509 = vmatprep.subr.mxu0 0.0
      %3510 = vmatpush1.msra.mxu0 0.0
      %3511 = vmatprep.subr.mxu0 0.0
      %3512 = vmatpush1.msra.mxu0 0.0
      %3513 = vmatprep.subr.mxu0 0.0
      %3514 = vmatpush1.msra.mxu0 0.0
      %3515 = vmatprep.subr.mxu0 0.0
      %3516 = vmatpush1.msra.mxu0 0.0
      %3517 = vmatprep.subr.mxu0 0.0
      %3518 = vmatpush1.msra.mxu0 0.0
      %3519 = vmatprep.subr.mxu0 0.0
      %3520 = vmatpush1.msra.mxu0 0.0
      %3521 = vmatprep.subr.mxu0 0.0
      %3522 = vmatpush1.msra.mxu0 0.0
      %3523 = vmatprep.subr.mxu0 0.0
      %3524 = vmatpush1.msra.mxu0 0.0
      %3525 = vmatprep.subr.mxu0 0.0
      %3526 = vmatpush1.msra.mxu0 0.0
      %3527 = vmatprep.subr.mxu0 0.0
      %3528 = vmatpush1.msra.mxu0 0.0
      %3529 = vmatprep.subr.mxu0 0.0
      %3530 = vmatpush1.msra.mxu0 0.0
      %3531 = vmatprep.subr.mxu0 0.0
      %3532 = vmatpush1.msra.mxu0 0.0
      %3533 = vmatprep.subr.mxu0 0.0
      %3534 = vmatpush1.msra.mxu0 0.0
      %3535 = vmatprep.subr.mxu0 0.0
      %3536 = vmatpush1.msra.mxu0 0.0
      %3537 = vmatprep.subr.mxu0 0.0
      %3538 = vmatpush1.msra.mxu0 0.0
      %3539 = vmatprep.subr.mxu0 0.0
      %3540 = vmatpush1.msra.mxu0 0.0
      %3541 = vmatprep.subr.mxu0 0.0
      %3542 = vmatpush1.msra.mxu0 0.0
      %3543 = vmatprep.subr.mxu0 0.0
      %3544 = vmatpush1.msra.mxu0 0.0
      %3545 = vmatprep.mubr.f32.mxu0 0.0
      %3546 = vmatmul.mubr.f32.gmra.mrb[0].mxu0 %v3458
      %v3547 = vpop.f32.mrb[0].mxu0
      %v3548 = vadd.f32 0.0, %v3547
      %v3549 = vpop.f32.mrb[0].mxu0
      %3550 = vmatprep.mubr.f32.mxu0 0.0
      %3551 = vmatmul.mubr.f32.gmra.mrb[0].mxu0 %v3461
      %v3552 = vpop.f32.mrb[0].mxu0
      %v3553 = vadd.f32 0.0, %v3552
      %v3554 = vpop.f32.mrb[0].mxu0
      %3555 = vmatprep.mubr.f32.mxu0 0.0
      %3556 = vmatmul.mubr.f32.gmra.mrb[0].mxu0 %v3464
      %v3557 = vpop.f32.mrb[0].mxu0
      %v3558 = vadd.f32 0.0, %v3557
      %v3559 = vpop.f32.mrb[0].mxu0
      %3560 = vmatprep.mubr.f32.mxu0 0.0
      %3561 = vmatmul.mubr.f32.gmra.mrb[0].mxu0 %v3467
      %v3562 = vpop.f32.mrb[0].mxu0
      %v3563 = vadd.f32 0.0, %v3562
      %v3564 = vpop.f32.mrb[0].mxu0
      %3565 = vmatprep.mubr.f32.mxu0 0.0
      %3566 = vmatmul.mubr.f32.gmra.mrb[0].mxu0 %v3470
      %v3567 = vpop.f32.mrb[0].mxu0
      %v3568 = vadd.f32 0.0, %v3567
      %v3569 = vpop.f32.mrb[0].mxu0
      %3570 = vmatprep.mubr.f32.mxu0 0.0
      %3571 = vmatmul.mubr.f32.gmra.mrb[0].mxu0 %v3473
      %v3572 = vpop.f32.mrb[0].mxu0
      %v3573 = vadd.f32 0.0, %v3572
      %v3574 = vpop.f32.mrb[0].mxu0
      %3575 = vmatprep.mubr.f32.mxu0 0.0
      %3576 = vmatmul.mubr.f32.gmra.mrb[0].mxu0 %v3476
      %v3577 = vpop.f32.mrb[0].mxu0
      %v3578 = vadd.f32 0.0, %v3577
      %v3579 = vpop.f32.mrb[0].mxu0
      %3580 = vmatprep.mubr.f32.mxu0 0.0
      %3581 = vmatmul.mubr.f32.gmra.mrb[0].mxu0 %v3479
      %v3582 = vpop.f32.mrb[0].mxu0
      %v3583 = vadd.f32 0.0, %v3582
      %v3584 = vpop.f32.mrb[0].mxu0
      %3585 = vdwg.mxu0
      %v3586 = vmul.f32 %v1179, %v3548
      %v3587 = vmul.f32 %v1179, %v3553
      %v3588 = vmul.f32 %v1179, %v3558
      %v3589 = vmul.f32 %v1179, %v3563
      %v3590 = vmul.f32 %v1179, %v3568
      %v3591 = vmul.f32 %v1179, %v3573
      %v3592 = vmul.f32 %v1179, %v3578
      %v3593 = vmul.f32 %v1179, %v3583
      %3594 = vrot.lane.b32.xlu0 %v393, 108
      %v3595 = vpop.permute.xlu0 %3594
      %3596 = vrot.lane.b32.xlu0 %v394, 108
      %v3597 = vpop.permute.xlu0 %3596
      %3598 = vrot.lane.b32.xlu0 %v395, 108
      %v3599 = vpop.permute.xlu0 %3598
      %3600 = vrot.lane.b32.xlu0 %v396, 108
      %v3601 = vpop.permute.xlu0 %3600
      %3602 = vrot.lane.b32.xlu0 %v397, 108
      %v3603 = vpop.permute.xlu0 %3602
      %3604 = vrot.lane.b32.xlu0 %v398, 108
      %v3605 = vpop.permute.xlu0 %3604
      %3606 = vrot.lane.b32.xlu0 %v399, 108
      %v3607 = vpop.permute.xlu0 %3606
      %3608 = vrot.lane.b32.xlu0 %v400, 108
      %v3609 = vpop.permute.xlu0 %3608
      %v3618 = vadd.f32 %v3586, %v3595
      %v3619 = vadd.f32 %v3587, %v3597
      %v3620 = vadd.f32 %v3588, %v3599
      %v3621 = vadd.f32 %v3589, %v3601
      %v3622 = vadd.f32 %v3590, %v3603
      %v3623 = vadd.f32 %v3591, %v3605
      %v3624 = vadd.f32 %v3592, %v3607
      %v3625 = vadd.f32 %v3593, %v3609
      %3634 = vrot.lane.b32.xlu0 %v3618, 20
      %v3635 = vpop.permute.xlu0 %3634
      %3636 = vrot.lane.b32.xlu0 %v3619, 20
      %v3637 = vpop.permute.xlu0 %3636
      %3638 = vrot.lane.b32.xlu0 %v3620, 20
      %v3639 = vpop.permute.xlu0 %3638
      %3640 = vrot.lane.b32.xlu0 %v3621, 20
      %v3641 = vpop.permute.xlu0 %3640
      %3642 = vrot.lane.b32.xlu0 %v3622, 20
      %v3643 = vpop.permute.xlu0 %3642
      %3644 = vrot.lane.b32.xlu0 %v3623, 20
      %v3645 = vpop.permute.xlu0 %3644
      %3646 = vrot.lane.b32.xlu0 %v3624, 20
      %v3647 = vpop.permute.xlu0 %3646
      %3648 = vrot.lane.b32.xlu0 %v3625, 20
      %v3649 = vpop.permute.xlu0 %3648
      %vm3658 = vcmask 195744
      %3659 = vst.msk [vmem:[%s391] sm:$0xff] %vm3658, %v3635
      %3660 = vst.msk [vmem:[%s391 + $0x8] sm:$0xff] %vm3658, %v3637
      %3661 = vst.msk [vmem:[%s391 + $0x10] sm:$0xff] %vm3658, %v3639
      %3662 = vst.msk [vmem:[%s391 + $0x18] sm:$0xff] %vm3658, %v3641
      %3663 = vst.msk [vmem:[%s391 + $0x20] sm:$0xff] %vm3658, %v3643
      %3664 = vst.msk [vmem:[%s391 + $0x28] sm:$0xff] %vm3658, %v3645
      %3665 = vst.msk [vmem:[%s391 + $0x30] sm:$0xff] %vm3658, %v3647
      %3666 = vst.msk [vmem:[%s391 + $0x38] sm:$0xff] %vm3658, %v3649
      %3667 = vrot.lane.b32.xlu0 %v513, 104
      %v3668 = vpop.permute.xlu0 %3667
      %3669 = vrot.lane.b32.xlu0 %v518, 104
      %v3670 = vpop.permute.xlu0 %3669
      %3671 = vrot.lane.b32.xlu0 %v523, 104
      %v3672 = vpop.permute.xlu0 %3671
      %3673 = vrot.lane.b32.xlu0 %v528, 104
      %v3674 = vpop.permute.xlu0 %3673
      %3675 = vrot.lane.b32.xlu0 %v533, 104
      %v3676 = vpop.permute.xlu0 %3675
      %3677 = vrot.lane.b32.xlu0 %v538, 104
      %v3678 = vpop.permute.xlu0 %3677
      %3679 = vrot.lane.b32.xlu0 %v543, 104
      %v3680 = vpop.permute.xlu0 %3679
      %3681 = vrot.lane.b32.xlu0 %v548, 104
      %v3682 = vpop.permute.xlu0 %3681
      %3683 = vrot.lane.b32.xlu0 %v653, 104
      %v3684 = vpop.permute.xlu0 %3683
      %3685 = vrot.lane.b32.xlu0 %v658, 104
      %v3686 = vpop.permute.xlu0 %3685
      %3687 = vrot.lane.b32.xlu0 %v663, 104
      %v3688 = vpop.permute.xlu0 %3687
      %3689 = vrot.lane.b32.xlu0 %v668, 104
      %v3690 = vpop.permute.xlu0 %3689
      %3691 = vrot.lane.b32.xlu0 %v673, 104
      %v3692 = vpop.permute.xlu0 %3691
      %3693 = vrot.lane.b32.xlu0 %v678, 104
      %v3694 = vpop.permute.xlu0 %3693
      %3695 = vrot.lane.b32.xlu0 %v683, 104
      %v3696 = vpop.permute.xlu0 %3695
      %3697 = vrot.lane.b32.xlu0 %v688, 104
      %v3698 = vpop.permute.xlu0 %3697
      %v3699 = vsel %vm807, %v3668, 0
      %v3701 = vsel %vm807, %v3670, 0
      %v3703 = vsel %vm807, %v3672, 0
      %v3705 = vsel %vm807, %v3674, 0
      %v3707 = vsel %vm807, %v3676, 0
      %v3709 = vsel %vm807, %v3678, 0
      %v3711 = vsel %vm807, %v3680, 0
      %v3713 = vsel %vm807, %v3682, 0
      %v3715 = vsel %vm807, %v3684, 0
      %v3717 = vsel %vm807, %v3686, 0
      %v3719 = vsel %vm807, %v3688, 0
      %v3721 = vsel %vm807, %v3690, 0
      %v3723 = vsel %vm807, %v3692, 0
      %v3725 = vsel %vm807, %v3694, 0
      %v3727 = vsel %vm807, %v3696, 0
      %v3729 = vsel %vm807, %v3698, 0
      %3731 = vmatprep.subr.mxu0 0.0
      %3732 = vmatpush1.xpose.msra.mxu0 %v3715
      %3733 = vmatprep.subr.mxu0 0.0
      %3734 = vmatpush1.xpose.msra.mxu0 %v3717
      %3735 = vmatprep.subr.mxu0 0.0
      %3736 = vmatpush1.xpose.msra.mxu0 %v3719
      %3737 = vmatprep.subr.mxu0 0.0
      %3738 = vmatpush1.xpose.msra.mxu0 %v3721
      %3739 = vmatprep.subr.mxu0 0.0
      %3740 = vmatpush1.xpose.msra.mxu0 %v3723
      %3741 = vmatprep.subr.mxu0 0.0
      %3742 = vmatpush1.xpose.msra.mxu0 %v3725
      %3743 = vmatprep.subr.mxu0 0.0
      %3744 = vmatpush1.xpose.msra.mxu0 %v3727
      %3745 = vmatprep.subr.mxu0 0.0
      %3746 = vmatpush1.xpose.msra.mxu0 %v3729
      %3747 = vmatprep.subr.mxu0 0.0
      %3748 = vmatpush1.xpose.msra.mxu0 0.0
      %3749 = vmatprep.subr.mxu0 0.0
      %3750 = vmatpush1.xpose.msra.mxu0 0.0
      %3751 = vmatprep.subr.mxu0 0.0
      %3752 = vmatpush1.xpose.msra.mxu0 0.0
      %3753 = vmatprep.subr.mxu0 0.0
      %3754 = vmatpush1.xpose.msra.mxu0 0.0
      %3755 = vmatprep.subr.mxu0 0.0
      %3756 = vmatpush1.xpose.msra.mxu0 0.0
      %3757 = vmatprep.subr.mxu0 0.0
      %3758 = vmatpush1.xpose.msra.mxu0 0.0
      %3759 = vmatprep.subr.mxu0 0.0
      %3760 = vmatpush1.xpose.msra.mxu0 0.0
      %3761 = vmatprep.subr.mxu0 0.0
      %3762 = vmatpush1.xpose.msra.mxu0 0.0
      %3763 = vmatprep.subr.mxu0 0.0
      %3764 = vmatpush1.xpose.msra.mxu0 0.0
      %3765 = vmatprep.subr.mxu0 0.0
      %3766 = vmatpush1.xpose.msra.mxu0 0.0
      %3767 = vmatprep.subr.mxu0 0.0
      %3768 = vmatpush1.xpose.msra.mxu0 0.0
      %3769 = vmatprep.subr.mxu0 0.0
      %3770 = vmatpush1.xpose.msra.mxu0 0.0
      %3771 = vmatprep.subr.mxu0 0.0
      %3772 = vmatpush1.xpose.msra.mxu0 0.0
      %3773 = vmatprep.subr.mxu0 0.0
      %3774 = vmatpush1.xpose.msra.mxu0 0.0
      %3775 = vmatprep.subr.mxu0 0.0
      %3776 = vmatpush1.xpose.msra.mxu0 0.0
      %3777 = vmatprep.subr.mxu0 0.0
      %3778 = vmatpush1.xpose.msra.mxu0 0.0
      %3779 = vmatprep.subr.mxu0 0.0
      %3780 = vmatpush1.xpose.msra.mxu0 0.0
      %3781 = vmatprep.subr.mxu0 0.0
      %3782 = vmatpush1.xpose.msra.mxu0 0.0
      %3783 = vmatprep.subr.mxu0 0.0
      %3784 = vmatpush1.xpose.msra.mxu0 0.0
      %3785 = vmatprep.subr.mxu0 0.0
      %3786 = vmatpush1.xpose.msra.mxu0 0.0
      %3787 = vmatprep.subr.mxu0 0.0
      %3788 = vmatpush1.xpose.msra.mxu0 0.0
      %3789 = vmatprep.subr.mxu0 0.0
      %3790 = vmatpush1.xpose.msra.mxu0 0.0
      %3791 = vmatprep.subr.mxu0 0.0
      %3792 = vmatpush1.xpose.msra.mxu0 0.0
      %3793 = vmatprep.subr.mxu0 0.0
      %3794 = vmatpush1.xpose.msra.mxu0 0.0
      %3795 = vmatprep.mubr.f32.mxu0 0.0
      %3796 = vmatmul.mubr.f32.gmra.mrb[0].mxu0 %v3699
      %v3797 = vpop.f32.mrb[0].mxu0
      %v3798 = vadd.f32 0.0, %v3797
      %v3799 = vpop.f32.mrb[0].mxu0
      %3800 = vmatprep.mubr.f32.mxu0 0.0
      %3801 = vmatmul.mubr.f32.gmra.mrb[0].mxu0 %v3701
      %v3802 = vpop.f32.mrb[0].mxu0
      %v3803 = vadd.f32 0.0, %v3802
      %v3804 = vpop.f32.mrb[0].mxu0
      %3805 = vmatprep.mubr.f32.mxu0 0.0
      %3806 = vmatmul.mubr.f32.gmra.mrb[0].mxu0 %v3703
      %v3807 = vpop.f32.mrb[0].mxu0
      %v3808 = vadd.f32 0.0, %v3807
      %v3809 = vpop.f32.mrb[0].mxu0
      %3810 = vmatprep.mubr.f32.mxu0 0.0
      %3811 = vmatmul.mubr.f32.gmra.mrb[0].mxu0 %v3705
      %v3812 = vpop.f32.mrb[0].mxu0
      %v3813 = vadd.f32 0.0, %v3812
      %v3814 = vpop.f32.mrb[0].mxu0
      %3815 = vmatprep.mubr.f32.mxu0 0.0
      %3816 = vmatmul.mubr.f32.gmra.mrb[0].mxu0 %v3707
      %v3817 = vpop.f32.mrb[0].mxu0
      %v3818 = vadd.f32 0.0, %v3817
      %v3819 = vpop.f32.mrb[0].mxu0
      %3820 = vmatprep.mubr.f32.mxu0 0.0
      %3821 = vmatmul.mubr.f32.gmra.mrb[0].mxu0 %v3709
      %v3822 = vpop.f32.mrb[0].mxu0
      %v3823 = vadd.f32 0.0, %v3822
      %v3824 = vpop.f32.mrb[0].mxu0
      %3825 = vmatprep.mubr.f32.mxu0 0.0
      %3826 = vmatmul.mubr.f32.gmra.mrb[0].mxu0 %v3711
      %v3827 = vpop.f32.mrb[0].mxu0
      %v3828 = vadd.f32 0.0, %v3827
      %v3829 = vpop.f32.mrb[0].mxu0
      %3830 = vmatprep.mubr.f32.mxu0 0.0
      %3831 = vmatmul.mubr.f32.gmra.mrb[0].mxu0 %v3713
      %v3832 = vpop.f32.mrb[0].mxu0
      %v3833 = vadd.f32 0.0, %v3832
      %v3834 = vpop.f32.mrb[0].mxu0
      %3835 = vdwg.mxu0
      %v3836 = vsel %vm961, %v3798, -inf
      %3837 = vmax.xlane.f32.xlu0 %v3836
      %v3838 = vpop.xlane.xlu0 %3837
      %v3839 = vsel %vm961, %v3803, -inf
      %3840 = vmax.xlane.f32.xlu0 %v3839
      %v3841 = vpop.xlane.xlu0 %3840
      %v3842 = vsel %vm961, %v3808, -inf
      %3843 = vmax.xlane.f32.xlu0 %v3842
      %v3844 = vpop.xlane.xlu0 %3843
      %v3845 = vsel %vm961, %v3813, -inf
      %3846 = vmax.xlane.f32.xlu0 %v3845
      %v3847 = vpop.xlane.xlu0 %3846
      %v3848 = vsel %vm961, %v3818, -inf
      %3849 = vmax.xlane.f32.xlu0 %v3848
      %v3850 = vpop.xlane.xlu0 %3849
      %v3851 = vsel %vm961, %v3823, -inf
      %3852 = vmax.xlane.f32.xlu0 %v3851
      %v3853 = vpop.xlane.xlu0 %3852
      %v3854 = vsel %vm961, %v3828, -inf
      %3855 = vmax.xlane.f32.xlu0 %v3854
      %v3856 = vpop.xlane.xlu0 %3855
      %v3857 = vsel %vm961, %v3833, -inf
      %3858 = vmax.xlane.f32.xlu0 %v3857
      %v3859 = vpop.xlane.xlu0 %3858
      %v3860 = vsub.f32 %v3798, %v3838
      %v3861 = vsub.f32 %v3803, %v3841
      %v3862 = vsub.f32 %v3808, %v3844
      %v3863 = vsub.f32 %v3813, %v3847
      %v3864 = vsub.f32 %v3818, %v3850
      %v3865 = vsub.f32 %v3823, %v3853
      %v3866 = vsub.f32 %v3828, %v3856
      %v3867 = vsub.f32 %v3833, %v3859
      %v3868 = vmul.f32 %v3860, 1.442695
      %v3869 = vpow.pop %v3868
      %v3870 = vmul.f32 %v3861, 1.442695
      %v3871 = vpow.pop %v3870
      %v3872 = vmul.f32 %v3862, 1.442695
      %v3873 = vpow.pop %v3872
      %v3874 = vmul.f32 %v3863, 1.442695
      %v3875 = vpow.pop %v3874
      %v3876 = vmul.f32 %v3864, 1.442695
      %v3877 = vpow.pop %v3876
      %v3878 = vmul.f32 %v3865, 1.442695
      %v3879 = vpow.pop %v3878
      %v3880 = vmul.f32 %v3866, 1.442695
      %v3881 = vpow.pop %v3880
      %v3882 = vmul.f32 %v3867, 1.442695
      %v3883 = vpow.pop %v3882
      %v3884 = vsel %vm961, %v3869, 0.0
      %3885 = vadd.xlane.f32.xlu0 %v3884
      %v3886 = vpop.xlane.xlu0 %3885
      %v3887 = vsel %vm961, %v3871, 0.0
      %3888 = vadd.xlane.f32.xlu0 %v3887
      %v3889 = vpop.xlane.xlu0 %3888
      %v3890 = vsel %vm961, %v3873, 0.0
      %3891 = vadd.xlane.f32.xlu0 %v3890
      %v3892 = vpop.xlane.xlu0 %3891
      %v3893 = vsel %vm961, %v3875, 0.0
      %3894 = vadd.xlane.f32.xlu0 %v3893
      %v3895 = vpop.xlane.xlu0 %3894
      %v3896 = vsel %vm961, %v3877, 0.0
      %3897 = vadd.xlane.f32.xlu0 %v3896
      %v3898 = vpop.xlane.xlu0 %3897
      %v3899 = vsel %vm961, %v3879, 0.0
      %3900 = vadd.xlane.f32.xlu0 %v3899
      %v3901 = vpop.xlane.xlu0 %3900
      %v3902 = vsel %vm961, %v3881, 0.0
      %3903 = vadd.xlane.f32.xlu0 %v3902
      %v3904 = vpop.xlane.xlu0 %3903
      %v3905 = vsel %vm961, %v3883, 0.0
      %3906 = vadd.xlane.f32.xlu0 %v3905
      %v3907 = vpop.xlane.xlu0 %3906
      %v3908 = vrcp.pop %v3886
      %v3909 = vrcp.pop %v3889
      %v3910 = vrcp.pop %v3892
      %v3911 = vrcp.pop %v3895
      %v3912 = vrcp.pop %v3898
      %v3913 = vrcp.pop %v3901
      %v3914 = vrcp.pop %v3904
      %v3915 = vrcp.pop %v3907
      %v3916 = vmul.f32 %v3869, %v3908
      %v3917 = vmul.f32 %v3871, %v3909
      %v3918 = vmul.f32 %v3873, %v3910
      %v3919 = vmul.f32 %v3875, %v3911
      %v3920 = vmul.f32 %v3877, %v3912
      %v3921 = vmul.f32 %v3879, %v3913
      %v3922 = vmul.f32 %v3881, %v3914
      %v3923 = vmul.f32 %v3883, %v3915
      %3924 = vrot.lane.b32.xlu0 %v769, 104
      %v3925 = vpop.permute.xlu0 %3924
      %3926 = vrot.lane.b32.xlu0 %v774, 104
      %v3927 = vpop.permute.xlu0 %3926
      %3928 = vrot.lane.b32.xlu0 %v779, 104
      %v3929 = vpop.permute.xlu0 %3928
      %3930 = vrot.lane.b32.xlu0 %v784, 104
      %v3931 = vpop.permute.xlu0 %3930
      %3932 = vrot.lane.b32.xlu0 %v789, 104
      %v3933 = vpop.permute.xlu0 %3932
      %3934 = vrot.lane.b32.xlu0 %v794, 104
      %v3935 = vpop.permute.xlu0 %3934
      %3936 = vrot.lane.b32.xlu0 %v799, 104
      %v3937 = vpop.permute.xlu0 %3936
      %3938 = vrot.lane.b32.xlu0 %v804, 104
      %v3939 = vpop.permute.xlu0 %3938
      %v3949 = vsel %vm961, %v3916, 0
      %v3952 = vsel %vm961, %v3917, 0
      %v3955 = vsel %vm961, %v3918, 0
      %v3958 = vsel %vm961, %v3919, 0
      %v3961 = vsel %vm961, %v3920, 0
      %v3964 = vsel %vm961, %v3921, 0
      %v3967 = vsel %vm961, %v3922, 0
      %v3970 = vsel %vm961, %v3923, 0
      %3972 = vmatprep.subr.mxu0 0.0
      %3973 = vmatpush1.msra.mxu0 %v3925
      %3974 = vmatprep.subr.mxu0 0.0
      %3975 = vmatpush1.msra.mxu0 %v3927
      %3976 = vmatprep.subr.mxu0 0.0
      %3977 = vmatpush1.msra.mxu0 %v3929
      %3978 = vmatprep.subr.mxu0 0.0
      %3979 = vmatpush1.msra.mxu0 %v3931
      %3980 = vmatprep.subr.mxu0 0.0
      %3981 = vmatpush1.msra.mxu0 %v3933
      %3982 = vmatprep.subr.mxu0 0.0
      %3983 = vmatpush1.msra.mxu0 %v3935
      %3984 = vmatprep.subr.mxu0 0.0
      %3985 = vmatpush1.msra.mxu0 %v3937
      %3986 = vmatprep.subr.mxu0 0.0
      %3987 = vmatpush1.msra.mxu0 %v3939
      %3988 = vmatprep.subr.mxu0 0.0
      %3989 = vmatpush1.msra.mxu0 0.0
      %3990 = vmatprep.subr.mxu0 0.0
      %3991 = vmatpush1.msra.mxu0 0.0
      %3992 = vmatprep.subr.mxu0 0.0
      %3993 = vmatpush1.msra.mxu0 0.0
      %3994 = vmatprep.subr.mxu0 0.0
      %3995 = vmatpush1.msra.mxu0 0.0
      %3996 = vmatprep.subr.mxu0 0.0
      %3997 = vmatpush1.msra.mxu0 0.0
      %3998 = vmatprep.subr.mxu0 0.0
      %3999 = vmatpush1.msra.mxu0 0.0
      %4000 = vmatprep.subr.mxu0 0.0
      %4001 = vmatpush1.msra.mxu0 0.0
      %4002 = vmatprep.subr.mxu0 0.0
      %4003 = vmatpush1.msra.mxu0 0.0
      %4004 = vmatprep.subr.mxu0 0.0
      %4005 = vmatpush1.msra.mxu0 0.0
      %4006 = vmatprep.subr.mxu0 0.0
      %4007 = vmatpush1.msra.mxu0 0.0
      %4008 = vmatprep.subr.mxu0 0.0
      %4009 = vmatpush1.msra.mxu0 0.0
      %4010 = vmatprep.subr.mxu0 0.0
      %4011 = vmatpush1.msra.mxu0 0.0
      %4012 = vmatprep.subr.mxu0 0.0
      %4013 = vmatpush1.msra.mxu0 0.0
      %4014 = vmatprep.subr.mxu0 0.0
      %4015 = vmatpush1.msra.mxu0 0.0
      %4016 = vmatprep.subr.mxu0 0.0
      %4017 = vmatpush1.msra.mxu0 0.0
      %4018 = vmatprep.subr.mxu0 0.0
      %4019 = vmatpush1.msra.mxu0 0.0
      %4020 = vmatprep.subr.mxu0 0.0
      %4021 = vmatpush1.msra.mxu0 0.0
      %4022 = vmatprep.subr.mxu0 0.0
      %4023 = vmatpush1.msra.mxu0 0.0
      %4024 = vmatprep.subr.mxu0 0.0
      %4025 = vmatpush1.msra.mxu0 0.0
      %4026 = vmatprep.subr.mxu0 0.0
      %4027 = vmatpush1.msra.mxu0 0.0
      %4028 = vmatprep.subr.mxu0 0.0
      %4029 = vmatpush1.msra.mxu0 0.0
      %4030 = vmatprep.subr.mxu0 0.0
      %4031 = vmatpush1.msra.mxu0 0.0
      %4032 = vmatprep.subr.mxu0 0.0
      %4033 = vmatpush1.msra.mxu0 0.0
      %4034 = vmatprep.subr.mxu0 0.0
      %4035 = vmatpush1.msra.mxu0 0.0
      %4036 = vmatprep.mubr.f32.mxu0 0.0
      %4037 = vmatmul.mubr.f32.gmra.mrb[0].mxu0 %v3949
      %v4038 = vpop.f32.mrb[0].mxu0
      %v4039 = vadd.f32 0.0, %v4038
      %v4040 = vpop.f32.mrb[0].mxu0
      %4041 = vmatprep.mubr.f32.mxu0 0.0
      %4042 = vmatmul.mubr.f32.gmra.mrb[0].mxu0 %v3952
      %v4043 = vpop.f32.mrb[0].mxu0
      %v4044 = vadd.f32 0.0, %v4043
      %v4045 = vpop.f32.mrb[0].mxu0
      %4046 = vmatprep.mubr.f32.mxu0 0.0
      %4047 = vmatmul.mubr.f32.gmra.mrb[0].mxu0 %v3955
      %v4048 = vpop.f32.mrb[0].mxu0
      %v4049 = vadd.f32 0.0, %v4048
      %v4050 = vpop.f32.mrb[0].mxu0
      %4051 = vmatprep.mubr.f32.mxu0 0.0
      %4052 = vmatmul.mubr.f32.gmra.mrb[0].mxu0 %v3958
      %v4053 = vpop.f32.mrb[0].mxu0
      %v4054 = vadd.f32 0.0, %v4053
      %v4055 = vpop.f32.mrb[0].mxu0
      %4056 = vmatprep.mubr.f32.mxu0 0.0
      %4057 = vmatmul.mubr.f32.gmra.mrb[0].mxu0 %v3961
      %v4058 = vpop.f32.mrb[0].mxu0
      %v4059 = vadd.f32 0.0, %v4058
      %v4060 = vpop.f32.mrb[0].mxu0
      %4061 = vmatprep.mubr.f32.mxu0 0.0
      %4062 = vmatmul.mubr.f32.gmra.mrb[0].mxu0 %v3964
      %v4063 = vpop.f32.mrb[0].mxu0
      %v4064 = vadd.f32 0.0, %v4063
      %v4065 = vpop.f32.mrb[0].mxu0
      %4066 = vmatprep.mubr.f32.mxu0 0.0
      %4067 = vmatmul.mubr.f32.gmra.mrb[0].mxu0 %v3967
      %v4068 = vpop.f32.mrb[0].mxu0
      %v4069 = vadd.f32 0.0, %v4068
      %v4070 = vpop.f32.mrb[0].mxu0
      %4071 = vmatprep.mubr.f32.mxu0 0.0
      %4072 = vmatmul.mubr.f32.gmra.mrb[0].mxu0 %v3970
      %v4073 = vpop.f32.mrb[0].mxu0
      %v4074 = vadd.f32 0.0, %v4073
      %v4075 = vpop.f32.mrb[0].mxu0
      %4076 = vdwg.mxu0
      %v4077 = vmul.f32 %v1179, %v4039
      %v4078 = vmul.f32 %v1179, %v4044
      %v4079 = vmul.f32 %v1179, %v4049
      %v4080 = vmul.f32 %v1179, %v4054
      %v4081 = vmul.f32 %v1179, %v4059
      %v4082 = vmul.f32 %v1179, %v4064
      %v4083 = vmul.f32 %v1179, %v4069
      %v4084 = vmul.f32 %v1179, %v4074
      %4085 = vrot.lane.b32.xlu0 %v393, 104
      %v4086 = vpop.permute.xlu0 %4085
      %4087 = vrot.lane.b32.xlu0 %v394, 104
      %v4088 = vpop.permute.xlu0 %4087
      %4089 = vrot.lane.b32.xlu0 %v395, 104
      %v4090 = vpop.permute.xlu0 %4089
      %4091 = vrot.lane.b32.xlu0 %v396, 104
      %v4092 = vpop.permute.xlu0 %4091
      %4093 = vrot.lane.b32.xlu0 %v397, 104
      %v4094 = vpop.permute.xlu0 %4093
      %4095 = vrot.lane.b32.xlu0 %v398, 104
      %v4096 = vpop.permute.xlu0 %4095
      %4097 = vrot.lane.b32.xlu0 %v399, 104
      %v4098 = vpop.permute.xlu0 %4097
      %4099 = vrot.lane.b32.xlu0 %v400, 104
      %v4100 = vpop.permute.xlu0 %4099
      %v4109 = vadd.f32 %v4077, %v4086
      %v4110 = vadd.f32 %v4078, %v4088
      %v4111 = vadd.f32 %v4079, %v4090
      %v4112 = vadd.f32 %v4080, %v4092
      %v4113 = vadd.f32 %v4081, %v4094
      %v4114 = vadd.f32 %v4082, %v4096
      %v4115 = vadd.f32 %v4083, %v4098
      %v4116 = vadd.f32 %v4084, %v4100
      %4125 = vrot.lane.b32.xlu0 %v4109, 24
      %v4126 = vpop.permute.xlu0 %4125
      %4127 = vrot.lane.b32.xlu0 %v4110, 24
      %v4128 = vpop.permute.xlu0 %4127
      %4129 = vrot.lane.b32.xlu0 %v4111, 24
      %v4130 = vpop.permute.xlu0 %4129
      %4131 = vrot.lane.b32.xlu0 %v4112, 24
      %v4132 = vpop.permute.xlu0 %4131
      %4133 = vrot.lane.b32.xlu0 %v4113, 24
      %v4134 = vpop.permute.xlu0 %4133
      %4135 = vrot.lane.b32.xlu0 %v4114, 24
      %v4136 = vpop.permute.xlu0 %4135
      %4137 = vrot.lane.b32.xlu0 %v4115, 24
      %v4138 = vpop.permute.xlu0 %4137
      %4139 = vrot.lane.b32.xlu0 %v4116, 24
      %v4140 = vpop.permute.xlu0 %4139
      %vm4149 = vcmask 228544
      %4150 = vst.msk [vmem:[%s391] sm:$0xff] %vm4149, %v4126
      %4151 = vst.msk [vmem:[%s391 + $0x8] sm:$0xff] %vm4149, %v4128
      %4152 = vst.msk [vmem:[%s391 + $0x10] sm:$0xff] %vm4149, %v4130
      %4153 = vst.msk [vmem:[%s391 + $0x18] sm:$0xff] %vm4149, %v4132
      %4154 = vst.msk [vmem:[%s391 + $0x20] sm:$0xff] %vm4149, %v4134
      %4155 = vst.msk [vmem:[%s391 + $0x28] sm:$0xff] %vm4149, %v4136
      %4156 = vst.msk [vmem:[%s391 + $0x30] sm:$0xff] %vm4149, %v4138
      %4157 = vst.msk [vmem:[%s391 + $0x38] sm:$0xff] %vm4149, %v4140
      %4158 = vrot.lane.b32.xlu0 %v513, 100
      %v4159 = vpop.permute.xlu0 %4158
      %4160 = vrot.lane.b32.xlu0 %v518, 100
      %v4161 = vpop.permute.xlu0 %4160
      %4162 = vrot.lane.b32.xlu0 %v523, 100
      %v4163 = vpop.permute.xlu0 %4162
      %4164 = vrot.lane.b32.xlu0 %v528, 100
      %v4165 = vpop.permute.xlu0 %4164
      %4166 = vrot.lane.b32.xlu0 %v533, 100
      %v4167 = vpop.permute.xlu0 %4166
      %4168 = vrot.lane.b32.xlu0 %v538, 100
      %v4169 = vpop.permute.xlu0 %4168
      %4170 = vrot.lane.b32.xlu0 %v543, 100
      %v4171 = vpop.permute.xlu0 %4170
      %4172 = vrot.lane.b32.xlu0 %v548, 100
      %v4173 = vpop.permute.xlu0 %4172
      %4174 = vrot.lane.b32.xlu0 %v653, 100
      %v4175 = vpop.permute.xlu0 %4174
      %4176 = vrot.lane.b32.xlu0 %v658, 100
      %v4177 = vpop.permute.xlu0 %4176
      %4178 = vrot.lane.b32.xlu0 %v663, 100
      %v4179 = vpop.permute.xlu0 %4178
      %4180 = vrot.lane.b32.xlu0 %v668, 100
      %v4181 = vpop.permute.xlu0 %4180
      %4182 = vrot.lane.b32.xlu0 %v673, 100
      %v4183 = vpop.permute.xlu0 %4182
      %4184 = vrot.lane.b32.xlu0 %v678, 100
      %v4185 = vpop.permute.xlu0 %4184
      %4186 = vrot.lane.b32.xlu0 %v683, 100
      %v4187 = vpop.permute.xlu0 %4186
      %4188 = vrot.lane.b32.xlu0 %v688, 100
      %v4189 = vpop.permute.xlu0 %4188
      %v4190 = vsel %vm807, %v4159, 0
      %v4192 = vsel %vm807, %v4161, 0
      %v4194 = vsel %vm807, %v4163, 0
      %v4196 = vsel %vm807, %v4165, 0
      %v4198 = vsel %vm807, %v4167, 0
      %v4200 = vsel %vm807, %v4169, 0
      %v4202 = vsel %vm807, %v4171, 0
      %v4204 = vsel %vm807, %v4173, 0
      %v4206 = vsel %vm807, %v4175, 0
      %v4208 = vsel %vm807, %v4177, 0
      %v4210 = vsel %vm807, %v4179, 0
      %v4212 = vsel %vm807, %v4181, 0
      %v4214 = vsel %vm807, %v4183, 0
      %v4216 = vsel %vm807, %v4185, 0
      %v4218 = vsel %vm807, %v4187, 0
      %v4220 = vsel %vm807, %v4189, 0
      %4222 = vmatprep.subr.mxu0 0.0
      %4223 = vmatpush1.xpose.msra.mxu0 %v4206
      %4224 = vmatprep.subr.mxu0 0.0
      %4225 = vmatpush1.xpose.msra.mxu0 %v4208
      %4226 = vmatprep.subr.mxu0 0.0
      %4227 = vmatpush1.xpose.msra.mxu0 %v4210
      %4228 = vmatprep.subr.mxu0 0.0
      %4229 = vmatpush1.xpose.msra.mxu0 %v4212
      %4230 = vmatprep.subr.mxu0 0.0
      %4231 = vmatpush1.xpose.msra.mxu0 %v4214
      %4232 = vmatprep.subr.mxu0 0.0
      %4233 = vmatpush1.xpose.msra.mxu0 %v4216
      %4234 = vmatprep.subr.mxu0 0.0
      %4235 = vmatpush1.xpose.msra.mxu0 %v4218
      %4236 = vmatprep.subr.mxu0 0.0
      %4237 = vmatpush1.xpose.msra.mxu0 %v4220
      %4238 = vmatprep.subr.mxu0 0.0
      %4239 = vmatpush1.xpose.msra.mxu0 0.0
      %4240 = vmatprep.subr.mxu0 0.0
      %4241 = vmatpush1.xpose.msra.mxu0 0.0
      %4242 = vmatprep.subr.mxu0 0.0
      %4243 = vmatpush1.xpose.msra.mxu0 0.0
      %4244 = vmatprep.subr.mxu0 0.0
      %4245 = vmatpush1.xpose.msra.mxu0 0.0
      %4246 = vmatprep.subr.mxu0 0.0
      %4247 = vmatpush1.xpose.msra.mxu0 0.0
      %4248 = vmatprep.subr.mxu0 0.0
      %4249 = vmatpush1.xpose.msra.mxu0 0.0
      %4250 = vmatprep.subr.mxu0 0.0
      %4251 = vmatpush1.xpose.msra.mxu0 0.0
      %4252 = vmatprep.subr.mxu0 0.0
      %4253 = vmatpush1.xpose.msra.mxu0 0.0
      %4254 = vmatprep.subr.mxu0 0.0
      %4255 = vmatpush1.xpose.msra.mxu0 0.0
      %4256 = vmatprep.subr.mxu0 0.0
      %4257 = vmatpush1.xpose.msra.mxu0 0.0
      %4258 = vmatprep.subr.mxu0 0.0
      %4259 = vmatpush1.xpose.msra.mxu0 0.0
      %4260 = vmatprep.subr.mxu0 0.0
      %4261 = vmatpush1.xpose.msra.mxu0 0.0
      %4262 = vmatprep.subr.mxu0 0.0
      %4263 = vmatpush1.xpose.msra.mxu0 0.0
      %4264 = vmatprep.subr.mxu0 0.0
      %4265 = vmatpush1.xpose.msra.mxu0 0.0
      %4266 = vmatprep.subr.mxu0 0.0
      %4267 = vmatpush1.xpose.msra.mxu0 0.0
      %4268 = vmatprep.subr.mxu0 0.0
      %4269 = vmatpush1.xpose.msra.mxu0 0.0
      %4270 = vmatprep.subr.mxu0 0.0
      %4271 = vmatpush1.xpose.msra.mxu0 0.0
      %4272 = vmatprep.subr.mxu0 0.0
      %4273 = vmatpush1.xpose.msra.mxu0 0.0
      %4274 = vmatprep.subr.mxu0 0.0
      %4275 = vmatpush1.xpose.msra.mxu0 0.0
      %4276 = vmatprep.subr.mxu0 0.0
      %4277 = vmatpush1.xpose.msra.mxu0 0.0
      %4278 = vmatprep.subr.mxu0 0.0
      %4279 = vmatpush1.xpose.msra.mxu0 0.0
      %4280 = vmatprep.subr.mxu0 0.0
      %4281 = vmatpush1.xpose.msra.mxu0 0.0
      %4282 = vmatprep.subr.mxu0 0.0
      %4283 = vmatpush1.xpose.msra.mxu0 0.0
      %4284 = vmatprep.subr.mxu0 0.0
      %4285 = vmatpush1.xpose.msra.mxu0 0.0
      %4286 = vmatprep.mubr.f32.mxu0 0.0
      %4287 = vmatmul.mubr.f32.gmra.mrb[0].mxu0 %v4190
      %v4288 = vpop.f32.mrb[0].mxu0
      %v4289 = vadd.f32 0.0, %v4288
      %v4290 = vpop.f32.mrb[0].mxu0
      %4291 = vmatprep.mubr.f32.mxu0 0.0
      %4292 = vmatmul.mubr.f32.gmra.mrb[0].mxu0 %v4192
      %v4293 = vpop.f32.mrb[0].mxu0
      %v4294 = vadd.f32 0.0, %v4293
      %v4295 = vpop.f32.mrb[0].mxu0
      %4296 = vmatprep.mubr.f32.mxu0 0.0
      %4297 = vmatmul.mubr.f32.gmra.mrb[0].mxu0 %v4194
      %v4298 = vpop.f32.mrb[0].mxu0
      %v4299 = vadd.f32 0.0, %v4298
      %v4300 = vpop.f32.mrb[0].mxu0
      %4301 = vmatprep.mubr.f32.mxu0 0.0
      %4302 = vmatmul.mubr.f32.gmra.mrb[0].mxu0 %v4196
      %v4303 = vpop.f32.mrb[0].mxu0
      %v4304 = vadd.f32 0.0, %v4303
      %v4305 = vpop.f32.mrb[0].mxu0
      %4306 = vmatprep.mubr.f32.mxu0 0.0
      %4307 = vmatmul.mubr.f32.gmra.mrb[0].mxu0 %v4198
      %v4308 = vpop.f32.mrb[0].mxu0
      %v4309 = vadd.f32 0.0, %v4308
      %v4310 = vpop.f32.mrb[0].mxu0
      %4311 = vmatprep.mubr.f32.mxu0 0.0
      %4312 = vmatmul.mubr.f32.gmra.mrb[0].mxu0 %v4200
      %v4313 = vpop.f32.mrb[0].mxu0
      %v4314 = vadd.f32 0.0, %v4313
      %v4315 = vpop.f32.mrb[0].mxu0
      %4316 = vmatprep.mubr.f32.mxu0 0.0
      %4317 = vmatmul.mubr.f32.gmra.mrb[0].mxu0 %v4202
      %v4318 = vpop.f32.mrb[0].mxu0
      %v4319 = vadd.f32 0.0, %v4318
      %v4320 = vpop.f32.mrb[0].mxu0
      %4321 = vmatprep.mubr.f32.mxu0 0.0
      %4322 = vmatmul.mubr.f32.gmra.mrb[0].mxu0 %v4204
      %v4323 = vpop.f32.mrb[0].mxu0
      %v4324 = vadd.f32 0.0, %v4323
      %v4325 = vpop.f32.mrb[0].mxu0
      %4326 = vdwg.mxu0
      %v4327 = vsel %vm961, %v4289, -inf
      %4328 = vmax.xlane.f32.xlu0 %v4327
      %v4329 = vpop.xlane.xlu0 %4328
      %v4330 = vsel %vm961, %v4294, -inf
      %4331 = vmax.xlane.f32.xlu0 %v4330
      %v4332 = vpop.xlane.xlu0 %4331
      %v4333 = vsel %vm961, %v4299, -inf
      %4334 = vmax.xlane.f32.xlu0 %v4333
      %v4335 = vpop.xlane.xlu0 %4334
      %v4336 = vsel %vm961, %v4304, -inf
      %4337 = vmax.xlane.f32.xlu0 %v4336
      %v4338 = vpop.xlane.xlu0 %4337
      %v4339 = vsel %vm961, %v4309, -inf
      %4340 = vmax.xlane.f32.xlu0 %v4339
      %v4341 = vpop.xlane.xlu0 %4340
      %v4342 = vsel %vm961, %v4314, -inf
      %4343 = vmax.xlane.f32.xlu0 %v4342
      %v4344 = vpop.xlane.xlu0 %4343
      %v4345 = vsel %vm961, %v4319, -inf
      %4346 = vmax.xlane.f32.xlu0 %v4345
      %v4347 = vpop.xlane.xlu0 %4346
      %v4348 = vsel %vm961, %v4324, -inf
      %4349 = vmax.xlane.f32.xlu0 %v4348
      %v4350 = vpop.xlane.xlu0 %4349
      %v4351 = vsub.f32 %v4289, %v4329
      %v4352 = vsub.f32 %v4294, %v4332
      %v4353 = vsub.f32 %v4299, %v4335
      %v4354 = vsub.f32 %v4304, %v4338
      %v4355 = vsub.f32 %v4309, %v4341
      %v4356 = vsub.f32 %v4314, %v4344
      %v4357 = vsub.f32 %v4319, %v4347
      %v4358 = vsub.f32 %v4324, %v4350
      %v4359 = vmul.f32 %v4351, 1.442695
      %v4360 = vpow.pop %v4359
      %v4361 = vmul.f32 %v4352, 1.442695
      %v4362 = vpow.pop %v4361
      %v4363 = vmul.f32 %v4353, 1.442695
      %v4364 = vpow.pop %v4363
      %v4365 = vmul.f32 %v4354, 1.442695
      %v4366 = vpow.pop %v4365
      %v4367 = vmul.f32 %v4355, 1.442695
      %v4368 = vpow.pop %v4367
      %v4369 = vmul.f32 %v4356, 1.442695
      %v4370 = vpow.pop %v4369
      %v4371 = vmul.f32 %v4357, 1.442695
      %v4372 = vpow.pop %v4371
      %v4373 = vmul.f32 %v4358, 1.442695
      %v4374 = vpow.pop %v4373
      %v4375 = vsel %vm961, %v4360, 0.0
      %4376 = vadd.xlane.f32.xlu0 %v4375
      %v4377 = vpop.xlane.xlu0 %4376
      %v4378 = vsel %vm961, %v4362, 0.0
      %4379 = vadd.xlane.f32.xlu0 %v4378
      %v4380 = vpop.xlane.xlu0 %4379
      %v4381 = vsel %vm961, %v4364, 0.0
      %4382 = vadd.xlane.f32.xlu0 %v4381
      %v4383 = vpop.xlane.xlu0 %4382
      %v4384 = vsel %vm961, %v4366, 0.0
      %4385 = vadd.xlane.f32.xlu0 %v4384
      %v4386 = vpop.xlane.xlu0 %4385
      %v4387 = vsel %vm961, %v4368, 0.0
      %4388 = vadd.xlane.f32.xlu0 %v4387
      %v4389 = vpop.xlane.xlu0 %4388
      %v4390 = vsel %vm961, %v4370, 0.0
      %4391 = vadd.xlane.f32.xlu0 %v4390
      %v4392 = vpop.xlane.xlu0 %4391
      %v4393 = vsel %vm961, %v4372, 0.0
      %4394 = vadd.xlane.f32.xlu0 %v4393
      %v4395 = vpop.xlane.xlu0 %4394
      %v4396 = vsel %vm961, %v4374, 0.0
      %4397 = vadd.xlane.f32.xlu0 %v4396
      %v4398 = vpop.xlane.xlu0 %4397
      %v4399 = vrcp.pop %v4377
      %v4400 = vrcp.pop %v4380
      %v4401 = vrcp.pop %v4383
      %v4402 = vrcp.pop %v4386
      %v4403 = vrcp.pop %v4389
      %v4404 = vrcp.pop %v4392
      %v4405 = vrcp.pop %v4395
      %v4406 = vrcp.pop %v4398
      %v4407 = vmul.f32 %v4360, %v4399
      %v4408 = vmul.f32 %v4362, %v4400
      %v4409 = vmul.f32 %v4364, %v4401
      %v4410 = vmul.f32 %v4366, %v4402
      %v4411 = vmul.f32 %v4368, %v4403
      %v4412 = vmul.f32 %v4370, %v4404
      %v4413 = vmul.f32 %v4372, %v4405
      %v4414 = vmul.f32 %v4374, %v4406
      %4415 = vrot.lane.b32.xlu0 %v769, 100
      %v4416 = vpop.permute.xlu0 %4415
      %4417 = vrot.lane.b32.xlu0 %v774, 100
      %v4418 = vpop.permute.xlu0 %4417
      %4419 = vrot.lane.b32.xlu0 %v779, 100
      %v4420 = vpop.permute.xlu0 %4419
      %4421 = vrot.lane.b32.xlu0 %v784, 100
      %v4422 = vpop.permute.xlu0 %4421
      %4423 = vrot.lane.b32.xlu0 %v789, 100
      %v4424 = vpop.permute.xlu0 %4423
      %4425 = vrot.lane.b32.xlu0 %v794, 100
      %v4426 = vpop.permute.xlu0 %4425
      %4427 = vrot.lane.b32.xlu0 %v799, 100
      %v4428 = vpop.permute.xlu0 %4427
      %4429 = vrot.lane.b32.xlu0 %v804, 100
      %v4430 = vpop.permute.xlu0 %4429
      %v4440 = vsel %vm961, %v4407, 0
      %v4443 = vsel %vm961, %v4408, 0
      %v4446 = vsel %vm961, %v4409, 0
      %v4449 = vsel %vm961, %v4410, 0
      %v4452 = vsel %vm961, %v4411, 0
      %v4455 = vsel %vm961, %v4412, 0
      %v4458 = vsel %vm961, %v4413, 0
      %v4461 = vsel %vm961, %v4414, 0
      %4463 = vmatprep.subr.mxu0 0.0
      %4464 = vmatpush1.msra.mxu0 %v4416
      %4465 = vmatprep.subr.mxu0 0.0
      %4466 = vmatpush1.msra.mxu0 %v4418
      %4467 = vmatprep.subr.mxu0 0.0
      %4468 = vmatpush1.msra.mxu0 %v4420
      %4469 = vmatprep.subr.mxu0 0.0
      %4470 = vmatpush1.msra.mxu0 %v4422
      %4471 = vmatprep.subr.mxu0 0.0
      %4472 = vmatpush1.msra.mxu0 %v4424
      %4473 = vmatprep.subr.mxu0 0.0
      %4474 = vmatpush1.msra.mxu0 %v4426
      %4475 = vmatprep.subr.mxu0 0.0
      %4476 = vmatpush1.msra.mxu0 %v4428
      %4477 = vmatprep.subr.mxu0 0.0
      %4478 = vmatpush1.msra.mxu0 %v4430
      %4479 = vmatprep.subr.mxu0 0.0
      %4480 = vmatpush1.msra.mxu0 0.0
      %4481 = vmatprep.subr.mxu0 0.0
      %4482 = vmatpush1.msra.mxu0 0.0
      %4483 = vmatprep.subr.mxu0 0.0
      %4484 = vmatpush1.msra.mxu0 0.0
      %4485 = vmatprep.subr.mxu0 0.0
      %4486 = vmatpush1.msra.mxu0 0.0
      %4487 = vmatprep.subr.mxu0 0.0
      %4488 = vmatpush1.msra.mxu0 0.0
      %4489 = vmatprep.subr.mxu0 0.0
      %4490 = vmatpush1.msra.mxu0 0.0
      %4491 = vmatprep.subr.mxu0 0.0
      %4492 = vmatpush1.msra.mxu0 0.0
      %4493 = vmatprep.subr.mxu0 0.0
      %4494 = vmatpush1.msra.mxu0 0.0
      %4495 = vmatprep.subr.mxu0 0.0
      %4496 = vmatpush1.msra.mxu0 0.0
      %4497 = vmatprep.subr.mxu0 0.0
      %4498 = vmatpush1.msra.mxu0 0.0
      %4499 = vmatprep.subr.mxu0 0.0
      %4500 = vmatpush1.msra.mxu0 0.0
      %4501 = vmatprep.subr.mxu0 0.0
      %4502 = vmatpush1.msra.mxu0 0.0
      %4503 = vmatprep.subr.mxu0 0.0
      %4504 = vmatpush1.msra.mxu0 0.0
      %4505 = vmatprep.subr.mxu0 0.0
      %4506 = vmatpush1.msra.mxu0 0.0
      %4507 = vmatprep.subr.mxu0 0.0
      %4508 = vmatpush1.msra.mxu0 0.0
      %4509 = vmatprep.subr.mxu0 0.0
      %4510 = vmatpush1.msra.mxu0 0.0
      %4511 = vmatprep.subr.mxu0 0.0
      %4512 = vmatpush1.msra.mxu0 0.0
      %4513 = vmatprep.subr.mxu0 0.0
      %4514 = vmatpush1.msra.mxu0 0.0
      %4515 = vmatprep.subr.mxu0 0.0
      %4516 = vmatpush1.msra.mxu0 0.0
      %4517 = vmatprep.subr.mxu0 0.0
      %4518 = vmatpush1.msra.mxu0 0.0
      %4519 = vmatprep.subr.mxu0 0.0
      %4520 = vmatpush1.msra.mxu0 0.0
      %4521 = vmatprep.subr.mxu0 0.0
      %4522 = vmatpush1.msra.mxu0 0.0
      %4523 = vmatprep.subr.mxu0 0.0
      %4524 = vmatpush1.msra.mxu0 0.0
      %4525 = vmatprep.subr.mxu0 0.0
      %4526 = vmatpush1.msra.mxu0 0.0
      %4527 = vmatprep.mubr.f32.mxu0 0.0
      %4528 = vmatmul.mubr.f32.gmra.mrb[0].mxu0 %v4440
      %v4529 = vpop.f32.mrb[0].mxu0
      %v4530 = vadd.f32 0.0, %v4529
      %v4531 = vpop.f32.mrb[0].mxu0
      %4532 = vmatprep.mubr.f32.mxu0 0.0
      %4533 = vmatmul.mubr.f32.gmra.mrb[0].mxu0 %v4443
      %v4534 = vpop.f32.mrb[0].mxu0
      %v4535 = vadd.f32 0.0, %v4534
      %v4536 = vpop.f32.mrb[0].mxu0
      %4537 = vmatprep.mubr.f32.mxu0 0.0
      %4538 = vmatmul.mubr.f32.gmra.mrb[0].mxu0 %v4446
      %v4539 = vpop.f32.mrb[0].mxu0
      %v4540 = vadd.f32 0.0, %v4539
      %v4541 = vpop.f32.mrb[0].mxu0
      %4542 = vmatprep.mubr.f32.mxu0 0.0
      %4543 = vmatmul.mubr.f32.gmra.mrb[0].mxu0 %v4449
      %v4544 = vpop.f32.mrb[0].mxu0
      %v4545 = vadd.f32 0.0, %v4544
      %v4546 = vpop.f32.mrb[0].mxu0
      %4547 = vmatprep.mubr.f32.mxu0 0.0
      %4548 = vmatmul.mubr.f32.gmra.mrb[0].mxu0 %v4452
      %v4549 = vpop.f32.mrb[0].mxu0
      %v4550 = vadd.f32 0.0, %v4549
      %v4551 = vpop.f32.mrb[0].mxu0
      %4552 = vmatprep.mubr.f32.mxu0 0.0
      %4553 = vmatmul.mubr.f32.gmra.mrb[0].mxu0 %v4455
      %v4554 = vpop.f32.mrb[0].mxu0
      %v4555 = vadd.f32 0.0, %v4554
      %v4556 = vpop.f32.mrb[0].mxu0
      %4557 = vmatprep.mubr.f32.mxu0 0.0
      %4558 = vmatmul.mubr.f32.gmra.mrb[0].mxu0 %v4458
      %v4559 = vpop.f32.mrb[0].mxu0
      %v4560 = vadd.f32 0.0, %v4559
      %v4561 = vpop.f32.mrb[0].mxu0
      %4562 = vmatprep.mubr.f32.mxu0 0.0
      %4563 = vmatmul.mubr.f32.gmra.mrb[0].mxu0 %v4461
      %v4564 = vpop.f32.mrb[0].mxu0
      %v4565 = vadd.f32 0.0, %v4564
      %v4566 = vpop.f32.mrb[0].mxu0
      %4567 = vdwg.mxu0
      %v4568 = vmul.f32 %v1179, %v4530
      %v4569 = vmul.f32 %v1179, %v4535
      %v4570 = vmul.f32 %v1179, %v4540
      %v4571 = vmul.f32 %v1179, %v4545
      %v4572 = vmul.f32 %v1179, %v4550
      %v4573 = vmul.f32 %v1179, %v4555
      %v4574 = vmul.f32 %v1179, %v4560
      %v4575 = vmul.f32 %v1179, %v4565
      %4576 = vrot.lane.b32.xlu0 %v393, 100
      %v4577 = vpop.permute.xlu0 %4576
      %4578 = vrot.lane.b32.xlu0 %v394, 100
      %v4579 = vpop.permute.xlu0 %4578
      %4580 = vrot.lane.b32.xlu0 %v395, 100
      %v4581 = vpop.permute.xlu0 %4580
      %4582 = vrot.lane.b32.xlu0 %v396, 100
      %v4583 = vpop.permute.xlu0 %4582
      %4584 = vrot.lane.b32.xlu0 %v397, 100
      %v4585 = vpop.permute.xlu0 %4584
      %4586 = vrot.lane.b32.xlu0 %v398, 100
      %v4587 = vpop.permute.xlu0 %4586
      %4588 = vrot.lane.b32.xlu0 %v399, 100
      %v4589 = vpop.permute.xlu0 %4588
      %4590 = vrot.lane.b32.xlu0 %v400, 100
      %v4591 = vpop.permute.xlu0 %4590
      %v4600 = vadd.f32 %v4568, %v4577
      %v4601 = vadd.f32 %v4569, %v4579
      %v4602 = vadd.f32 %v4570, %v4581
      %v4603 = vadd.f32 %v4571, %v4583
      %v4604 = vadd.f32 %v4572, %v4585
      %v4605 = vadd.f32 %v4573, %v4587
      %v4606 = vadd.f32 %v4574, %v4589
      %v4607 = vadd.f32 %v4575, %v4591
      %4616 = vrot.lane.b32.xlu0 %v4600, 28
      %v4617 = vpop.permute.xlu0 %4616
      %4618 = vrot.lane.b32.xlu0 %v4601, 28
      %v4619 = vpop.permute.xlu0 %4618
      %4620 = vrot.lane.b32.xlu0 %v4602, 28
      %v4621 = vpop.permute.xlu0 %4620
      %4622 = vrot.lane.b32.xlu0 %v4603, 28
      %v4623 = vpop.permute.xlu0 %4622
      %4624 = vrot.lane.b32.xlu0 %v4604, 28
      %v4625 = vpop.permute.xlu0 %4624
      %4626 = vrot.lane.b32.xlu0 %v4605, 28
      %v4627 = vpop.permute.xlu0 %4626
      %4628 = vrot.lane.b32.xlu0 %v4606, 28
      %v4629 = vpop.permute.xlu0 %4628
      %4630 = vrot.lane.b32.xlu0 %v4607, 28
      %v4631 = vpop.permute.xlu0 %4630
      %vm4640 = vcmask 261344
      %4641 = vst.msk [vmem:[%s391] sm:$0xff] %vm4640, %v4617
      %4642 = vst.msk [vmem:[%s391 + $0x8] sm:$0xff] %vm4640, %v4619
      %4643 = vst.msk [vmem:[%s391 + $0x10] sm:$0xff] %vm4640, %v4621
      %4644 = vst.msk [vmem:[%s391 + $0x18] sm:$0xff] %vm4640, %v4623
      %4645 = vst.msk [vmem:[%s391 + $0x20] sm:$0xff] %vm4640, %v4625
      %4646 = vst.msk [vmem:[%s391 + $0x28] sm:$0xff] %vm4640, %v4627
      %4647 = vst.msk [vmem:[%s391 + $0x30] sm:$0xff] %vm4640, %v4629
      %4648 = vst.msk [vmem:[%s391 + $0x38] sm:$0xff] %vm4640, %v4631
      %s4649 = smul.u32 8, %s26
      %p4650 = scmp.lt.s32.totalorder %s25, 1
      %s4651 = scalar_select %p4650, %s25, 1
      %p4652 = scmp.lt.s32.totalorder %s4649, 7
      %s4653 = scalar_select %p4652, %s4649, 7
      %s4654 = smul.addr %s4651, 8
      %s4655 = sadd.s32 %s4653, %s4654
      %s4656 = smul.addr %s4655, 8
      %s4657 = scalar_lea.vmem %s9, %s4656
      // Predicated region
      $region57: #{tpu_custom_call.1} parent=55 // pred_check
        %p4658 = pneg %p254
      $region58: #{tpu_custom_call.1} parent=55 // pred_check_branch
        %4660 = sbr.rel (%p4658) target = $region60
      $region59: #{tpu_custom_call.1} parent=55 // pred_region
        %s4661 = smul.u32 8, %s26
      $region60: #{tpu_custom_call.1} parent=55 // pred_fallthru
        _
    $region56: #{tpu_custom_call.1} parent=5 // pred_fallthru
      _
    %p4662 = scmp.le.s32.totalorder 2, %s16
    // Predicated region
    $region61: #{tpu_custom_call.1} parent=5 // pred_check
      %p4663 = pneg %p4662
    $region62: #{tpu_custom_call.1} parent=5 // pred_check_branch
      %4665 = sbr.rel (%p4663) target = $region64
    $region63: #{tpu_custom_call.1} parent=5 // pred_region
      %s4666 = ssub.s32 %s16, 2
      // Predicated region
      $region65: #{tpu_custom_call.1} parent=63 // pred_check
        %p4667 = pneg %p260
      $region66: #{tpu_custom_call.1} parent=63 // pred_check_branch
        %4669 = sbr.rel (%p4667) target = $region68
      $region67: #{tpu_custom_call.1} parent=63 // pred_region
        %s4670 = smul.u32 8, %s28
        %p4671 = scmp.lt.s32.totalorder %s27, 1
        %s4672 = scalar_select %p4671, %s27, 1
        %p4673 = scmp.lt.s32.totalorder %s4670, 7
        %s4674 = scalar_select %p4673, %s4670, 7
        %s4675 = smul.addr %s4672, 8
        %s4676 = sadd.s32 %s4674, %s4675
        %s4677 = smul.addr %s4676, 8
        %s4678 = scalar_lea.vmem %s9, %s4677
      $region68: #{tpu_custom_call.1} parent=63 // pred_fallthru
        _
    $region64: #{tpu_custom_call.1} parent=5 // pred_fallthru
      _
  $region6: #{tpu_custom_call.1} parent=0 // loop_footer
    %s20 = sadd.s32 1, %s16
  $region7: #{tpu_custom_call.1} parent=0 // loop_footer_branch
    %15 = sbr.rel target = $region3
  $region8: #{tpu_custom_call.1} parent=0 // loop_exit
    _

</llo_original>
